<compile_context>
chip_gen: v5e
topology: v5e:2x2
jax: 0.10.0
libtpu: 0.0.40
codegen_flags: <defaults>
</compile_context>

<pallas_src>
import functools
import math

import jax
import jax.numpy as jnp
from jax.experimental import pallas as pl
from jax.experimental.pallas import tpu as pltpu

D_MODEL = 32
NHEAD = 4
DIM_FF = 64
NUM_LAYERS = 2
LN_EPS = 1e-5

# MXU operand dtype (f32 accumulation). bf16 is native/fast on v5e/v6e/v7x and
# halves weight DMA bytes + vreg pressure; set to jnp.float32 for exact f32.
MXU_DTYPE = jnp.bfloat16

_vmem = functools.partial(pl.BlockSpec, memory_space=pltpu.MemorySpace.VMEM)

# Packed per-layer weight / vector row orders (see pack_decoder_params).
_W_ORDER = ("w_sa_q", "w_sa_k", "w_sa_v", "w_sa_o",
            "w_ca_q", "w_ca_k", "w_ca_v", "w_ca_o")
_V_ORDER = ("b_sa_q", "b_sa_k", "b_sa_v", "b_sa_o",
            "b_ca_q", "b_ca_k", "b_ca_v", "b_ca_o", "b_ff2",
            "ln1_g", "ln1_b", "ln2_g", "ln2_b", "ln3_g", "ln3_b")


# ------------------------- in-kernel value helpers ------------------------- #

def _dot(a, b):
    return jnp.dot(a.astype(MXU_DTYPE), b.astype(MXU_DTYPE),
                   preferred_element_type=jnp.float32)


def _layernorm(x, g, b, eps):
    mu = jnp.mean(x, axis=-1, keepdims=True)
    var = jnp.mean(jnp.square(x - mu), axis=-1, keepdims=True)
    return (x - mu) * jax.lax.rsqrt(var + eps) * g + b


def _mha(q2, k2, v2, w_o, b_o, head_masks, batch, want_weights):
    """Multi-head attention on batch-major (B*S, D) slabs.

    Heads are selected with per-head 0/1 lane masks on K/V (cheap VPU multiply)
    instead of 8-wide lane slices (XLU relayouts).  The per-head PV outputs are
    zero outside that head's lane range, so summing them reconstructs the
    concatenated head outputs and a single (D, D) output projection finishes.
    Softmax scale is pre-folded into the Q projection.
    Returns (out (B*Sq, D) f32, head-averaged weights (B, Sq, Sk) f32 or None).
    """
    d = q2.shape[-1]
    sq = q2.shape[0] // batch
    sk = k2.shape[0] // batch
    q3 = q2.reshape(batch, sq, d).astype(MXU_DTYPE)
    k3 = k2.reshape(batch, sk, d)
    v3 = v2.reshape(batch, sk, d)

    o3 = None
    w_sum = None
    for m in head_masks:
        s = jnp.einsum("bqd,bkd->bqk", q3, (k3 * m).astype(MXU_DTYPE),
                       preferred_element_type=jnp.float32)
        s_max = jnp.max(s, axis=-1, keepdims=True)
        p = jnp.exp(s - s_max)
        denom = jnp.sum(p, axis=-1, keepdims=True)
        if want_weights:
            w = p / denom                                  # exact: returned
            w_sum = w if w_sum is None else w_sum + w
        else:
            w = p * pl.reciprocal(denom, approx=True)      # EUP slot, not returned
        oh = jnp.einsum("bqk,bkd->bqd", w.astype(MXU_DTYPE),
                        (v3 * m).astype(MXU_DTYPE),
                        preferred_element_type=jnp.float32)
        o3 = oh if o3 is None else o3 + oh

    out = _dot(o3.reshape(batch * sq, d), w_o) + b_o       # single (D,D) out-proj
    attn = w_sum * (1.0 / len(head_masks)) if want_weights else None
    return out, attn


# --------------------------- fused decoder kernel --------------------------- #

def _decoder_kernel(xp_ref, mm_ref, w_dd_ref, w_ff1_ref, w_ff2_ref,
                    vecs_ref, b_ff1_ref, fnorm_ref, out_ref, attn_ref,
                    *, num_layers, nhead, batch, sq, sk, eps, final_norm):
    d = w_dd_ref.shape[-1]
    dh = d // nhead
    bq = batch * sq
    bk = batch * sk

    x2 = xp_ref[0:bq, :]                  # (B*Sq, D) residual stream (f32)
    pos2 = xp_ref[bq:2 * bq, :]           # (B*Sq, D) query positional embedding
    mem2 = mm_ref[0:bk, :]                # (B*Sk, D) memory (values)
    memk2 = mem2 + mm_ref[bk:2 * bk, :]   # (B*Sk, D) memory + memory_pos (keys)

    # Per-head 0/1 lane masks (layer-invariant, built once).
    lane = jax.lax.broadcasted_iota(jnp.int32, (1, 1, d), 2)
    head_masks = [((lane >= h * dh) & (lane < (h + 1) * dh)).astype(jnp.float32)
                  for h in range(nhead)]

    attn_avg = None
    for l in range(num_layers):
        w_l = w_dd_ref[l]            # (8, D, D) bf16 attn weights, one load/layer
        vec = vecs_ref[l]            # (16, D) f32 biases + LN params
        bias = lambda i: vec[i:i + 1, :]

        # ----- self-attention: q = k = x + pos, v = x (scale folded in Wq/bq) -----
        xq = x2 + pos2
        q = _dot(xq, w_l[0]) + bias(0)
        k = _dot(xq, w_l[1]) + bias(1)
        v = _dot(x2, w_l[2]) + bias(2)
        sa, _ = _mha(q, k, v, w_l[3], bias(3), head_masks, batch,
                     want_weights=False)
        x2 = _layernorm(x2 + sa, bias(9), bias(10), eps)

        # ----- cross-attention: q = x + pos, k = memory + memory_pos, v = memory -----
        q = _dot(x2 + pos2, w_l[4]) + bias(4)
        k = _dot(memk2, w_l[5]) + bias(5)
        v = _dot(mem2, w_l[6]) + bias(6)
        want_w = (l == num_layers - 1)
        ca, w_avg = _mha(q, k, v, w_l[7], bias(7), head_masks, batch,
                         want_weights=want_w)
        if want_w:
            attn_avg = w_avg
        x2 = _layernorm(x2 + ca, bias(11), bias(12), eps)

        # ----- feed-forward -----
        h = jnp.maximum(_dot(x2, w_ff1_ref[l]) + b_ff1_ref[l], 0.0)
        h = _dot(h, w_ff2_ref[l]) + bias(8)
        x2 = _layernorm(x2 + h, bias(13), bias(14), eps)

    if final_norm:
        x2 = _layernorm(x2, fnorm_ref[0:1, :], fnorm_ref[1:2, :], eps)

    out_ref[...] = x2.astype(out_ref.dtype)
    attn_ref[...] = attn_avg.astype(attn_ref.dtype)


# ------------------------------ cost estimate ------------------------------- #

def _cost_estimate(B, Sq, Sk, D, FF, L, nhead):
    bq, bk = B * Sq, B * Sk
    proj = 2 * D * D * (6 * bq + 2 * bk)
    attn = nhead * 4 * B * Sq * D * (Sq + Sk)
    ffn = 4 * bq * D * FF
    flops = L * (proj + attn + ffn)
    transcendentals = L * (nhead * B * Sq * (Sq + Sk) + 3 * bq) + bq
    wbytes = 2 if MXU_DTYPE == jnp.bfloat16 else 4
    bytes_accessed = (2 * bq * D * 4 + 2 * bk * D * 4
                      + L * (8 * D * D + 2 * D * FF) * wbytes
                      + L * (16 * D + FF) * 4 + 2 * D * 4
                      + bq * D * 4 + B * Sq * Sk * 4)
    return int(flops), int(transcendentals), int(bytes_accessed)


# ------------------------------- JAX wrapper -------------------------------- #

def transformer_decoder(x, memory, packed, mask=None, pos=None,
                        memory_pos=None, sem=None):
    """Forward of TransformerDecoder: (x, memory, ...) -> (out, last-layer attn)."""
    # TODO(synk): `mask` and `sem` are not used -- the decoder_layer definition is
    # not part of the reference; only the mask=None / sem=None path is implemented.
    del mask, sem
    Sq, B, D = x.shape
    Sk = memory.shape[0]
    L = packed["num_layers"]
    nhead = packed["nhead"]
    ff = packed["dim_ff"]
    assert L >= 1, "num_layers must be >= 1 (attn_weights would be undefined)"
    assert D == packed["d_model"] and D % nhead == 0

    def bmajor(a, s):      # (S, B, D) -> batch-major (B*S, D) rows
        return a.transpose(1, 0, 2).reshape(B * s, D)

    # Pack [x | pos] and [memory | memory_pos] row-wise: 2 activation DMAs total.
    pos2 = jnp.zeros((B * Sq, D), jnp.float32) if pos is None else bmajor(pos, Sq)
    mpos2 = (jnp.zeros((B * Sk, D), jnp.float32) if memory_pos is None
             else bmajor(memory_pos, Sk))
    xp = jnp.concatenate([bmajor(x, Sq), pos2], axis=0)         # (2*B*Sq, D)
    mm = jnp.concatenate([bmajor(memory, Sk), mpos2], axis=0)   # (2*B*Sk, D)

    flops, transcendentals, bytes_accessed = _cost_estimate(B, Sq, Sk, D, ff, L, nhead)

    kernel = functools.partial(
        _decoder_kernel, num_layers=L, nhead=nhead, batch=B, sq=Sq, sk=Sk,
        eps=LN_EPS, final_norm=packed["final_norm"])

    # NOTE: single TensorCore, no grid -- right for this toy size.  At real DETR
    # sizes (d=256, ff=2048, 6 layers, Sk~1k) add a "parallel" batch/query grid
    # axis (2 TCs on v7x) and stream per-layer weights via a BlockSpec index_map
    # so the working set fits v7x's 64 MiB VMEM.
    out2, attn = pl.pallas_call(
        kernel,
        out_shape=(jax.ShapeDtypeStruct((B * Sq, D), jnp.float32),
                   jax.ShapeDtypeStruct((B, Sq, Sk), jnp.float32)),
        in_specs=[_vmem()] * 8,
        out_specs=(_vmem(), _vmem()),
        cost_estimate=pl.CostEstimate(flops=flops,
                                      transcendentals=transcendentals,
                                      bytes_accessed=bytes_accessed),
    )(xp, mm, packed["w_dd"], packed["w_ff1"], packed["w_ff2"],
      packed["vecs"], packed["b_ff1"], packed["fnorm"])

    out = out2.reshape(B, Sq, D).transpose(1, 0, 2)   # back to (Sq, B, D)
    return out, attn


# ----------------------------- parameter init ------------------------------ #

def _init_linear(key, fan_in, fan_out):
    s = 1.0 / math.sqrt(fan_in)
    kw, kb = jax.random.split(key)
    w = jax.random.uniform(kw, (fan_in, fan_out), jnp.float32, -s, s)
    b = jax.random.uniform(kb, (fan_out,), jnp.float32, -s, s)
    return w, b


def _init_layer(key, d_model, dim_ff):
    ks = jax.random.split(key, 10)
    p = {}
    for i, name in enumerate(("sa_q", "sa_k", "sa_v", "sa_o",
                              "ca_q", "ca_k", "ca_v", "ca_o")):
        w, b = _init_linear(ks[i], d_model, d_model)
        p["w_" + name], p["b_" + name] = w, b
    p["w_ff1"], p["b_ff1"] = _init_linear(ks[8], d_model, dim_ff)
    p["w_ff2"], p["b_ff2"] = _init_linear(ks[9], dim_ff, d_model)
    ones = jnp.ones((d_model,), jnp.float32)
    zeros = jnp.zeros((d_model,), jnp.float32)
    p.update(ln1_g=ones, ln1_b=zeros, ln2_g=ones, ln2_b=zeros,
             ln3_g=ones, ln3_b=zeros)
    return p


def init_decoder_params(key, num_layers, d_model, dim_ff, with_final_norm=True):
    ks = jax.random.split(key, num_layers)
    per_layer = [_init_layer(ks[i], d_model, dim_ff) for i in range(num_layers)]
    stacked = {name: jnp.stack([p[name] for p in per_layer], axis=0)
               for name in per_layer[0]}
    norm = ((jnp.ones((d_model,), jnp.float32),
             jnp.zeros((d_model,), jnp.float32)) if with_final_norm else None)
    return dict(layers=stacked, norm=norm)


def pack_decoder_params(params, nhead):
    """One-time host-side packing: fold 1/sqrt(dh) into the Q projections,
    cast matmul weights to the MXU operand dtype, and pack everything into a
    handful of dense arrays (prologue = ~8 DMAs instead of ~30)."""
    layers = params["layers"]
    L, D = layers["w_sa_q"].shape[0], layers["w_sa_q"].shape[1]
    ff = layers["w_ff1"].shape[-1]
    scale = 1.0 / math.sqrt(D // nhead)
    scaled = ("w_sa_q", "w_ca_q", "b_sa_q", "b_ca_q")

    def get(name):
        a = layers[name]
        return a * scale if name in scaled else a

    w_dd = jnp.stack([get(n) for n in _W_ORDER], axis=1).astype(MXU_DTYPE)  # (L,8,D,D)
    w_ff1 = layers["w_ff1"].astype(MXU_DTYPE)                               # (L,D,FF)
    w_ff2 = layers["w_ff2"].astype(MXU_DTYPE)                               # (L,FF,D)
    rows = [get(n) for n in _V_ORDER] + [jnp.zeros((L, D), jnp.float32)]
    vecs = jnp.stack(rows, axis=1)                                          # (L,16,D)
    b_ff1 = layers["b_ff1"][:, None, :]                                     # (L,1,FF)
    norm = params.get("norm")
    if norm is None:
        fnorm = jnp.stack([jnp.ones((D,), jnp.float32),
                           jnp.zeros((D,), jnp.float32)], axis=0)
    else:
        fnorm = jnp.stack(list(norm), axis=0)                               # (2,D)
    return dict(w_dd=w_dd, w_ff1=w_ff1, w_ff2=w_ff2, vecs=vecs, b_ff1=b_ff1,
                fnorm=fnorm, final_norm=norm is not None, num_layers=L,
                nhead=nhead, d_model=D, dim_ff=ff)


# ---------------------------------- main ----------------------------------- #

if __name__ == "__main__":
    key = jax.random.PRNGKey(0)
    k_par, k_x, k_mem, k_pos, k_mpos = jax.random.split(key, 5)

    S_Q, S_K, B = 8, 16, 2
    params = init_decoder_params(k_par, NUM_LAYERS, D_MODEL, DIM_FF,
                                 with_final_norm=True)
    packed = pack_decoder_params(params, NHEAD)

    x = jax.random.normal(k_x, (S_Q, B, D_MODEL), jnp.float32)
    memory = jax.random.normal(k_mem, (S_K, B, D_MODEL), jnp.float32)
    pos = jax.random.normal(k_pos, (S_Q, B, D_MODEL), jnp.float32)
    memory_pos = jax.random.normal(k_mpos, (S_K, B, D_MODEL), jnp.float32)

    out, attn_w = transformer_decoder(x, memory, packed,
                                      mask=None, pos=pos,
                                      memory_pos=memory_pos, sem=None)
    out = jax.block_until_ready(out)
    attn_w = jax.block_until_ready(attn_w)

    assert out.shape == (S_Q, B, D_MODEL)
    assert attn_w.shape == (B, S_Q, S_K)
    assert bool(jnp.all(jnp.isfinite(out))) and bool(jnp.all(jnp.isfinite(attn_w)))
    # returned last-layer cross-attn weights are exact softmax -> rows sum to 1
    row_sums = jnp.sum(attn_w, axis=-1)
    assert bool(jnp.all(jnp.abs(row_sums - 1.0) < 1e-3))
    print("KERNEL_OK")
</pallas_src>

<mosaic_0001>
module attributes {stable_mosaic.version = 11 : i64} {
  func.func @_decoder_kernel(%arg0: memref<32x32xf32, #tpu.memory_space<vmem>>, %arg1: memref<64x32xf32, #tpu.memory_space<vmem>>, %arg2: memref<2x8x32x32xbf16, #tpu.memory_space<vmem>>, %arg3: memref<2x32x64xbf16, #tpu.memory_space<vmem>>, %arg4: memref<2x64x32xbf16, #tpu.memory_space<vmem>>, %arg5: memref<2x16x32xf32, #tpu.memory_space<vmem>>, %arg6: memref<2x1x64xf32, #tpu.memory_space<vmem>>, %arg7: memref<2x32xf32, #tpu.memory_space<vmem>>, %arg8: memref<16x32xf32, #tpu.memory_space<vmem>>, %arg9: memref<2x8x16xf32, #tpu.memory_space<vmem>>) attributes {dimension_semantics = [], scalar_prefetch = 0 : i64, scratch_operands = 0 : i64, tpu.core_type = #tpu.core_type<tc>} {
    %c0 = arith.constant 0 : index
    %c0_0 = arith.constant 0 : index
    %0 = vector.load %arg0[%c0, %c0_0] : memref<32x32xf32, #tpu.memory_space<vmem>>, vector<16x32xf32>
    %c16 = arith.constant 16 : index
    %c0_1 = arith.constant 0 : index
    %1 = vector.load %arg0[%c16, %c0_1] : memref<32x32xf32, #tpu.memory_space<vmem>>, vector<16x32xf32>
    %c0_2 = arith.constant 0 : index
    %c0_3 = arith.constant 0 : index
    %2 = vector.load %arg1[%c0_2, %c0_3] : memref<64x32xf32, #tpu.memory_space<vmem>>, vector<32x32xf32>
    %c32 = arith.constant 32 : index
    %c0_4 = arith.constant 0 : index
    %3 = vector.load %arg1[%c32, %c0_4] : memref<64x32xf32, #tpu.memory_space<vmem>>, vector<32x32xf32>
    %4 = arith.addf %2, %3 : vector<32x32xf32>
    %5 = tpu.iota {dimensions = array<i32: 2>} : vector<1x1x32xi32>
    %c0_i32 = arith.constant 0 : i32
    %6 = vector.broadcast %c0_i32 : i32 to vector<1x1x32xi32>
    %7 = arith.cmpi sge, %5, %6 : vector<1x1x32xi32>
    %c8_i32 = arith.constant 8 : i32
    %8 = vector.broadcast %c8_i32 : i32 to vector<1x1x32xi32>
    %9 = arith.cmpi slt, %5, %8 : vector<1x1x32xi32>
    %10 = arith.andi %7, %9 : vector<1x1x32xi1>
    %11 = arith.extui %10 : vector<1x1x32xi1> to vector<1x1x32xi32>
    %12 = arith.sitofp %11 : vector<1x1x32xi32> to vector<1x1x32xf32>
    %c8_i32_5 = arith.constant 8 : i32
    %13 = vector.broadcast %c8_i32_5 : i32 to vector<1x1x32xi32>
    %14 = arith.cmpi sge, %5, %13 : vector<1x1x32xi32>
    %c16_i32 = arith.constant 16 : i32
    %15 = vector.broadcast %c16_i32 : i32 to vector<1x1x32xi32>
    %16 = arith.cmpi slt, %5, %15 : vector<1x1x32xi32>
    %17 = arith.andi %14, %16 : vector<1x1x32xi1>
    %18 = arith.extui %17 : vector<1x1x32xi1> to vector<1x1x32xi32>
    %19 = arith.sitofp %18 : vector<1x1x32xi32> to vector<1x1x32xf32>
    %c16_i32_6 = arith.constant 16 : i32
    %20 = vector.broadcast %c16_i32_6 : i32 to vector<1x1x32xi32>
    %21 = arith.cmpi sge, %5, %20 : vector<1x1x32xi32>
    %c24_i32 = arith.constant 24 : i32
    %22 = vector.broadcast %c24_i32 : i32 to vector<1x1x32xi32>
    %23 = arith.cmpi slt, %5, %22 : vector<1x1x32xi32>
    %24 = arith.andi %21, %23 : vector<1x1x32xi1>
    %25 = arith.extui %24 : vector<1x1x32xi1> to vector<1x1x32xi32>
    %26 = arith.sitofp %25 : vector<1x1x32xi32> to vector<1x1x32xf32>
    %c24_i32_7 = arith.constant 24 : i32
    %27 = vector.broadcast %c24_i32_7 : i32 to vector<1x1x32xi32>
    %28 = arith.cmpi sge, %5, %27 : vector<1x1x32xi32>
    %c32_i32 = arith.constant 32 : i32
    %29 = vector.broadcast %c32_i32 : i32 to vector<1x1x32xi32>
    %30 = arith.cmpi slt, %5, %29 : vector<1x1x32xi32>
    %31 = arith.andi %28, %30 : vector<1x1x32xi1>
    %32 = arith.extui %31 : vector<1x1x32xi1> to vector<1x1x32xi32>
    %33 = arith.sitofp %32 : vector<1x1x32xi32> to vector<1x1x32xf32>
    %c0_8 = arith.constant 0 : index
    %c0_9 = arith.constant 0 : index
    %c0_10 = arith.constant 0 : index
    %c0_11 = arith.constant 0 : index
    %34 = vector.load %arg2[%c0_8, %c0_9, %c0_10, %c0_11] : memref<2x8x32x32xbf16, #tpu.memory_space<vmem>>, vector<1x8x32x32xbf16>
    %35 = vector.shape_cast %34 : vector<1x8x32x32xbf16> to vector<8x32x32xbf16>
    %c0_12 = arith.constant 0 : index
    %c0_13 = arith.constant 0 : index
    %c0_14 = arith.constant 0 : index
    %36 = vector.load %arg5[%c0_12, %c0_13, %c0_14] : memref<2x16x32xf32, #tpu.memory_space<vmem>>, vector<1x16x32xf32>
    %37 = vector.shape_cast %36 : vector<1x16x32xf32> to vector<16x32xf32>
    %38 = arith.addf %0, %1 : vector<16x32xf32>
    %39 = vector.extract_strided_slice %35 {offsets = [0, 0, 0], sizes = [1, 32, 32], strides = [1, 1, 1]} : vector<8x32x32xbf16> to vector<1x32x32xbf16>
    %40 = vector.shape_cast %39 : vector<1x32x32xbf16> to vector<32x32xbf16>
    %41 = arith.truncf %38 : vector<16x32xf32> to vector<16x32xbf16>
    %cst = arith.constant dense<0.000000e+00> : vector<16x32xf32>
    %42 = tpu.matmul %41, %40, %cst {dimension_numbers = #tpu.dot_dimension_numbers<[1], [0], [0], [1], [0, 0, 1, 1], [], []>} : vector<16x32xbf16>, vector<32x32xbf16>, vector<16x32xf32> -> vector<16x32xf32>
    %43 = vector.extract_strided_slice %37 {offsets = [0, 0], sizes = [1, 32], strides = [1, 1]} : vector<16x32xf32> to vector<1x32xf32>
    %44 = vector.broadcast %43 : vector<1x32xf32> to vector<16x32xf32>
    %45 = arith.addf %42, %44 : vector<16x32xf32>
    %46 = vector.extract_strided_slice %35 {offsets = [1, 0, 0], sizes = [1, 32, 32], strides = [1, 1, 1]} : vector<8x32x32xbf16> to vector<1x32x32xbf16>
    %47 = vector.shape_cast %46 : vector<1x32x32xbf16> to vector<32x32xbf16>
    %48 = arith.truncf %38 : vector<16x32xf32> to vector<16x32xbf16>
    %cst_15 = arith.constant dense<0.000000e+00> : vector<16x32xf32>
    %49 = tpu.matmul %48, %47, %cst_15 {dimension_numbers = #tpu.dot_dimension_numbers<[1], [0], [0], [1], [0, 0, 1, 1], [], []>} : vector<16x32xbf16>, vector<32x32xbf16>, vector<16x32xf32> -> vector<16x32xf32>
    %50 = vector.extract_strided_slice %37 {offsets = [1, 0], sizes = [1, 32], strides = [1, 1]} : vector<16x32xf32> to vector<1x32xf32>
    %51 = vector.broadcast %50 : vector<1x32xf32> to vector<16x32xf32>
    %52 = arith.addf %49, %51 : vector<16x32xf32>
    %53 = vector.extract_strided_slice %35 {offsets = [2, 0, 0], sizes = [1, 32, 32], strides = [1, 1, 1]} : vector<8x32x32xbf16> to vector<1x32x32xbf16>
    %54 = vector.shape_cast %53 : vector<1x32x32xbf16> to vector<32x32xbf16>
    %55 = arith.truncf %0 : vector<16x32xf32> to vector<16x32xbf16>
    %cst_16 = arith.constant dense<0.000000e+00> : vector<16x32xf32>
    %56 = tpu.matmul %55, %54, %cst_16 {dimension_numbers = #tpu.dot_dimension_numbers<[1], [0], [0], [1], [0, 0, 1, 1], [], []>} : vector<16x32xbf16>, vector<32x32xbf16>, vector<16x32xf32> -> vector<16x32xf32>
    %57 = vector.extract_strided_slice %37 {offsets = [2, 0], sizes = [1, 32], strides = [1, 1]} : vector<16x32xf32> to vector<1x32xf32>
    %58 = vector.broadcast %57 : vector<1x32xf32> to vector<16x32xf32>
    %59 = arith.addf %56, %58 : vector<16x32xf32>
    %60 = vector.extract_strided_slice %35 {offsets = [3, 0, 0], sizes = [1, 32, 32], strides = [1, 1, 1]} : vector<8x32x32xbf16> to vector<1x32x32xbf16>
    %61 = vector.shape_cast %60 : vector<1x32x32xbf16> to vector<32x32xbf16>
    %62 = vector.extract_strided_slice %37 {offsets = [3, 0], sizes = [1, 32], strides = [1, 1]} : vector<16x32xf32> to vector<1x32xf32>
    %63 = vector.shape_cast %45 : vector<16x32xf32> to vector<2x8x32xf32>
    %64 = arith.truncf %63 : vector<2x8x32xf32> to vector<2x8x32xbf16>
    %65 = vector.shape_cast %52 : vector<16x32xf32> to vector<2x8x32xf32>
    %66 = vector.shape_cast %59 : vector<16x32xf32> to vector<2x8x32xf32>
    %67 = vector.broadcast %12 : vector<1x1x32xf32> to vector<2x8x32xf32>
    %68 = arith.mulf %65, %67 : vector<2x8x32xf32>
    %69 = arith.truncf %68 : vector<2x8x32xf32> to vector<2x8x32xbf16>
    "tpu.trace_start"() <{level = 10 : i32, message = "bqd,bkd->bqk"}> : () -> ()
    %cst_17 = arith.constant dense<0.000000e+00> : vector<2x8x8xf32>
    %70 = tpu.matmul %64, %69, %cst_17 {dimension_numbers = #tpu.dot_dimension_numbers<[2], [2], [1], [1], [0, 0, 0, 1, 1, 1], [0], [0]>} : vector<2x8x32xbf16>, vector<2x8x32xbf16>, vector<2x8x8xf32> -> vector<2x8x8xf32>
    "tpu.trace_stop"() : () -> ()
    %cst_18 = arith.constant dense<0xFF800000> : vector<2x8xf32>
    %71 = vector.multi_reduction <maximumf>, %70, %cst_18 [2] : vector<2x8x8xf32> to vector<2x8xf32>
    %72 = vector.shape_cast %71 : vector<2x8xf32> to vector<2x8x1xf32>
    %73 = vector.broadcast %72 : vector<2x8x1xf32> to vector<2x8x8xf32>
    %74 = arith.subf %70, %73 : vector<2x8x8xf32>
    %75 = math.exp %74 : vector<2x8x8xf32>
    %cst_19 = arith.constant dense<0.000000e+00> : vector<2x8xf32>
    %76 = vector.multi_reduction <add>, %75, %cst_19 [2] : vector<2x8x8xf32> to vector<2x8xf32>
    %77 = vector.shape_cast %76 : vector<2x8xf32> to vector<2x8x1xf32>
    %78 = tpu.reciprocal %77 {approx = true} : vector<2x8x1xf32> -> vector<2x8x1xf32>
    %79 = vector.broadcast %78 : vector<2x8x1xf32> to vector<2x8x8xf32>
    %80 = arith.mulf %75, %79 : vector<2x8x8xf32>
    %81 = arith.truncf %80 : vector<2x8x8xf32> to vector<2x8x8xbf16>
    %82 = vector.broadcast %12 : vector<1x1x32xf32> to vector<2x8x32xf32>
    %83 = arith.mulf %66, %82 : vector<2x8x32xf32>
    %84 = arith.truncf %83 : vector<2x8x32xf32> to vector<2x8x32xbf16>
    "tpu.trace_start"() <{level = 10 : i32, message = "bqk,bkd->bqd"}> : () -> ()
    %cst_20 = arith.constant dense<0.000000e+00> : vector<2x8x32xf32>
    %85 = tpu.matmul %81, %84, %cst_20 {dimension_numbers = #tpu.dot_dimension_numbers<[2], [1], [1], [2], [0, 0, 0, 1, 1, 2], [0], [0]>} : vector<2x8x8xbf16>, vector<2x8x32xbf16>, vector<2x8x32xf32> -> vector<2x8x32xf32>
    "tpu.trace_stop"() : () -> ()
    %86 = vector.broadcast %19 : vector<1x1x32xf32> to vector<2x8x32xf32>
    %87 = arith.mulf %65, %86 : vector<2x8x32xf32>
    %88 = arith.truncf %87 : vector<2x8x32xf32> to vector<2x8x32xbf16>
    "tpu.trace_start"() <{level = 10 : i32, message = "bqd,bkd->bqk"}> : () -> ()
    %cst_21 = arith.constant dense<0.000000e+00> : vector<2x8x8xf32>
    %89 = tpu.matmul %64, %88, %cst_21 {dimension_numbers = #tpu.dot_dimension_numbers<[2], [2], [1], [1], [0, 0, 0, 1, 1, 1], [0], [0]>} : vector<2x8x32xbf16>, vector<2x8x32xbf16>, vector<2x8x8xf32> -> vector<2x8x8xf32>
    "tpu.trace_stop"() : () -> ()
    %cst_22 = arith.constant dense<0xFF800000> : vector<2x8xf32>
    %90 = vector.multi_reduction <maximumf>, %89, %cst_22 [2] : vector<2x8x8xf32> to vector<2x8xf32>
    %91 = vector.shape_cast %90 : vector<2x8xf32> to vector<2x8x1xf32>
    %92 = vector.broadcast %91 : vector<2x8x1xf32> to vector<2x8x8xf32>
    %93 = arith.subf %89, %92 : vector<2x8x8xf32>
    %94 = math.exp %93 : vector<2x8x8xf32>
    %cst_23 = arith.constant dense<0.000000e+00> : vector<2x8xf32>
    %95 = vector.multi_reduction <add>, %94, %cst_23 [2] : vector<2x8x8xf32> to vector<2x8xf32>
    %96 = vector.shape_cast %95 : vector<2x8xf32> to vector<2x8x1xf32>
    %97 = tpu.reciprocal %96 {approx = true} : vector<2x8x1xf32> -> vector<2x8x1xf32>
    %98 = vector.broadcast %97 : vector<2x8x1xf32> to vector<2x8x8xf32>
    %99 = arith.mulf %94, %98 : vector<2x8x8xf32>
    %100 = arith.truncf %99 : vector<2x8x8xf32> to vector<2x8x8xbf16>
    %101 = vector.broadcast %19 : vector<1x1x32xf32> to vector<2x8x32xf32>
    %102 = arith.mulf %66, %101 : vector<2x8x32xf32>
    %103 = arith.truncf %102 : vector<2x8x32xf32> to vector<2x8x32xbf16>
    "tpu.trace_start"() <{level = 10 : i32, message = "bqk,bkd->bqd"}> : () -> ()
    %cst_24 = arith.constant dense<0.000000e+00> : vector<2x8x32xf32>
    %104 = tpu.matmul %100, %103, %cst_24 {dimension_numbers = #tpu.dot_dimension_numbers<[2], [1], [1], [2], [0, 0, 0, 1, 1, 2], [0], [0]>} : vector<2x8x8xbf16>, vector<2x8x32xbf16>, vector<2x8x32xf32> -> vector<2x8x32xf32>
    "tpu.trace_stop"() : () -> ()
    %105 = arith.addf %85, %104 : vector<2x8x32xf32>
    %106 = vector.broadcast %26 : vector<1x1x32xf32> to vector<2x8x32xf32>
    %107 = arith.mulf %65, %106 : vector<2x8x32xf32>
    %108 = arith.truncf %107 : vector<2x8x32xf32> to vector<2x8x32xbf16>
    "tpu.trace_start"() <{level = 10 : i32, message = "bqd,bkd->bqk"}> : () -> ()
    %cst_25 = arith.constant dense<0.000000e+00> : vector<2x8x8xf32>
    %109 = tpu.matmul %64, %108, %cst_25 {dimension_numbers = #tpu.dot_dimension_numbers<[2], [2], [1], [1], [0, 0, 0, 1, 1, 1], [0], [0]>} : vector<2x8x32xbf16>, vector<2x8x32xbf16>, vector<2x8x8xf32> -> vector<2x8x8xf32>
    "tpu.trace_stop"() : () -> ()
    %cst_26 = arith.constant dense<0xFF800000> : vector<2x8xf32>
    %110 = vector.multi_reduction <maximumf>, %109, %cst_26 [2] : vector<2x8x8xf32> to vector<2x8xf32>
    %111 = vector.shape_cast %110 : vector<2x8xf32> to vector<2x8x1xf32>
    %112 = vector.broadcast %111 : vector<2x8x1xf32> to vector<2x8x8xf32>
    %113 = arith.subf %109, %112 : vector<2x8x8xf32>
    %114 = math.exp %113 : vector<2x8x8xf32>
    %cst_27 = arith.constant dense<0.000000e+00> : vector<2x8xf32>
    %115 = vector.multi_reduction <add>, %114, %cst_27 [2] : vector<2x8x8xf32> to vector<2x8xf32>
    %116 = vector.shape_cast %115 : vector<2x8xf32> to vector<2x8x1xf32>
    %117 = tpu.reciprocal %116 {approx = true} : vector<2x8x1xf32> -> vector<2x8x1xf32>
    %118 = vector.broadcast %117 : vector<2x8x1xf32> to vector<2x8x8xf32>
    %119 = arith.mulf %114, %118 : vector<2x8x8xf32>
    %120 = arith.truncf %119 : vector<2x8x8xf32> to vector<2x8x8xbf16>
    %121 = vector.broadcast %26 : vector<1x1x32xf32> to vector<2x8x32xf32>
    %122 = arith.mulf %66, %121 : vector<2x8x32xf32>
    %123 = arith.truncf %122 : vector<2x8x32xf32> to vector<2x8x32xbf16>
    "tpu.trace_start"() <{level = 10 : i32, message = "bqk,bkd->bqd"}> : () -> ()
    %cst_28 = arith.constant dense<0.000000e+00> : vector<2x8x32xf32>
    %124 = tpu.matmul %120, %123, %cst_28 {dimension_numbers = #tpu.dot_dimension_numbers<[2], [1], [1], [2], [0, 0, 0, 1, 1, 2], [0], [0]>} : vector<2x8x8xbf16>, vector<2x8x32xbf16>, vector<2x8x32xf32> -> vector<2x8x32xf32>
    "tpu.trace_stop"() : () -> ()
    %125 = arith.addf %105, %124 : vector<2x8x32xf32>
    %126 = vector.broadcast %33 : vector<1x1x32xf32> to vector<2x8x32xf32>
    %127 = arith.mulf %65, %126 : vector<2x8x32xf32>
    %128 = arith.truncf %127 : vector<2x8x32xf32> to vector<2x8x32xbf16>
    "tpu.trace_start"() <{level = 10 : i32, message = "bqd,bkd->bqk"}> : () -> ()
    %cst_29 = arith.constant dense<0.000000e+00> : vector<2x8x8xf32>
    %129 = tpu.matmul %64, %128, %cst_29 {dimension_numbers = #tpu.dot_dimension_numbers<[2], [2], [1], [1], [0, 0, 0, 1, 1, 1], [0], [0]>} : vector<2x8x32xbf16>, vector<2x8x32xbf16>, vector<2x8x8xf32> -> vector<2x8x8xf32>
    "tpu.trace_stop"() : () -> ()
    %cst_30 = arith.constant dense<0xFF800000> : vector<2x8xf32>
    %130 = vector.multi_reduction <maximumf>, %129, %cst_30 [2] : vector<2x8x8xf32> to vector<2x8xf32>
    %131 = vector.shape_cast %130 : vector<2x8xf32> to vector<2x8x1xf32>
    %132 = vector.broadcast %131 : vector<2x8x1xf32> to vector<2x8x8xf32>
    %133 = arith.subf %129, %132 : vector<2x8x8xf32>
    %134 = math.exp %133 : vector<2x8x8xf32>
    %cst_31 = arith.constant dense<0.000000e+00> : vector<2x8xf32>
    %135 = vector.multi_reduction <add>, %134, %cst_31 [2] : vector<2x8x8xf32> to vector<2x8xf32>
    %136 = vector.shape_cast %135 : vector<2x8xf32> to vector<2x8x1xf32>
    %137 = tpu.reciprocal %136 {approx = true} : vector<2x8x1xf32> -> vector<2x8x1xf32>
    %138 = vector.broadcast %137 : vector<2x8x1xf32> to vector<2x8x8xf32>
    %139 = arith.mulf %134, %138 : vector<2x8x8xf32>
    %140 = arith.truncf %139 : vector<2x8x8xf32> to vector<2x8x8xbf16>
    %141 = vector.broadcast %33 : vector<1x1x32xf32> to vector<2x8x32xf32>
    %142 = arith.mulf %66, %141 : vector<2x8x32xf32>
    %143 = arith.truncf %142 : vector<2x8x32xf32> to vector<2x8x32xbf16>
    "tpu.trace_start"() <{level = 10 : i32, message = "bqk,bkd->bqd"}> : () -> ()
    %cst_32 = arith.constant dense<0.000000e+00> : vector<2x8x32xf32>
    %144 = tpu.matmul %140, %143, %cst_32 {dimension_numbers = #tpu.dot_dimension_numbers<[2], [1], [1], [2], [0, 0, 0, 1, 1, 2], [0], [0]>} : vector<2x8x8xbf16>, vector<2x8x32xbf16>, vector<2x8x32xf32> -> vector<2x8x32xf32>
    "tpu.trace_stop"() : () -> ()
    %145 = arith.addf %125, %144 : vector<2x8x32xf32>
    %146 = vector.shape_cast %145 : vector<2x8x32xf32> to vector<16x32xf32>
    %147 = arith.truncf %146 : vector<16x32xf32> to vector<16x32xbf16>
    %cst_33 = arith.constant dense<0.000000e+00> : vector<16x32xf32>
    %148 = tpu.matmul %147, %61, %cst_33 {dimension_numbers = #tpu.dot_dimension_numbers<[1], [0], [0], [1], [0, 0, 1, 1], [], []>} : vector<16x32xbf16>, vector<32x32xbf16>, vector<16x32xf32> -> vector<16x32xf32>
    %149 = vector.broadcast %62 : vector<1x32xf32> to vector<16x32xf32>
    %150 = arith.addf %148, %149 : vector<16x32xf32>
    %151 = arith.addf %0, %150 : vector<16x32xf32>
    %152 = vector.extract_strided_slice %37 {offsets = [9, 0], sizes = [1, 32], strides = [1, 1]} : vector<16x32xf32> to vector<1x32xf32>
    %153 = vector.extract_strided_slice %37 {offsets = [10, 0], sizes = [1, 32], strides = [1, 1]} : vector<16x32xf32> to vector<1x32xf32>
    %cst_34 = arith.constant dense<0.000000e+00> : vector<16xf32>
    %154 = vector.multi_reduction <add>, %151, %cst_34 [1] : vector<16x32xf32> to vector<16xf32>
    %155 = vector.shape_cast %154 : vector<16xf32> to vector<16x1xf32>
    %cst_35 = arith.constant 3.200000e+01 : f32
    %156 = vector.broadcast %cst_35 : f32 to vector<16x1xf32>
    %157 = arith.divf %155, %156 : vector<16x1xf32>
    %158 = vector.broadcast %157 : vector<16x1xf32> to vector<16x32xf32>
    %159 = arith.subf %151, %158 : vector<16x32xf32>
    %160 = arith.mulf %159, %159 : vector<16x32xf32>
    %cst_36 = arith.constant dense<0.000000e+00> : vector<16xf32>
    %161 = vector.multi_reduction <add>, %160, %cst_36 [1] : vector<16x32xf32> to vector<16xf32>
    %162 = vector.shape_cast %161 : vector<16xf32> to vector<16x1xf32>
    %cst_37 = arith.constant 3.200000e+01 : f32
    %163 = vector.broadcast %cst_37 : f32 to vector<16x1xf32>
    %164 = arith.divf %162, %163 : vector<16x1xf32>
    %165 = vector.broadcast %157 : vector<16x1xf32> to vector<16x32xf32>
    %166 = arith.subf %151, %165 : vector<16x32xf32>
    %cst_38 = arith.constant 9.99999974E-6 : f32
    %167 = vector.broadcast %cst_38 : f32 to vector<16x1xf32>
    %168 = arith.addf %164, %167 : vector<16x1xf32>
    %169 = math.rsqrt %168 : vector<16x1xf32>
    %170 = vector.broadcast %169 : vector<16x1xf32> to vector<16x32xf32>
    %171 = arith.mulf %166, %170 : vector<16x32xf32>
    %172 = vector.broadcast %152 : vector<1x32xf32> to vector<16x32xf32>
    %173 = arith.mulf %171, %172 : vector<16x32xf32>
    %174 = vector.broadcast %153 : vector<1x32xf32> to vector<16x32xf32>
    %175 = arith.addf %173, %174 : vector<16x32xf32>
    %176 = arith.addf %175, %1 : vector<16x32xf32>
    %177 = vector.extract_strided_slice %35 {offsets = [4, 0, 0], sizes = [1, 32, 32], strides = [1, 1, 1]} : vector<8x32x32xbf16> to vector<1x32x32xbf16>
    %178 = vector.shape_cast %177 : vector<1x32x32xbf16> to vector<32x32xbf16>
    %179 = arith.truncf %176 : vector<16x32xf32> to vector<16x32xbf16>
    %cst_39 = arith.constant dense<0.000000e+00> : vector<16x32xf32>
    %180 = tpu.matmul %179, %178, %cst_39 {dimension_numbers = #tpu.dot_dimension_numbers<[1], [0], [0], [1], [0, 0, 1, 1], [], []>} : vector<16x32xbf16>, vector<32x32xbf16>, vector<16x32xf32> -> vector<16x32xf32>
    %181 = vector.extract_strided_slice %37 {offsets = [4, 0], sizes = [1, 32], strides = [1, 1]} : vector<16x32xf32> to vector<1x32xf32>
    %182 = vector.broadcast %181 : vector<1x32xf32> to vector<16x32xf32>
    %183 = arith.addf %180, %182 : vector<16x32xf32>
    %184 = vector.extract_strided_slice %35 {offsets = [5, 0, 0], sizes = [1, 32, 32], strides = [1, 1, 1]} : vector<8x32x32xbf16> to vector<1x32x32xbf16>
    %185 = vector.shape_cast %184 : vector<1x32x32xbf16> to vector<32x32xbf16>
    %186 = arith.truncf %4 : vector<32x32xf32> to vector<32x32xbf16>
    %cst_40 = arith.constant dense<0.000000e+00> : vector<32x32xf32>
    %187 = tpu.matmul %186, %185, %cst_40 {dimension_numbers = #tpu.dot_dimension_numbers<[1], [0], [0], [1], [0, 0, 1, 1], [], []>} : vector<32x32xbf16>, vector<32x32xbf16>, vector<32x32xf32> -> vector<32x32xf32>
    %188 = vector.extract_strided_slice %37 {offsets = [5, 0], sizes = [1, 32], strides = [1, 1]} : vector<16x32xf32> to vector<1x32xf32>
    %189 = vector.broadcast %188 : vector<1x32xf32> to vector<32x32xf32>
    %190 = arith.addf %187, %189 : vector<32x32xf32>
    %191 = vector.extract_strided_slice %35 {offsets = [6, 0, 0], sizes = [1, 32, 32], strides = [1, 1, 1]} : vector<8x32x32xbf16> to vector<1x32x32xbf16>
    %192 = vector.shape_cast %191 : vector<1x32x32xbf16> to vector<32x32xbf16>
    %193 = arith.truncf %2 : vector<32x32xf32> to vector<32x32xbf16>
    %cst_41 = arith.constant dense<0.000000e+00> : vector<32x32xf32>
    %194 = tpu.matmul %193, %192, %cst_41 {dimension_numbers = #tpu.dot_dimension_numbers<[1], [0], [0], [1], [0, 0, 1, 1], [], []>} : vector<32x32xbf16>, vector<32x32xbf16>, vector<32x32xf32> -> vector<32x32xf32>
    %195 = vector.extract_strided_slice %37 {offsets = [6, 0], sizes = [1, 32], strides = [1, 1]} : vector<16x32xf32> to vector<1x32xf32>
    %196 = vector.broadcast %195 : vector<1x32xf32> to vector<32x32xf32>
    %197 = arith.addf %194, %196 : vector<32x32xf32>
    %198 = vector.extract_strided_slice %35 {offsets = [7, 0, 0], sizes = [1, 32, 32], strides = [1, 1, 1]} : vector<8x32x32xbf16> to vector<1x32x32xbf16>
    %199 = vector.shape_cast %198 : vector<1x32x32xbf16> to vector<32x32xbf16>
    %200 = vector.extract_strided_slice %37 {offsets = [7, 0], sizes = [1, 32], strides = [1, 1]} : vector<16x32xf32> to vector<1x32xf32>
    %201 = vector.shape_cast %183 : vector<16x32xf32> to vector<2x8x32xf32>
    %202 = arith.truncf %201 : vector<2x8x32xf32> to vector<2x8x32xbf16>
    %203 = vector.shape_cast %190 : vector<32x32xf32> to vector<2x16x32xf32>
    %204 = vector.shape_cast %197 : vector<32x32xf32> to vector<2x16x32xf32>
    %205 = vector.broadcast %12 : vector<1x1x32xf32> to vector<2x16x32xf32>
    %206 = arith.mulf %203, %205 : vector<2x16x32xf32>
    %207 = arith.truncf %206 : vector<2x16x32xf32> to vector<2x16x32xbf16>
    "tpu.trace_start"() <{level = 10 : i32, message = "bqd,bkd->bqk"}> : () -> ()
    %cst_42 = arith.constant dense<0.000000e+00> : vector<2x8x16xf32>
    %208 = tpu.matmul %202, %207, %cst_42 {dimension_numbers = #tpu.dot_dimension_numbers<[2], [2], [1], [1], [0, 0, 0, 1, 1, 1], [0], [0]>} : vector<2x8x32xbf16>, vector<2x16x32xbf16>, vector<2x8x16xf32> -> vector<2x8x16xf32>
    "tpu.trace_stop"() : () -> ()
    %cst_43 = arith.constant dense<0xFF800000> : vector<2x8xf32>
    %209 = vector.multi_reduction <maximumf>, %208, %cst_43 [2] : vector<2x8x16xf32> to vector<2x8xf32>
    %210 = vector.shape_cast %209 : vector<2x8xf32> to vector<2x8x1xf32>
    %211 = vector.broadcast %210 : vector<2x8x1xf32> to vector<2x8x16xf32>
    %212 = arith.subf %208, %211 : vector<2x8x16xf32>
    %213 = math.exp %212 : vector<2x8x16xf32>
    %cst_44 = arith.constant dense<0.000000e+00> : vector<2x8xf32>
    %214 = vector.multi_reduction <add>, %213, %cst_44 [2] : vector<2x8x16xf32> to vector<2x8xf32>
    %215 = vector.shape_cast %214 : vector<2x8xf32> to vector<2x8x1xf32>
    %216 = tpu.reciprocal %215 {approx = true} : vector<2x8x1xf32> -> vector<2x8x1xf32>
    %217 = vector.broadcast %216 : vector<2x8x1xf32> to vector<2x8x16xf32>
    %218 = arith.mulf %213, %217 : vector<2x8x16xf32>
    %219 = arith.truncf %218 : vector<2x8x16xf32> to vector<2x8x16xbf16>
    %220 = vector.broadcast %12 : vector<1x1x32xf32> to vector<2x16x32xf32>
    %221 = arith.mulf %204, %220 : vector<2x16x32xf32>
    %222 = arith.truncf %221 : vector<2x16x32xf32> to vector<2x16x32xbf16>
    "tpu.trace_start"() <{level = 10 : i32, message = "bqk,bkd->bqd"}> : () -> ()
    %cst_45 = arith.constant dense<0.000000e+00> : vector<2x8x32xf32>
    %223 = tpu.matmul %219, %222, %cst_45 {dimension_numbers = #tpu.dot_dimension_numbers<[2], [1], [1], [2], [0, 0, 0, 1, 1, 2], [0], [0]>} : vector<2x8x16xbf16>, vector<2x16x32xbf16>, vector<2x8x32xf32> -> vector<2x8x32xf32>
    "tpu.trace_stop"() : () -> ()
    %224 = vector.broadcast %19 : vector<1x1x32xf32> to vector<2x16x32xf32>
    %225 = arith.mulf %203, %224 : vector<2x16x32xf32>
    %226 = arith.truncf %225 : vector<2x16x32xf32> to vector<2x16x32xbf16>
    "tpu.trace_start"() <{level = 10 : i32, message = "bqd,bkd->bqk"}> : () -> ()
    %cst_46 = arith.constant dense<0.000000e+00> : vector<2x8x16xf32>
    %227 = tpu.matmul %202, %226, %cst_46 {dimension_numbers = #tpu.dot_dimension_numbers<[2], [2], [1], [1], [0, 0, 0, 1, 1, 1], [0], [0]>} : vector<2x8x32xbf16>, vector<2x16x32xbf16>, vector<2x8x16xf32> -> vector<2x8x16xf32>
    "tpu.trace_stop"() : () -> ()
    %cst_47 = arith.constant dense<0xFF800000> : vector<2x8xf32>
    %228 = vector.multi_reduction <maximumf>, %227, %cst_47 [2] : vector<2x8x16xf32> to vector<2x8xf32>
    %229 = vector.shape_cast %228 : vector<2x8xf32> to vector<2x8x1xf32>
    %230 = vector.broadcast %229 : vector<2x8x1xf32> to vector<2x8x16xf32>
    %231 = arith.subf %227, %230 : vector<2x8x16xf32>
    %232 = math.exp %231 : vector<2x8x16xf32>
    %cst_48 = arith.constant dense<0.000000e+00> : vector<2x8xf32>
    %233 = vector.multi_reduction <add>, %232, %cst_48 [2] : vector<2x8x16xf32> to vector<2x8xf32>
    %234 = vector.shape_cast %233 : vector<2x8xf32> to vector<2x8x1xf32>
    %235 = tpu.reciprocal %234 {approx = true} : vector<2x8x1xf32> -> vector<2x8x1xf32>
    %236 = vector.broadcast %235 : vector<2x8x1xf32> to vector<2x8x16xf32>
    %237 = arith.mulf %232, %236 : vector<2x8x16xf32>
    %238 = arith.truncf %237 : vector<2x8x16xf32> to vector<2x8x16xbf16>
    %239 = vector.broadcast %19 : vector<1x1x32xf32> to vector<2x16x32xf32>
    %240 = arith.mulf %204, %239 : vector<2x16x32xf32>
    %241 = arith.truncf %240 : vector<2x16x32xf32> to vector<2x16x32xbf16>
    "tpu.trace_start"() <{level = 10 : i32, message = "bqk,bkd->bqd"}> : () -> ()
    %cst_49 = arith.constant dense<0.000000e+00> : vector<2x8x32xf32>
    %242 = tpu.matmul %238, %241, %cst_49 {dimension_numbers = #tpu.dot_dimension_numbers<[2], [1], [1], [2], [0, 0, 0, 1, 1, 2], [0], [0]>} : vector<2x8x16xbf16>, vector<2x16x32xbf16>, vector<2x8x32xf32> -> vector<2x8x32xf32>
    "tpu.trace_stop"() : () -> ()
    %243 = arith.addf %223, %242 : vector<2x8x32xf32>
    %244 = vector.broadcast %26 : vector<1x1x32xf32> to vector<2x16x32xf32>
    %245 = arith.mulf %203, %244 : vector<2x16x32xf32>
    %246 = arith.truncf %245 : vector<2x16x32xf32> to vector<2x16x32xbf16>
    "tpu.trace_start"() <{level = 10 : i32, message = "bqd,bkd->bqk"}> : () -> ()
    %cst_50 = arith.constant dense<0.000000e+00> : vector<2x8x16xf32>
    %247 = tpu.matmul %202, %246, %cst_50 {dimension_numbers = #tpu.dot_dimension_numbers<[2], [2], [1], [1], [0, 0, 0, 1, 1, 1], [0], [0]>} : vector<2x8x32xbf16>, vector<2x16x32xbf16>, vector<2x8x16xf32> -> vector<2x8x16xf32>
    "tpu.trace_stop"() : () -> ()
    %cst_51 = arith.constant dense<0xFF800000> : vector<2x8xf32>
    %248 = vector.multi_reduction <maximumf>, %247, %cst_51 [2] : vector<2x8x16xf32> to vector<2x8xf32>
    %249 = vector.shape_cast %248 : vector<2x8xf32> to vector<2x8x1xf32>
    %250 = vector.broadcast %249 : vector<2x8x1xf32> to vector<2x8x16xf32>
    %251 = arith.subf %247, %250 : vector<2x8x16xf32>
    %252 = math.exp %251 : vector<2x8x16xf32>
    %cst_52 = arith.constant dense<0.000000e+00> : vector<2x8xf32>
    %253 = vector.multi_reduction <add>, %252, %cst_52 [2] : vector<2x8x16xf32> to vector<2x8xf32>
    %254 = vector.shape_cast %253 : vector<2x8xf32> to vector<2x8x1xf32>
    %255 = tpu.reciprocal %254 {approx = true} : vector<2x8x1xf32> -> vector<2x8x1xf32>
    %256 = vector.broadcast %255 : vector<2x8x1xf32> to vector<2x8x16xf32>
    %257 = arith.mulf %252, %256 : vector<2x8x16xf32>
    %258 = arith.truncf %257 : vector<2x8x16xf32> to vector<2x8x16xbf16>
    %259 = vector.broadcast %26 : vector<1x1x32xf32> to vector<2x16x32xf32>
    %260 = arith.mulf %204, %259 : vector<2x16x32xf32>
    %261 = arith.truncf %260 : vector<2x16x32xf32> to vector<2x16x32xbf16>
    "tpu.trace_start"() <{level = 10 : i32, message = "bqk,bkd->bqd"}> : () -> ()
    %cst_53 = arith.constant dense<0.000000e+00> : vector<2x8x32xf32>
    %262 = tpu.matmul %258, %261, %cst_53 {dimension_numbers = #tpu.dot_dimension_numbers<[2], [1], [1], [2], [0, 0, 0, 1, 1, 2], [0], [0]>} : vector<2x8x16xbf16>, vector<2x16x32xbf16>, vector<2x8x32xf32> -> vector<2x8x32xf32>
    "tpu.trace_stop"() : () -> ()
    %263 = arith.addf %243, %262 : vector<2x8x32xf32>
    %264 = vector.broadcast %33 : vector<1x1x32xf32> to vector<2x16x32xf32>
    %265 = arith.mulf %203, %264 : vector<2x16x32xf32>
    %266 = arith.truncf %265 : vector<2x16x32xf32> to vector<2x16x32xbf16>
    "tpu.trace_start"() <{level = 10 : i32, message = "bqd,bkd->bqk"}> : () -> ()
    %cst_54 = arith.constant dense<0.000000e+00> : vector<2x8x16xf32>
    %267 = tpu.matmul %202, %266, %cst_54 {dimension_numbers = #tpu.dot_dimension_numbers<[2], [2], [1], [1], [0, 0, 0, 1, 1, 1], [0], [0]>} : vector<2x8x32xbf16>, vector<2x16x32xbf16>, vector<2x8x16xf32> -> vector<2x8x16xf32>
    "tpu.trace_stop"() : () -> ()
    %cst_55 = arith.constant dense<0xFF800000> : vector<2x8xf32>
    %268 = vector.multi_reduction <maximumf>, %267, %cst_55 [2] : vector<2x8x16xf32> to vector<2x8xf32>
    %269 = vector.shape_cast %268 : vector<2x8xf32> to vector<2x8x1xf32>
    %270 = vector.broadcast %269 : vector<2x8x1xf32> to vector<2x8x16xf32>
    %271 = arith.subf %267, %270 : vector<2x8x16xf32>
    %272 = math.exp %271 : vector<2x8x16xf32>
    %cst_56 = arith.constant dense<0.000000e+00> : vector<2x8xf32>
    %273 = vector.multi_reduction <add>, %272, %cst_56 [2] : vector<2x8x16xf32> to vector<2x8xf32>
    %274 = vector.shape_cast %273 : vector<2x8xf32> to vector<2x8x1xf32>
    %275 = tpu.reciprocal %274 {approx = true} : vector<2x8x1xf32> -> vector<2x8x1xf32>
    %276 = vector.broadcast %275 : vector<2x8x1xf32> to vector<2x8x16xf32>
    %277 = arith.mulf %272, %276 : vector<2x8x16xf32>
    %278 = arith.truncf %277 : vector<2x8x16xf32> to vector<2x8x16xbf16>
    %279 = vector.broadcast %33 : vector<1x1x32xf32> to vector<2x16x32xf32>
    %280 = arith.mulf %204, %279 : vector<2x16x32xf32>
    %281 = arith.truncf %280 : vector<2x16x32xf32> to vector<2x16x32xbf16>
    "tpu.trace_start"() <{level = 10 : i32, message = "bqk,bkd->bqd"}> : () -> ()
    %cst_57 = arith.constant dense<0.000000e+00> : vector<2x8x32xf32>
    %282 = tpu.matmul %278, %281, %cst_57 {dimension_numbers = #tpu.dot_dimension_numbers<[2], [1], [1], [2], [0, 0, 0, 1, 1, 2], [0], [0]>} : vector<2x8x16xbf16>, vector<2x16x32xbf16>, vector<2x8x32xf32> -> vector<2x8x32xf32>
    "tpu.trace_stop"() : () -> ()
    %283 = arith.addf %263, %282 : vector<2x8x32xf32>
    %284 = vector.shape_cast %283 : vector<2x8x32xf32> to vector<16x32xf32>
    %285 = arith.truncf %284 : vector<16x32xf32> to vector<16x32xbf16>
    %cst_58 = arith.constant dense<0.000000e+00> : vector<16x32xf32>
    %286 = tpu.matmul %285, %199, %cst_58 {dimension_numbers = #tpu.dot_dimension_numbers<[1], [0], [0], [1], [0, 0, 1, 1], [], []>} : vector<16x32xbf16>, vector<32x32xbf16>, vector<16x32xf32> -> vector<16x32xf32>
    %287 = vector.broadcast %200 : vector<1x32xf32> to vector<16x32xf32>
    %288 = arith.addf %286, %287 : vector<16x32xf32>
    %289 = arith.addf %175, %288 : vector<16x32xf32>
    %290 = vector.extract_strided_slice %37 {offsets = [11, 0], sizes = [1, 32], strides = [1, 1]} : vector<16x32xf32> to vector<1x32xf32>
    %291 = vector.extract_strided_slice %37 {offsets = [12, 0], sizes = [1, 32], strides = [1, 1]} : vector<16x32xf32> to vector<1x32xf32>
    %cst_59 = arith.constant dense<0.000000e+00> : vector<16xf32>
    %292 = vector.multi_reduction <add>, %289, %cst_59 [1] : vector<16x32xf32> to vector<16xf32>
    %293 = vector.shape_cast %292 : vector<16xf32> to vector<16x1xf32>
    %cst_60 = arith.constant 3.200000e+01 : f32
    %294 = vector.broadcast %cst_60 : f32 to vector<16x1xf32>
    %295 = arith.divf %293, %294 : vector<16x1xf32>
    %296 = vector.broadcast %295 : vector<16x1xf32> to vector<16x32xf32>
    %297 = arith.subf %289, %296 : vector<16x32xf32>
    %298 = arith.mulf %297, %297 : vector<16x32xf32>
    %cst_61 = arith.constant dense<0.000000e+00> : vector<16xf32>
    %299 = vector.multi_reduction <add>, %298, %cst_61 [1] : vector<16x32xf32> to vector<16xf32>
    %300 = vector.shape_cast %299 : vector<16xf32> to vector<16x1xf32>
    %cst_62 = arith.constant 3.200000e+01 : f32
    %301 = vector.broadcast %cst_62 : f32 to vector<16x1xf32>
    %302 = arith.divf %300, %301 : vector<16x1xf32>
    %303 = vector.broadcast %295 : vector<16x1xf32> to vector<16x32xf32>
    %304 = arith.subf %289, %303 : vector<16x32xf32>
    %cst_63 = arith.constant 9.99999974E-6 : f32
    %305 = vector.broadcast %cst_63 : f32 to vector<16x1xf32>
    %306 = arith.addf %302, %305 : vector<16x1xf32>
    %307 = math.rsqrt %306 : vector<16x1xf32>
    %308 = vector.broadcast %307 : vector<16x1xf32> to vector<16x32xf32>
    %309 = arith.mulf %304, %308 : vector<16x32xf32>
    %310 = vector.broadcast %290 : vector<1x32xf32> to vector<16x32xf32>
    %311 = arith.mulf %309, %310 : vector<16x32xf32>
    %312 = vector.broadcast %291 : vector<1x32xf32> to vector<16x32xf32>
    %313 = arith.addf %311, %312 : vector<16x32xf32>
    %c0_64 = arith.constant 0 : index
    %c0_65 = arith.constant 0 : index
    %c0_66 = arith.constant 0 : index
    %314 = vector.load %arg3[%c0_64, %c0_65, %c0_66] : memref<2x32x64xbf16, #tpu.memory_space<vmem>>, vector<1x32x64xbf16>
    %315 = vector.shape_cast %314 : vector<1x32x64xbf16> to vector<32x64xbf16>
    %316 = arith.truncf %313 : vector<16x32xf32> to vector<16x32xbf16>
    %cst_67 = arith.constant dense<0.000000e+00> : vector<16x64xf32>
    %317 = tpu.matmul %316, %315, %cst_67 {dimension_numbers = #tpu.dot_dimension_numbers<[1], [0], [0], [1], [0, 0, 1, 1], [], []>} : vector<16x32xbf16>, vector<32x64xbf16>, vector<16x64xf32> -> vector<16x64xf32>
    %c0_68 = arith.constant 0 : index
    %c0_69 = arith.constant 0 : index
    %c0_70 = arith.constant 0 : index
    %318 = vector.load %arg6[%c0_68, %c0_69, %c0_70] : memref<2x1x64xf32, #tpu.memory_space<vmem>>, vector<1x1x64xf32>
    %319 = vector.shape_cast %318 : vector<1x1x64xf32> to vector<1x64xf32>
    %320 = vector.broadcast %319 : vector<1x64xf32> to vector<16x64xf32>
    %321 = arith.addf %317, %320 : vector<16x64xf32>
    %cst_71 = arith.constant 0.000000e+00 : f32
    %322 = vector.broadcast %cst_71 : f32 to vector<16x64xf32>
    %323 = arith.maximumf %321, %322 : vector<16x64xf32>
    %c0_72 = arith.constant 0 : index
    %c0_73 = arith.constant 0 : index
    %c0_74 = arith.constant 0 : index
    %324 = vector.load %arg4[%c0_72, %c0_73, %c0_74] : memref<2x64x32xbf16, #tpu.memory_space<vmem>>, vector<1x64x32xbf16>
    %325 = vector.shape_cast %324 : vector<1x64x32xbf16> to vector<64x32xbf16>
    %326 = arith.truncf %323 : vector<16x64xf32> to vector<16x64xbf16>
    %cst_75 = arith.constant dense<0.000000e+00> : vector<16x32xf32>
    %327 = tpu.matmul %326, %325, %cst_75 {dimension_numbers = #tpu.dot_dimension_numbers<[1], [0], [0], [1], [0, 0, 1, 1], [], []>} : vector<16x64xbf16>, vector<64x32xbf16>, vector<16x32xf32> -> vector<16x32xf32>
    %328 = vector.extract_strided_slice %37 {offsets = [8, 0], sizes = [1, 32], strides = [1, 1]} : vector<16x32xf32> to vector<1x32xf32>
    %329 = vector.broadcast %328 : vector<1x32xf32> to vector<16x32xf32>
    %330 = arith.addf %327, %329 : vector<16x32xf32>
    %331 = arith.addf %313, %330 : vector<16x32xf32>
    %332 = vector.extract_strided_slice %37 {offsets = [13, 0], sizes = [1, 32], strides = [1, 1]} : vector<16x32xf32> to vector<1x32xf32>
    %333 = vector.extract_strided_slice %37 {offsets = [14, 0], sizes = [1, 32], strides = [1, 1]} : vector<16x32xf32> to vector<1x32xf32>
    %cst_76 = arith.constant dense<0.000000e+00> : vector<16xf32>
    %334 = vector.multi_reduction <add>, %331, %cst_76 [1] : vector<16x32xf32> to vector<16xf32>
    %335 = vector.shape_cast %334 : vector<16xf32> to vector<16x1xf32>
    %cst_77 = arith.constant 3.200000e+01 : f32
    %336 = vector.broadcast %cst_77 : f32 to vector<16x1xf32>
    %337 = arith.divf %335, %336 : vector<16x1xf32>
    %338 = vector.broadcast %337 : vector<16x1xf32> to vector<16x32xf32>
    %339 = arith.subf %331, %338 : vector<16x32xf32>
    %340 = arith.mulf %339, %339 : vector<16x32xf32>
    %cst_78 = arith.constant dense<0.000000e+00> : vector<16xf32>
    %341 = vector.multi_reduction <add>, %340, %cst_78 [1] : vector<16x32xf32> to vector<16xf32>
    %342 = vector.shape_cast %341 : vector<16xf32> to vector<16x1xf32>
    %cst_79 = arith.constant 3.200000e+01 : f32
    %343 = vector.broadcast %cst_79 : f32 to vector<16x1xf32>
    %344 = arith.divf %342, %343 : vector<16x1xf32>
    %345 = vector.broadcast %337 : vector<16x1xf32> to vector<16x32xf32>
    %346 = arith.subf %331, %345 : vector<16x32xf32>
    %cst_80 = arith.constant 9.99999974E-6 : f32
    %347 = vector.broadcast %cst_80 : f32 to vector<16x1xf32>
    %348 = arith.addf %344, %347 : vector<16x1xf32>
    %349 = math.rsqrt %348 : vector<16x1xf32>
    %350 = vector.broadcast %349 : vector<16x1xf32> to vector<16x32xf32>
    %351 = arith.mulf %346, %350 : vector<16x32xf32>
    %352 = vector.broadcast %332 : vector<1x32xf32> to vector<16x32xf32>
    %353 = arith.mulf %351, %352 : vector<16x32xf32>
    %354 = vector.broadcast %333 : vector<1x32xf32> to vector<16x32xf32>
    %355 = arith.addf %353, %354 : vector<16x32xf32>
    %c1 = arith.constant 1 : index
    %c0_81 = arith.constant 0 : index
    %c0_82 = arith.constant 0 : index
    %c0_83 = arith.constant 0 : index
    %356 = vector.load %arg2[%c1, %c0_81, %c0_82, %c0_83] : memref<2x8x32x32xbf16, #tpu.memory_space<vmem>>, vector<1x8x32x32xbf16>
    %357 = vector.shape_cast %356 : vector<1x8x32x32xbf16> to vector<8x32x32xbf16>
    %c1_84 = arith.constant 1 : index
    %c0_85 = arith.constant 0 : index
    %c0_86 = arith.constant 0 : index
    %358 = vector.load %arg5[%c1_84, %c0_85, %c0_86] : memref<2x16x32xf32, #tpu.memory_space<vmem>>, vector<1x16x32xf32>
    %359 = vector.shape_cast %358 : vector<1x16x32xf32> to vector<16x32xf32>
    %360 = arith.addf %355, %1 : vector<16x32xf32>
    %361 = vector.extract_strided_slice %357 {offsets = [0, 0, 0], sizes = [1, 32, 32], strides = [1, 1, 1]} : vector<8x32x32xbf16> to vector<1x32x32xbf16>
    %362 = vector.shape_cast %361 : vector<1x32x32xbf16> to vector<32x32xbf16>
    %363 = arith.truncf %360 : vector<16x32xf32> to vector<16x32xbf16>
    %cst_87 = arith.constant dense<0.000000e+00> : vector<16x32xf32>
    %364 = tpu.matmul %363, %362, %cst_87 {dimension_numbers = #tpu.dot_dimension_numbers<[1], [0], [0], [1], [0, 0, 1, 1], [], []>} : vector<16x32xbf16>, vector<32x32xbf16>, vector<16x32xf32> -> vector<16x32xf32>
    %365 = vector.extract_strided_slice %359 {offsets = [0, 0], sizes = [1, 32], strides = [1, 1]} : vector<16x32xf32> to vector<1x32xf32>
    %366 = vector.broadcast %365 : vector<1x32xf32> to vector<16x32xf32>
    %367 = arith.addf %364, %366 : vector<16x32xf32>
    %368 = vector.extract_strided_slice %357 {offsets = [1, 0, 0], sizes = [1, 32, 32], strides = [1, 1, 1]} : vector<8x32x32xbf16> to vector<1x32x32xbf16>
    %369 = vector.shape_cast %368 : vector<1x32x32xbf16> to vector<32x32xbf16>
    %370 = arith.truncf %360 : vector<16x32xf32> to vector<16x32xbf16>
    %cst_88 = arith.constant dense<0.000000e+00> : vector<16x32xf32>
    %371 = tpu.matmul %370, %369, %cst_88 {dimension_numbers = #tpu.dot_dimension_numbers<[1], [0], [0], [1], [0, 0, 1, 1], [], []>} : vector<16x32xbf16>, vector<32x32xbf16>, vector<16x32xf32> -> vector<16x32xf32>
    %372 = vector.extract_strided_slice %359 {offsets = [1, 0], sizes = [1, 32], strides = [1, 1]} : vector<16x32xf32> to vector<1x32xf32>
    %373 = vector.broadcast %372 : vector<1x32xf32> to vector<16x32xf32>
    %374 = arith.addf %371, %373 : vector<16x32xf32>
    %375 = vector.extract_strided_slice %357 {offsets = [2, 0, 0], sizes = [1, 32, 32], strides = [1, 1, 1]} : vector<8x32x32xbf16> to vector<1x32x32xbf16>
    %376 = vector.shape_cast %375 : vector<1x32x32xbf16> to vector<32x32xbf16>
    %377 = arith.truncf %355 : vector<16x32xf32> to vector<16x32xbf16>
    %cst_89 = arith.constant dense<0.000000e+00> : vector<16x32xf32>
    %378 = tpu.matmul %377, %376, %cst_89 {dimension_numbers = #tpu.dot_dimension_numbers<[1], [0], [0], [1], [0, 0, 1, 1], [], []>} : vector<16x32xbf16>, vector<32x32xbf16>, vector<16x32xf32> -> vector<16x32xf32>
    %379 = vector.extract_strided_slice %359 {offsets = [2, 0], sizes = [1, 32], strides = [1, 1]} : vector<16x32xf32> to vector<1x32xf32>
    %380 = vector.broadcast %379 : vector<1x32xf32> to vector<16x32xf32>
    %381 = arith.addf %378, %380 : vector<16x32xf32>
    %382 = vector.extract_strided_slice %357 {offsets = [3, 0, 0], sizes = [1, 32, 32], strides = [1, 1, 1]} : vector<8x32x32xbf16> to vector<1x32x32xbf16>
    %383 = vector.shape_cast %382 : vector<1x32x32xbf16> to vector<32x32xbf16>
    %384 = vector.extract_strided_slice %359 {offsets = [3, 0], sizes = [1, 32], strides = [1, 1]} : vector<16x32xf32> to vector<1x32xf32>
    %385 = vector.shape_cast %367 : vector<16x32xf32> to vector<2x8x32xf32>
    %386 = arith.truncf %385 : vector<2x8x32xf32> to vector<2x8x32xbf16>
    %387 = vector.shape_cast %374 : vector<16x32xf32> to vector<2x8x32xf32>
    %388 = vector.shape_cast %381 : vector<16x32xf32> to vector<2x8x32xf32>
    %389 = vector.broadcast %12 : vector<1x1x32xf32> to vector<2x8x32xf32>
    %390 = arith.mulf %387, %389 : vector<2x8x32xf32>
    %391 = arith.truncf %390 : vector<2x8x32xf32> to vector<2x8x32xbf16>
    "tpu.trace_start"() <{level = 10 : i32, message = "bqd,bkd->bqk"}> : () -> ()
    %cst_90 = arith.constant dense<0.000000e+00> : vector<2x8x8xf32>
    %392 = tpu.matmul %386, %391, %cst_90 {dimension_numbers = #tpu.dot_dimension_numbers<[2], [2], [1], [1], [0, 0, 0, 1, 1, 1], [0], [0]>} : vector<2x8x32xbf16>, vector<2x8x32xbf16>, vector<2x8x8xf32> -> vector<2x8x8xf32>
    "tpu.trace_stop"() : () -> ()
    %cst_91 = arith.constant dense<0xFF800000> : vector<2x8xf32>
    %393 = vector.multi_reduction <maximumf>, %392, %cst_91 [2] : vector<2x8x8xf32> to vector<2x8xf32>
    %394 = vector.shape_cast %393 : vector<2x8xf32> to vector<2x8x1xf32>
    %395 = vector.broadcast %394 : vector<2x8x1xf32> to vector<2x8x8xf32>
    %396 = arith.subf %392, %395 : vector<2x8x8xf32>
    %397 = math.exp %396 : vector<2x8x8xf32>
    %cst_92 = arith.constant dense<0.000000e+00> : vector<2x8xf32>
    %398 = vector.multi_reduction <add>, %397, %cst_92 [2] : vector<2x8x8xf32> to vector<2x8xf32>
    %399 = vector.shape_cast %398 : vector<2x8xf32> to vector<2x8x1xf32>
    %400 = tpu.reciprocal %399 {approx = true} : vector<2x8x1xf32> -> vector<2x8x1xf32>
    %401 = vector.broadcast %400 : vector<2x8x1xf32> to vector<2x8x8xf32>
    %402 = arith.mulf %397, %401 : vector<2x8x8xf32>
    %403 = arith.truncf %402 : vector<2x8x8xf32> to vector<2x8x8xbf16>
    %404 = vector.broadcast %12 : vector<1x1x32xf32> to vector<2x8x32xf32>
    %405 = arith.mulf %388, %404 : vector<2x8x32xf32>
    %406 = arith.truncf %405 : vector<2x8x32xf32> to vector<2x8x32xbf16>
    "tpu.trace_start"() <{level = 10 : i32, message = "bqk,bkd->bqd"}> : () -> ()
    %cst_93 = arith.constant dense<0.000000e+00> : vector<2x8x32xf32>
    %407 = tpu.matmul %403, %406, %cst_93 {dimension_numbers = #tpu.dot_dimension_numbers<[2], [1], [1], [2], [0, 0, 0, 1, 1, 2], [0], [0]>} : vector<2x8x8xbf16>, vector<2x8x32xbf16>, vector<2x8x32xf32> -> vector<2x8x32xf32>
    "tpu.trace_stop"() : () -> ()
    %408 = vector.broadcast %19 : vector<1x1x32xf32> to vector<2x8x32xf32>
    %409 = arith.mulf %387, %408 : vector<2x8x32xf32>
    %410 = arith.truncf %409 : vector<2x8x32xf32> to vector<2x8x32xbf16>
    "tpu.trace_start"() <{level = 10 : i32, message = "bqd,bkd->bqk"}> : () -> ()
    %cst_94 = arith.constant dense<0.000000e+00> : vector<2x8x8xf32>
    %411 = tpu.matmul %386, %410, %cst_94 {dimension_numbers = #tpu.dot_dimension_numbers<[2], [2], [1], [1], [0, 0, 0, 1, 1, 1], [0], [0]>} : vector<2x8x32xbf16>, vector<2x8x32xbf16>, vector<2x8x8xf32> -> vector<2x8x8xf32>
    "tpu.trace_stop"() : () -> ()
    %cst_95 = arith.constant dense<0xFF800000> : vector<2x8xf32>
    %412 = vector.multi_reduction <maximumf>, %411, %cst_95 [2] : vector<2x8x8xf32> to vector<2x8xf32>
    %413 = vector.shape_cast %412 : vector<2x8xf32> to vector<2x8x1xf32>
    %414 = vector.broadcast %413 : vector<2x8x1xf32> to vector<2x8x8xf32>
    %415 = arith.subf %411, %414 : vector<2x8x8xf32>
    %416 = math.exp %415 : vector<2x8x8xf32>
    %cst_96 = arith.constant dense<0.000000e+00> : vector<2x8xf32>
    %417 = vector.multi_reduction <add>, %416, %cst_96 [2] : vector<2x8x8xf32> to vector<2x8xf32>
    %418 = vector.shape_cast %417 : vector<2x8xf32> to vector<2x8x1xf32>
    %419 = tpu.reciprocal %418 {approx = true} : vector<2x8x1xf32> -> vector<2x8x1xf32>
    %420 = vector.broadcast %419 : vector<2x8x1xf32> to vector<2x8x8xf32>
    %421 = arith.mulf %416, %420 : vector<2x8x8xf32>
    %422 = arith.truncf %421 : vector<2x8x8xf32> to vector<2x8x8xbf16>
    %423 = vector.broadcast %19 : vector<1x1x32xf32> to vector<2x8x32xf32>
    %424 = arith.mulf %388, %423 : vector<2x8x32xf32>
    %425 = arith.truncf %424 : vector<2x8x32xf32> to vector<2x8x32xbf16>
    "tpu.trace_start"() <{level = 10 : i32, message = "bqk,bkd->bqd"}> : () -> ()
    %cst_97 = arith.constant dense<0.000000e+00> : vector<2x8x32xf32>
    %426 = tpu.matmul %422, %425, %cst_97 {dimension_numbers = #tpu.dot_dimension_numbers<[2], [1], [1], [2], [0, 0, 0, 1, 1, 2], [0], [0]>} : vector<2x8x8xbf16>, vector<2x8x32xbf16>, vector<2x8x32xf32> -> vector<2x8x32xf32>
    "tpu.trace_stop"() : () -> ()
    %427 = arith.addf %407, %426 : vector<2x8x32xf32>
    %428 = vector.broadcast %26 : vector<1x1x32xf32> to vector<2x8x32xf32>
    %429 = arith.mulf %387, %428 : vector<2x8x32xf32>
    %430 = arith.truncf %429 : vector<2x8x32xf32> to vector<2x8x32xbf16>
    "tpu.trace_start"() <{level = 10 : i32, message = "bqd,bkd->bqk"}> : () -> ()
    %cst_98 = arith.constant dense<0.000000e+00> : vector<2x8x8xf32>
    %431 = tpu.matmul %386, %430, %cst_98 {dimension_numbers = #tpu.dot_dimension_numbers<[2], [2], [1], [1], [0, 0, 0, 1, 1, 1], [0], [0]>} : vector<2x8x32xbf16>, vector<2x8x32xbf16>, vector<2x8x8xf32> -> vector<2x8x8xf32>
    "tpu.trace_stop"() : () -> ()
    %cst_99 = arith.constant dense<0xFF800000> : vector<2x8xf32>
    %432 = vector.multi_reduction <maximumf>, %431, %cst_99 [2] : vector<2x8x8xf32> to vector<2x8xf32>
    %433 = vector.shape_cast %432 : vector<2x8xf32> to vector<2x8x1xf32>
    %434 = vector.broadcast %433 : vector<2x8x1xf32> to vector<2x8x8xf32>
    %435 = arith.subf %431, %434 : vector<2x8x8xf32>
    %436 = math.exp %435 : vector<2x8x8xf32>
    %cst_100 = arith.constant dense<0.000000e+00> : vector<2x8xf32>
    %437 = vector.multi_reduction <add>, %436, %cst_100 [2] : vector<2x8x8xf32> to vector<2x8xf32>
    %438 = vector.shape_cast %437 : vector<2x8xf32> to vector<2x8x1xf32>
    %439 = tpu.reciprocal %438 {approx = true} : vector<2x8x1xf32> -> vector<2x8x1xf32>
    %440 = vector.broadcast %439 : vector<2x8x1xf32> to vector<2x8x8xf32>
    %441 = arith.mulf %436, %440 : vector<2x8x8xf32>
    %442 = arith.truncf %441 : vector<2x8x8xf32> to vector<2x8x8xbf16>
    %443 = vector.broadcast %26 : vector<1x1x32xf32> to vector<2x8x32xf32>
    %444 = arith.mulf %388, %443 : vector<2x8x32xf32>
    %445 = arith.truncf %444 : vector<2x8x32xf32> to vector<2x8x32xbf16>
    "tpu.trace_start"() <{level = 10 : i32, message = "bqk,bkd->bqd"}> : () -> ()
    %cst_101 = arith.constant dense<0.000000e+00> : vector<2x8x32xf32>
    %446 = tpu.matmul %442, %445, %cst_101 {dimension_numbers = #tpu.dot_dimension_numbers<[2], [1], [1], [2], [0, 0, 0, 1, 1, 2], [0], [0]>} : vector<2x8x8xbf16>, vector<2x8x32xbf16>, vector<2x8x32xf32> -> vector<2x8x32xf32>
    "tpu.trace_stop"() : () -> ()
    %447 = arith.addf %427, %446 : vector<2x8x32xf32>
    %448 = vector.broadcast %33 : vector<1x1x32xf32> to vector<2x8x32xf32>
    %449 = arith.mulf %387, %448 : vector<2x8x32xf32>
    %450 = arith.truncf %449 : vector<2x8x32xf32> to vector<2x8x32xbf16>
    "tpu.trace_start"() <{level = 10 : i32, message = "bqd,bkd->bqk"}> : () -> ()
    %cst_102 = arith.constant dense<0.000000e+00> : vector<2x8x8xf32>
    %451 = tpu.matmul %386, %450, %cst_102 {dimension_numbers = #tpu.dot_dimension_numbers<[2], [2], [1], [1], [0, 0, 0, 1, 1, 1], [0], [0]>} : vector<2x8x32xbf16>, vector<2x8x32xbf16>, vector<2x8x8xf32> -> vector<2x8x8xf32>
    "tpu.trace_stop"() : () -> ()
    %cst_103 = arith.constant dense<0xFF800000> : vector<2x8xf32>
    %452 = vector.multi_reduction <maximumf>, %451, %cst_103 [2] : vector<2x8x8xf32> to vector<2x8xf32>
    %453 = vector.shape_cast %452 : vector<2x8xf32> to vector<2x8x1xf32>
    %454 = vector.broadcast %453 : vector<2x8x1xf32> to vector<2x8x8xf32>
    %455 = arith.subf %451, %454 : vector<2x8x8xf32>
    %456 = math.exp %455 : vector<2x8x8xf32>
    %cst_104 = arith.constant dense<0.000000e+00> : vector<2x8xf32>
    %457 = vector.multi_reduction <add>, %456, %cst_104 [2] : vector<2x8x8xf32> to vector<2x8xf32>
    %458 = vector.shape_cast %457 : vector<2x8xf32> to vector<2x8x1xf32>
    %459 = tpu.reciprocal %458 {approx = true} : vector<2x8x1xf32> -> vector<2x8x1xf32>
    %460 = vector.broadcast %459 : vector<2x8x1xf32> to vector<2x8x8xf32>
    %461 = arith.mulf %456, %460 : vector<2x8x8xf32>
    %462 = arith.truncf %461 : vector<2x8x8xf32> to vector<2x8x8xbf16>
    %463 = vector.broadcast %33 : vector<1x1x32xf32> to vector<2x8x32xf32>
    %464 = arith.mulf %388, %463 : vector<2x8x32xf32>
    %465 = arith.truncf %464 : vector<2x8x32xf32> to vector<2x8x32xbf16>
    "tpu.trace_start"() <{level = 10 : i32, message = "bqk,bkd->bqd"}> : () -> ()
    %cst_105 = arith.constant dense<0.000000e+00> : vector<2x8x32xf32>
    %466 = tpu.matmul %462, %465, %cst_105 {dimension_numbers = #tpu.dot_dimension_numbers<[2], [1], [1], [2], [0, 0, 0, 1, 1, 2], [0], [0]>} : vector<2x8x8xbf16>, vector<2x8x32xbf16>, vector<2x8x32xf32> -> vector<2x8x32xf32>
    "tpu.trace_stop"() : () -> ()
    %467 = arith.addf %447, %466 : vector<2x8x32xf32>
    %468 = vector.shape_cast %467 : vector<2x8x32xf32> to vector<16x32xf32>
    %469 = arith.truncf %468 : vector<16x32xf32> to vector<16x32xbf16>
    %cst_106 = arith.constant dense<0.000000e+00> : vector<16x32xf32>
    %470 = tpu.matmul %469, %383, %cst_106 {dimension_numbers = #tpu.dot_dimension_numbers<[1], [0], [0], [1], [0, 0, 1, 1], [], []>} : vector<16x32xbf16>, vector<32x32xbf16>, vector<16x32xf32> -> vector<16x32xf32>
    %471 = vector.broadcast %384 : vector<1x32xf32> to vector<16x32xf32>
    %472 = arith.addf %470, %471 : vector<16x32xf32>
    %473 = arith.addf %355, %472 : vector<16x32xf32>
    %474 = vector.extract_strided_slice %359 {offsets = [9, 0], sizes = [1, 32], strides = [1, 1]} : vector<16x32xf32> to vector<1x32xf32>
    %475 = vector.extract_strided_slice %359 {offsets = [10, 0], sizes = [1, 32], strides = [1, 1]} : vector<16x32xf32> to vector<1x32xf32>
    %cst_107 = arith.constant dense<0.000000e+00> : vector<16xf32>
    %476 = vector.multi_reduction <add>, %473, %cst_107 [1] : vector<16x32xf32> to vector<16xf32>
    %477 = vector.shape_cast %476 : vector<16xf32> to vector<16x1xf32>
    %cst_108 = arith.constant 3.200000e+01 : f32
    %478 = vector.broadcast %cst_108 : f32 to vector<16x1xf32>
    %479 = arith.divf %477, %478 : vector<16x1xf32>
    %480 = vector.broadcast %479 : vector<16x1xf32> to vector<16x32xf32>
    %481 = arith.subf %473, %480 : vector<16x32xf32>
    %482 = arith.mulf %481, %481 : vector<16x32xf32>
    %cst_109 = arith.constant dense<0.000000e+00> : vector<16xf32>
    %483 = vector.multi_reduction <add>, %482, %cst_109 [1] : vector<16x32xf32> to vector<16xf32>
    %484 = vector.shape_cast %483 : vector<16xf32> to vector<16x1xf32>
    %cst_110 = arith.constant 3.200000e+01 : f32
    %485 = vector.broadcast %cst_110 : f32 to vector<16x1xf32>
    %486 = arith.divf %484, %485 : vector<16x1xf32>
    %487 = vector.broadcast %479 : vector<16x1xf32> to vector<16x32xf32>
    %488 = arith.subf %473, %487 : vector<16x32xf32>
    %cst_111 = arith.constant 9.99999974E-6 : f32
    %489 = vector.broadcast %cst_111 : f32 to vector<16x1xf32>
    %490 = arith.addf %486, %489 : vector<16x1xf32>
    %491 = math.rsqrt %490 : vector<16x1xf32>
    %492 = vector.broadcast %491 : vector<16x1xf32> to vector<16x32xf32>
    %493 = arith.mulf %488, %492 : vector<16x32xf32>
    %494 = vector.broadcast %474 : vector<1x32xf32> to vector<16x32xf32>
    %495 = arith.mulf %493, %494 : vector<16x32xf32>
    %496 = vector.broadcast %475 : vector<1x32xf32> to vector<16x32xf32>
    %497 = arith.addf %495, %496 : vector<16x32xf32>
    %498 = arith.addf %497, %1 : vector<16x32xf32>
    %499 = vector.extract_strided_slice %357 {offsets = [4, 0, 0], sizes = [1, 32, 32], strides = [1, 1, 1]} : vector<8x32x32xbf16> to vector<1x32x32xbf16>
    %500 = vector.shape_cast %499 : vector<1x32x32xbf16> to vector<32x32xbf16>
    %501 = arith.truncf %498 : vector<16x32xf32> to vector<16x32xbf16>
    %cst_112 = arith.constant dense<0.000000e+00> : vector<16x32xf32>
    %502 = tpu.matmul %501, %500, %cst_112 {dimension_numbers = #tpu.dot_dimension_numbers<[1], [0], [0], [1], [0, 0, 1, 1], [], []>} : vector<16x32xbf16>, vector<32x32xbf16>, vector<16x32xf32> -> vector<16x32xf32>
    %503 = vector.extract_strided_slice %359 {offsets = [4, 0], sizes = [1, 32], strides = [1, 1]} : vector<16x32xf32> to vector<1x32xf32>
    %504 = vector.broadcast %503 : vector<1x32xf32> to vector<16x32xf32>
    %505 = arith.addf %502, %504 : vector<16x32xf32>
    %506 = vector.extract_strided_slice %357 {offsets = [5, 0, 0], sizes = [1, 32, 32], strides = [1, 1, 1]} : vector<8x32x32xbf16> to vector<1x32x32xbf16>
    %507 = vector.shape_cast %506 : vector<1x32x32xbf16> to vector<32x32xbf16>
    %508 = arith.truncf %4 : vector<32x32xf32> to vector<32x32xbf16>
    %cst_113 = arith.constant dense<0.000000e+00> : vector<32x32xf32>
    %509 = tpu.matmul %508, %507, %cst_113 {dimension_numbers = #tpu.dot_dimension_numbers<[1], [0], [0], [1], [0, 0, 1, 1], [], []>} : vector<32x32xbf16>, vector<32x32xbf16>, vector<32x32xf32> -> vector<32x32xf32>
    %510 = vector.extract_strided_slice %359 {offsets = [5, 0], sizes = [1, 32], strides = [1, 1]} : vector<16x32xf32> to vector<1x32xf32>
    %511 = vector.broadcast %510 : vector<1x32xf32> to vector<32x32xf32>
    %512 = arith.addf %509, %511 : vector<32x32xf32>
    %513 = vector.extract_strided_slice %357 {offsets = [6, 0, 0], sizes = [1, 32, 32], strides = [1, 1, 1]} : vector<8x32x32xbf16> to vector<1x32x32xbf16>
    %514 = vector.shape_cast %513 : vector<1x32x32xbf16> to vector<32x32xbf16>
    %515 = arith.truncf %2 : vector<32x32xf32> to vector<32x32xbf16>
    %cst_114 = arith.constant dense<0.000000e+00> : vector<32x32xf32>
    %516 = tpu.matmul %515, %514, %cst_114 {dimension_numbers = #tpu.dot_dimension_numbers<[1], [0], [0], [1], [0, 0, 1, 1], [], []>} : vector<32x32xbf16>, vector<32x32xbf16>, vector<32x32xf32> -> vector<32x32xf32>
    %517 = vector.extract_strided_slice %359 {offsets = [6, 0], sizes = [1, 32], strides = [1, 1]} : vector<16x32xf32> to vector<1x32xf32>
    %518 = vector.broadcast %517 : vector<1x32xf32> to vector<32x32xf32>
    %519 = arith.addf %516, %518 : vector<32x32xf32>
    %520 = vector.extract_strided_slice %357 {offsets = [7, 0, 0], sizes = [1, 32, 32], strides = [1, 1, 1]} : vector<8x32x32xbf16> to vector<1x32x32xbf16>
    %521 = vector.shape_cast %520 : vector<1x32x32xbf16> to vector<32x32xbf16>
    %522 = vector.extract_strided_slice %359 {offsets = [7, 0], sizes = [1, 32], strides = [1, 1]} : vector<16x32xf32> to vector<1x32xf32>
    %523 = vector.shape_cast %505 : vector<16x32xf32> to vector<2x8x32xf32>
    %524 = arith.truncf %523 : vector<2x8x32xf32> to vector<2x8x32xbf16>
    %525 = vector.shape_cast %512 : vector<32x32xf32> to vector<2x16x32xf32>
    %526 = vector.shape_cast %519 : vector<32x32xf32> to vector<2x16x32xf32>
    %527 = vector.broadcast %12 : vector<1x1x32xf32> to vector<2x16x32xf32>
    %528 = arith.mulf %525, %527 : vector<2x16x32xf32>
    %529 = arith.truncf %528 : vector<2x16x32xf32> to vector<2x16x32xbf16>
    "tpu.trace_start"() <{level = 10 : i32, message = "bqd,bkd->bqk"}> : () -> ()
    %cst_115 = arith.constant dense<0.000000e+00> : vector<2x8x16xf32>
    %530 = tpu.matmul %524, %529, %cst_115 {dimension_numbers = #tpu.dot_dimension_numbers<[2], [2], [1], [1], [0, 0, 0, 1, 1, 1], [0], [0]>} : vector<2x8x32xbf16>, vector<2x16x32xbf16>, vector<2x8x16xf32> -> vector<2x8x16xf32>
    "tpu.trace_stop"() : () -> ()
    %cst_116 = arith.constant dense<0xFF800000> : vector<2x8xf32>
    %531 = vector.multi_reduction <maximumf>, %530, %cst_116 [2] : vector<2x8x16xf32> to vector<2x8xf32>
    %532 = vector.shape_cast %531 : vector<2x8xf32> to vector<2x8x1xf32>
    %533 = vector.broadcast %532 : vector<2x8x1xf32> to vector<2x8x16xf32>
    %534 = arith.subf %530, %533 : vector<2x8x16xf32>
    %535 = math.exp %534 : vector<2x8x16xf32>
    %cst_117 = arith.constant dense<0.000000e+00> : vector<2x8xf32>
    %536 = vector.multi_reduction <add>, %535, %cst_117 [2] : vector<2x8x16xf32> to vector<2x8xf32>
    %537 = vector.shape_cast %536 : vector<2x8xf32> to vector<2x8x1xf32>
    %538 = vector.broadcast %537 : vector<2x8x1xf32> to vector<2x8x16xf32>
    %539 = arith.divf %535, %538 : vector<2x8x16xf32>
    %540 = arith.truncf %539 : vector<2x8x16xf32> to vector<2x8x16xbf16>
    %541 = vector.broadcast %12 : vector<1x1x32xf32> to vector<2x16x32xf32>
    %542 = arith.mulf %526, %541 : vector<2x16x32xf32>
    %543 = arith.truncf %542 : vector<2x16x32xf32> to vector<2x16x32xbf16>
    "tpu.trace_start"() <{level = 10 : i32, message = "bqk,bkd->bqd"}> : () -> ()
    %cst_118 = arith.constant dense<0.000000e+00> : vector<2x8x32xf32>
    %544 = tpu.matmul %540, %543, %cst_118 {dimension_numbers = #tpu.dot_dimension_numbers<[2], [1], [1], [2], [0, 0, 0, 1, 1, 2], [0], [0]>} : vector<2x8x16xbf16>, vector<2x16x32xbf16>, vector<2x8x32xf32> -> vector<2x8x32xf32>
    "tpu.trace_stop"() : () -> ()
    %545 = vector.broadcast %19 : vector<1x1x32xf32> to vector<2x16x32xf32>
    %546 = arith.mulf %525, %545 : vector<2x16x32xf32>
    %547 = arith.truncf %546 : vector<2x16x32xf32> to vector<2x16x32xbf16>
    "tpu.trace_start"() <{level = 10 : i32, message = "bqd,bkd->bqk"}> : () -> ()
    %cst_119 = arith.constant dense<0.000000e+00> : vector<2x8x16xf32>
    %548 = tpu.matmul %524, %547, %cst_119 {dimension_numbers = #tpu.dot_dimension_numbers<[2], [2], [1], [1], [0, 0, 0, 1, 1, 1], [0], [0]>} : vector<2x8x32xbf16>, vector<2x16x32xbf16>, vector<2x8x16xf32> -> vector<2x8x16xf32>
    "tpu.trace_stop"() : () -> ()
    %cst_120 = arith.constant dense<0xFF800000> : vector<2x8xf32>
    %549 = vector.multi_reduction <maximumf>, %548, %cst_120 [2] : vector<2x8x16xf32> to vector<2x8xf32>
    %550 = vector.shape_cast %549 : vector<2x8xf32> to vector<2x8x1xf32>
    %551 = vector.broadcast %550 : vector<2x8x1xf32> to vector<2x8x16xf32>
    %552 = arith.subf %548, %551 : vector<2x8x16xf32>
    %553 = math.exp %552 : vector<2x8x16xf32>
    %cst_121 = arith.constant dense<0.000000e+00> : vector<2x8xf32>
    %554 = vector.multi_reduction <add>, %553, %cst_121 [2] : vector<2x8x16xf32> to vector<2x8xf32>
    %555 = vector.shape_cast %554 : vector<2x8xf32> to vector<2x8x1xf32>
    %556 = vector.broadcast %555 : vector<2x8x1xf32> to vector<2x8x16xf32>
    %557 = arith.divf %553, %556 : vector<2x8x16xf32>
    %558 = arith.addf %539, %557 : vector<2x8x16xf32>
    %559 = arith.truncf %557 : vector<2x8x16xf32> to vector<2x8x16xbf16>
    %560 = vector.broadcast %19 : vector<1x1x32xf32> to vector<2x16x32xf32>
    %561 = arith.mulf %526, %560 : vector<2x16x32xf32>
    %562 = arith.truncf %561 : vector<2x16x32xf32> to vector<2x16x32xbf16>
    "tpu.trace_start"() <{level = 10 : i32, message = "bqk,bkd->bqd"}> : () -> ()
    %cst_122 = arith.constant dense<0.000000e+00> : vector<2x8x32xf32>
    %563 = tpu.matmul %559, %562, %cst_122 {dimension_numbers = #tpu.dot_dimension_numbers<[2], [1], [1], [2], [0, 0, 0, 1, 1, 2], [0], [0]>} : vector<2x8x16xbf16>, vector<2x16x32xbf16>, vector<2x8x32xf32> -> vector<2x8x32xf32>
    "tpu.trace_stop"() : () -> ()
    %564 = arith.addf %544, %563 : vector<2x8x32xf32>
    %565 = vector.broadcast %26 : vector<1x1x32xf32> to vector<2x16x32xf32>
    %566 = arith.mulf %525, %565 : vector<2x16x32xf32>
    %567 = arith.truncf %566 : vector<2x16x32xf32> to vector<2x16x32xbf16>
    "tpu.trace_start"() <{level = 10 : i32, message = "bqd,bkd->bqk"}> : () -> ()
    %cst_123 = arith.constant dense<0.000000e+00> : vector<2x8x16xf32>
    %568 = tpu.matmul %524, %567, %cst_123 {dimension_numbers = #tpu.dot_dimension_numbers<[2], [2], [1], [1], [0, 0, 0, 1, 1, 1], [0], [0]>} : vector<2x8x32xbf16>, vector<2x16x32xbf16>, vector<2x8x16xf32> -> vector<2x8x16xf32>
    "tpu.trace_stop"() : () -> ()
    %cst_124 = arith.constant dense<0xFF800000> : vector<2x8xf32>
    %569 = vector.multi_reduction <maximumf>, %568, %cst_124 [2] : vector<2x8x16xf32> to vector<2x8xf32>
    %570 = vector.shape_cast %569 : vector<2x8xf32> to vector<2x8x1xf32>
    %571 = vector.broadcast %570 : vector<2x8x1xf32> to vector<2x8x16xf32>
    %572 = arith.subf %568, %571 : vector<2x8x16xf32>
    %573 = math.exp %572 : vector<2x8x16xf32>
    %cst_125 = arith.constant dense<0.000000e+00> : vector<2x8xf32>
    %574 = vector.multi_reduction <add>, %573, %cst_125 [2] : vector<2x8x16xf32> to vector<2x8xf32>
    %575 = vector.shape_cast %574 : vector<2x8xf32> to vector<2x8x1xf32>
    %576 = vector.broadcast %575 : vector<2x8x1xf32> to vector<2x8x16xf32>
    %577 = arith.divf %573, %576 : vector<2x8x16xf32>
    %578 = arith.addf %558, %577 : vector<2x8x16xf32>
    %579 = arith.truncf %577 : vector<2x8x16xf32> to vector<2x8x16xbf16>
    %580 = vector.broadcast %26 : vector<1x1x32xf32> to vector<2x16x32xf32>
    %581 = arith.mulf %526, %580 : vector<2x16x32xf32>
    %582 = arith.truncf %581 : vector<2x16x32xf32> to vector<2x16x32xbf16>
    "tpu.trace_start"() <{level = 10 : i32, message = "bqk,bkd->bqd"}> : () -> ()
    %cst_126 = arith.constant dense<0.000000e+00> : vector<2x8x32xf32>
    %583 = tpu.matmul %579, %582, %cst_126 {dimension_numbers = #tpu.dot_dimension_numbers<[2], [1], [1], [2], [0, 0, 0, 1, 1, 2], [0], [0]>} : vector<2x8x16xbf16>, vector<2x16x32xbf16>, vector<2x8x32xf32> -> vector<2x8x32xf32>
    "tpu.trace_stop"() : () -> ()
    %584 = arith.addf %564, %583 : vector<2x8x32xf32>
    %585 = vector.broadcast %33 : vector<1x1x32xf32> to vector<2x16x32xf32>
    %586 = arith.mulf %525, %585 : vector<2x16x32xf32>
    %587 = arith.truncf %586 : vector<2x16x32xf32> to vector<2x16x32xbf16>
    "tpu.trace_start"() <{level = 10 : i32, message = "bqd,bkd->bqk"}> : () -> ()
    %cst_127 = arith.constant dense<0.000000e+00> : vector<2x8x16xf32>
    %588 = tpu.matmul %524, %587, %cst_127 {dimension_numbers = #tpu.dot_dimension_numbers<[2], [2], [1], [1], [0, 0, 0, 1, 1, 1], [0], [0]>} : vector<2x8x32xbf16>, vector<2x16x32xbf16>, vector<2x8x16xf32> -> vector<2x8x16xf32>
    "tpu.trace_stop"() : () -> ()
    %cst_128 = arith.constant dense<0xFF800000> : vector<2x8xf32>
    %589 = vector.multi_reduction <maximumf>, %588, %cst_128 [2] : vector<2x8x16xf32> to vector<2x8xf32>
    %590 = vector.shape_cast %589 : vector<2x8xf32> to vector<2x8x1xf32>
    %591 = vector.broadcast %590 : vector<2x8x1xf32> to vector<2x8x16xf32>
    %592 = arith.subf %588, %591 : vector<2x8x16xf32>
    %593 = math.exp %592 : vector<2x8x16xf32>
    %cst_129 = arith.constant dense<0.000000e+00> : vector<2x8xf32>
    %594 = vector.multi_reduction <add>, %593, %cst_129 [2] : vector<2x8x16xf32> to vector<2x8xf32>
    %595 = vector.shape_cast %594 : vector<2x8xf32> to vector<2x8x1xf32>
    %596 = vector.broadcast %595 : vector<2x8x1xf32> to vector<2x8x16xf32>
    %597 = arith.divf %593, %596 : vector<2x8x16xf32>
    %598 = arith.addf %578, %597 : vector<2x8x16xf32>
    %599 = arith.truncf %597 : vector<2x8x16xf32> to vector<2x8x16xbf16>
    %600 = vector.broadcast %33 : vector<1x1x32xf32> to vector<2x16x32xf32>
    %601 = arith.mulf %526, %600 : vector<2x16x32xf32>
    %602 = arith.truncf %601 : vector<2x16x32xf32> to vector<2x16x32xbf16>
    "tpu.trace_start"() <{level = 10 : i32, message = "bqk,bkd->bqd"}> : () -> ()
    %cst_130 = arith.constant dense<0.000000e+00> : vector<2x8x32xf32>
    %603 = tpu.matmul %599, %602, %cst_130 {dimension_numbers = #tpu.dot_dimension_numbers<[2], [1], [1], [2], [0, 0, 0, 1, 1, 2], [0], [0]>} : vector<2x8x16xbf16>, vector<2x16x32xbf16>, vector<2x8x32xf32> -> vector<2x8x32xf32>
    "tpu.trace_stop"() : () -> ()
    %604 = arith.addf %584, %603 : vector<2x8x32xf32>
    %605 = vector.shape_cast %604 : vector<2x8x32xf32> to vector<16x32xf32>
    %606 = arith.truncf %605 : vector<16x32xf32> to vector<16x32xbf16>
    %cst_131 = arith.constant dense<0.000000e+00> : vector<16x32xf32>
    %607 = tpu.matmul %606, %521, %cst_131 {dimension_numbers = #tpu.dot_dimension_numbers<[1], [0], [0], [1], [0, 0, 1, 1], [], []>} : vector<16x32xbf16>, vector<32x32xbf16>, vector<16x32xf32> -> vector<16x32xf32>
    %608 = vector.broadcast %522 : vector<1x32xf32> to vector<16x32xf32>
    %609 = arith.addf %607, %608 : vector<16x32xf32>
    %cst_132 = arith.constant 2.500000e-01 : f32
    %610 = vector.broadcast %cst_132 : f32 to vector<2x8x16xf32>
    %611 = arith.mulf %598, %610 : vector<2x8x16xf32>
    %612 = arith.addf %497, %609 : vector<16x32xf32>
    %613 = vector.extract_strided_slice %359 {offsets = [11, 0], sizes = [1, 32], strides = [1, 1]} : vector<16x32xf32> to vector<1x32xf32>
    %614 = vector.extract_strided_slice %359 {offsets = [12, 0], sizes = [1, 32], strides = [1, 1]} : vector<16x32xf32> to vector<1x32xf32>
    %cst_133 = arith.constant dense<0.000000e+00> : vector<16xf32>
    %615 = vector.multi_reduction <add>, %612, %cst_133 [1] : vector<16x32xf32> to vector<16xf32>
    %616 = vector.shape_cast %615 : vector<16xf32> to vector<16x1xf32>
    %cst_134 = arith.constant 3.200000e+01 : f32
    %617 = vector.broadcast %cst_134 : f32 to vector<16x1xf32>
    %618 = arith.divf %616, %617 : vector<16x1xf32>
    %619 = vector.broadcast %618 : vector<16x1xf32> to vector<16x32xf32>
    %620 = arith.subf %612, %619 : vector<16x32xf32>
    %621 = arith.mulf %620, %620 : vector<16x32xf32>
    %cst_135 = arith.constant dense<0.000000e+00> : vector<16xf32>
    %622 = vector.multi_reduction <add>, %621, %cst_135 [1] : vector<16x32xf32> to vector<16xf32>
    %623 = vector.shape_cast %622 : vector<16xf32> to vector<16x1xf32>
    %cst_136 = arith.constant 3.200000e+01 : f32
    %624 = vector.broadcast %cst_136 : f32 to vector<16x1xf32>
    %625 = arith.divf %623, %624 : vector<16x1xf32>
    %626 = vector.broadcast %618 : vector<16x1xf32> to vector<16x32xf32>
    %627 = arith.subf %612, %626 : vector<16x32xf32>
    %cst_137 = arith.constant 9.99999974E-6 : f32
    %628 = vector.broadcast %cst_137 : f32 to vector<16x1xf32>
    %629 = arith.addf %625, %628 : vector<16x1xf32>
    %630 = math.rsqrt %629 : vector<16x1xf32>
    %631 = vector.broadcast %630 : vector<16x1xf32> to vector<16x32xf32>
    %632 = arith.mulf %627, %631 : vector<16x32xf32>
    %633 = vector.broadcast %613 : vector<1x32xf32> to vector<16x32xf32>
    %634 = arith.mulf %632, %633 : vector<16x32xf32>
    %635 = vector.broadcast %614 : vector<1x32xf32> to vector<16x32xf32>
    %636 = arith.addf %634, %635 : vector<16x32xf32>
    %c1_138 = arith.constant 1 : index
    %c0_139 = arith.constant 0 : index
    %c0_140 = arith.constant 0 : index
    %637 = vector.load %arg3[%c1_138, %c0_139, %c0_140] : memref<2x32x64xbf16, #tpu.memory_space<vmem>>, vector<1x32x64xbf16>
    %638 = vector.shape_cast %637 : vector<1x32x64xbf16> to vector<32x64xbf16>
    %639 = arith.truncf %636 : vector<16x32xf32> to vector<16x32xbf16>
    %cst_141 = arith.constant dense<0.000000e+00> : vector<16x64xf32>
    %640 = tpu.matmul %639, %638, %cst_141 {dimension_numbers = #tpu.dot_dimension_numbers<[1], [0], [0], [1], [0, 0, 1, 1], [], []>} : vector<16x32xbf16>, vector<32x64xbf16>, vector<16x64xf32> -> vector<16x64xf32>
    %c1_142 = arith.constant 1 : index
    %c0_143 = arith.constant 0 : index
    %c0_144 = arith.constant 0 : index
    %641 = vector.load %arg6[%c1_142, %c0_143, %c0_144] : memref<2x1x64xf32, #tpu.memory_space<vmem>>, vector<1x1x64xf32>
    %642 = vector.shape_cast %641 : vector<1x1x64xf32> to vector<1x64xf32>
    %643 = vector.broadcast %642 : vector<1x64xf32> to vector<16x64xf32>
    %644 = arith.addf %640, %643 : vector<16x64xf32>
    %cst_145 = arith.constant 0.000000e+00 : f32
    %645 = vector.broadcast %cst_145 : f32 to vector<16x64xf32>
    %646 = arith.maximumf %644, %645 : vector<16x64xf32>
    %c1_146 = arith.constant 1 : index
    %c0_147 = arith.constant 0 : index
    %c0_148 = arith.constant 0 : index
    %647 = vector.load %arg4[%c1_146, %c0_147, %c0_148] : memref<2x64x32xbf16, #tpu.memory_space<vmem>>, vector<1x64x32xbf16>
    %648 = vector.shape_cast %647 : vector<1x64x32xbf16> to vector<64x32xbf16>
    %649 = arith.truncf %646 : vector<16x64xf32> to vector<16x64xbf16>
    %cst_149 = arith.constant dense<0.000000e+00> : vector<16x32xf32>
    %650 = tpu.matmul %649, %648, %cst_149 {dimension_numbers = #tpu.dot_dimension_numbers<[1], [0], [0], [1], [0, 0, 1, 1], [], []>} : vector<16x64xbf16>, vector<64x32xbf16>, vector<16x32xf32> -> vector<16x32xf32>
    %651 = vector.extract_strided_slice %359 {offsets = [8, 0], sizes = [1, 32], strides = [1, 1]} : vector<16x32xf32> to vector<1x32xf32>
    %652 = vector.broadcast %651 : vector<1x32xf32> to vector<16x32xf32>
    %653 = arith.addf %650, %652 : vector<16x32xf32>
    %654 = arith.addf %636, %653 : vector<16x32xf32>
    %655 = vector.extract_strided_slice %359 {offsets = [13, 0], sizes = [1, 32], strides = [1, 1]} : vector<16x32xf32> to vector<1x32xf32>
    %656 = vector.extract_strided_slice %359 {offsets = [14, 0], sizes = [1, 32], strides = [1, 1]} : vector<16x32xf32> to vector<1x32xf32>
    %cst_150 = arith.constant dense<0.000000e+00> : vector<16xf32>
    %657 = vector.multi_reduction <add>, %654, %cst_150 [1] : vector<16x32xf32> to vector<16xf32>
    %658 = vector.shape_cast %657 : vector<16xf32> to vector<16x1xf32>
    %cst_151 = arith.constant 3.200000e+01 : f32
    %659 = vector.broadcast %cst_151 : f32 to vector<16x1xf32>
    %660 = arith.divf %658, %659 : vector<16x1xf32>
    %661 = vector.broadcast %660 : vector<16x1xf32> to vector<16x32xf32>
    %662 = arith.subf %654, %661 : vector<16x32xf32>
    %663 = arith.mulf %662, %662 : vector<16x32xf32>
    %cst_152 = arith.constant dense<0.000000e+00> : vector<16xf32>
    %664 = vector.multi_reduction <add>, %663, %cst_152 [1] : vector<16x32xf32> to vector<16xf32>
    %665 = vector.shape_cast %664 : vector<16xf32> to vector<16x1xf32>
    %cst_153 = arith.constant 3.200000e+01 : f32
    %666 = vector.broadcast %cst_153 : f32 to vector<16x1xf32>
    %667 = arith.divf %665, %666 : vector<16x1xf32>
    %668 = vector.broadcast %660 : vector<16x1xf32> to vector<16x32xf32>
    %669 = arith.subf %654, %668 : vector<16x32xf32>
    %cst_154 = arith.constant 9.99999974E-6 : f32
    %670 = vector.broadcast %cst_154 : f32 to vector<16x1xf32>
    %671 = arith.addf %667, %670 : vector<16x1xf32>
    %672 = math.rsqrt %671 : vector<16x1xf32>
    %673 = vector.broadcast %672 : vector<16x1xf32> to vector<16x32xf32>
    %674 = arith.mulf %669, %673 : vector<16x32xf32>
    %675 = vector.broadcast %655 : vector<1x32xf32> to vector<16x32xf32>
    %676 = arith.mulf %674, %675 : vector<16x32xf32>
    %677 = vector.broadcast %656 : vector<1x32xf32> to vector<16x32xf32>
    %678 = arith.addf %676, %677 : vector<16x32xf32>
    %c0_155 = arith.constant 0 : index
    %c0_156 = arith.constant 0 : index
    %679 = vector.load %arg7[%c0_155, %c0_156] : memref<2x32xf32, #tpu.memory_space<vmem>>, vector<1x32xf32>
    %c1_157 = arith.constant 1 : index
    %c0_158 = arith.constant 0 : index
    %680 = vector.load %arg7[%c1_157, %c0_158] : memref<2x32xf32, #tpu.memory_space<vmem>>, vector<1x32xf32>
    %cst_159 = arith.constant dense<0.000000e+00> : vector<16xf32>
    %681 = vector.multi_reduction <add>, %678, %cst_159 [1] : vector<16x32xf32> to vector<16xf32>
    %682 = vector.shape_cast %681 : vector<16xf32> to vector<16x1xf32>
    %cst_160 = arith.constant 3.200000e+01 : f32
    %683 = vector.broadcast %cst_160 : f32 to vector<16x1xf32>
    %684 = arith.divf %682, %683 : vector<16x1xf32>
    %685 = vector.broadcast %684 : vector<16x1xf32> to vector<16x32xf32>
    %686 = arith.subf %678, %685 : vector<16x32xf32>
    %687 = arith.mulf %686, %686 : vector<16x32xf32>
    %cst_161 = arith.constant dense<0.000000e+00> : vector<16xf32>
    %688 = vector.multi_reduction <add>, %687, %cst_161 [1] : vector<16x32xf32> to vector<16xf32>
    %689 = vector.shape_cast %688 : vector<16xf32> to vector<16x1xf32>
    %cst_162 = arith.constant 3.200000e+01 : f32
    %690 = vector.broadcast %cst_162 : f32 to vector<16x1xf32>
    %691 = arith.divf %689, %690 : vector<16x1xf32>
    %692 = vector.broadcast %684 : vector<16x1xf32> to vector<16x32xf32>
    %693 = arith.subf %678, %692 : vector<16x32xf32>
    %cst_163 = arith.constant 9.99999974E-6 : f32
    %694 = vector.broadcast %cst_163 : f32 to vector<16x1xf32>
    %695 = arith.addf %691, %694 : vector<16x1xf32>
    %696 = math.rsqrt %695 : vector<16x1xf32>
    %697 = vector.broadcast %696 : vector<16x1xf32> to vector<16x32xf32>
    %698 = arith.mulf %693, %697 : vector<16x32xf32>
    %699 = vector.broadcast %679 : vector<1x32xf32> to vector<16x32xf32>
    %700 = arith.mulf %698, %699 : vector<16x32xf32>
    %701 = vector.broadcast %680 : vector<1x32xf32> to vector<16x32xf32>
    %702 = arith.addf %700, %701 : vector<16x32xf32>
    %c0_164 = arith.constant 0 : index
    %c0_165 = arith.constant 0 : index
    %703 = vector.load %arg8[%c0_164, %c0_165] : memref<16x32xf32, #tpu.memory_space<vmem>>, vector<16x32xf32>
    tpu.vector_store %arg8[%c0_164, %c0_165], %702 {strides = array<i32>} : memref<16x32xf32, #tpu.memory_space<vmem>>, vector<16x32xf32>,
    %c0_166 = arith.constant 0 : index
    %c0_167 = arith.constant 0 : index
    %c0_168 = arith.constant 0 : index
    %704 = vector.load %arg9[%c0_166, %c0_167, %c0_168] : memref<2x8x16xf32, #tpu.memory_space<vmem>>, vector<2x8x16xf32>
    tpu.vector_store %arg9[%c0_166, %c0_167, %c0_168], %611 {strides = array<i32>} : memref<2x8x16xf32, #tpu.memory_space<vmem>>, vector<2x8x16xf32>,
    return
  }
}

</mosaic_0001>

<llo_original>
// kernel: tpu_custom_call.1
$region0: #{tpu_custom_call.1}
  #allocation0 [shape = 'u32[]', space=smem, size = 0x4, offset = 0x4, fixed_abs, tag = 'smem constant byte address 0x4 - core index']
  #allocation1 [shape = 'u32[72,128]{1,0:T(1,128)}', space=vmem, size = 0x9000, scoped, tag = 'internal scratch']
  %s0 = inlined_call_operand.vmem [shape: f32[32,32], index: 0, kind: input, shape index: {}]
  %s1 = inlined_call_operand.vmem [shape: f32[64,32], index: 1, kind: input, shape index: {}]
  %s2 = inlined_call_operand.hbm [shape: bf16[2,8,32,32], index: 2, kind: input, shape index: {}]
  %s3 = inlined_call_operand.vmem [shape: bf16[2,32,64], index: 3, kind: input, shape index: {}]
  %s4 = inlined_call_operand.vmem [shape: bf16[2,64,32], index: 4, kind: input, shape index: {}]
  %s5 = inlined_call_operand.vmem [shape: f32[2,16,32], index: 5, kind: input, shape index: {}]
  %s6 = inlined_call_operand.vmem [shape: f32[2,1,64], index: 6, kind: input, shape index: {}]
  %s7 = inlined_call_operand.vmem [shape: f32[2,32], index: 7, kind: input, shape index: {}]
  %s8 = inlined_call_operand.hbm [shape: f32[16,32], index: 8, kind: output, shape index: {0}]
  %s9 = inlined_call_operand.hbm [shape: f32[2,8,16], index: 9, kind: output, shape index: {1}]
  %10 = xla_tuple %s8, %s9
  %s11 = sld [smem:[#allocation0]]
  $region54: #{tpu_custom_call.1} parent=0
    _
  %s13 = ssub.s32 1, %s11
  %s14 = scalar_select 0, %s13, %s11
  $region1: #{tpu_custom_call.1} parent=0
    #allocation2 [shape = 'u8[131072]{0}', space=vmem, size = 0x20000, scoped, tag = 'input window, operand 2, single buffered']
    #allocation3 [shape = 's32[1]{0}', space=sflag, size = 0x4, scoped, tag = 'scoped memory for tpu_custom_call.1']
    #allocation4 [shape = 's32[1]{0}', space=sflag, size = 0x4, scoped, tag = 'scoped memory for tpu_custom_call.1']
    #allocation5 [shape = 'u8[8192]{0}', space=vmem, size = 0x2000, scoped, tag = 'output window, operand 0, single buffered']
    #allocation6 [shape = 'u8[8192]{0}', space=vmem, size = 0x2000, scoped, tag = 'output window, operand 1, single buffered']
    #allocation7 [shape = 's32[1]{0}', space=sflag, size = 0x4, scoped, tag = 'scoped memory for tpu_custom_call.1']
    %15 = vsyncpa [#allocation3], 0
    %16 = vsyncpa [#allocation4], 0
    %17 = vsyncpa [#allocation7], 0
    // Predicated region
    $region2: #{tpu_custom_call.1} parent=1 // pred_check
      _
    $region3: #{tpu_custom_call.1} parent=1 // pred_check_branch
      %19 = sbr.rel (0) target = $region5
    $region4: #{tpu_custom_call.1} parent=1 // pred_region
      _
    $region5: #{tpu_custom_call.1} parent=1 // pred_fallthru
      _
    // Predicated region
    $region6: #{tpu_custom_call.1} parent=1 // pred_check
      _
    $region7: #{tpu_custom_call.1} parent=1 // pred_check_branch
      %21 = sbr.rel (0) target = $region9
    $region8: #{tpu_custom_call.1} parent=1 // pred_region
      _
    $region9: #{tpu_custom_call.1} parent=1 // pred_fallthru
      _
    // Predicated region
    $region10: #{tpu_custom_call.1} parent=1 // pred_check
      _
    $region11: #{tpu_custom_call.1} parent=1 // pred_check_branch
      %23 = sbr.rel (0) target = $region13
    $region12: #{tpu_custom_call.1} parent=1 // pred_region
      %25 = vsyncadd [#allocation3], 0
      %s26 = sshll.u32 %s2, 4
      %s27 = int_to_ptr.hbm [resolvable:$true] %s26
      %s28 = sshll.u32 [#allocation2], 4
      %s29 = int_to_ptr.vmem [resolvable:$true] %s28
      %34 = dma.hbm_to_vmem [thread:$0]  %s27, 4096, %s29, [#allocation3], 64, 64, 4
    $region13: #{tpu_custom_call.1} parent=1 // pred_fallthru
      _
    // Predicated region
    $region14: #{tpu_custom_call.1} parent=1 // pred_check
      _
    $region15: #{tpu_custom_call.1} parent=1 // pred_check_branch
      %36 = sbr.rel (0) target = $region17
    $region16: #{tpu_custom_call.1} parent=1 // pred_region
      _
    $region17: #{tpu_custom_call.1} parent=1 // pred_fallthru
      _
    // Predicated region
    $region18: #{tpu_custom_call.1} parent=1 // pred_check
      _
    $region19: #{tpu_custom_call.1} parent=1 // pred_check_branch
      %38 = sbr.rel (0) target = $region21
    $region20: #{tpu_custom_call.1} parent=1 // pred_region
      _
    $region21: #{tpu_custom_call.1} parent=1 // pred_fallthru
      _
    // Predicated region
    $region22: #{tpu_custom_call.1} parent=1 // pred_check
      _
    $region23: #{tpu_custom_call.1} parent=1 // pred_check_branch
      %40 = sbr.rel (0) target = $region25
    $region24: #{tpu_custom_call.1} parent=1 // pred_region
      _
    $region25: #{tpu_custom_call.1} parent=1 // pred_fallthru
      _
    // Predicated region
    $region26: #{tpu_custom_call.1} parent=1 // pred_check
      _
    $region27: #{tpu_custom_call.1} parent=1 // pred_check_branch
      %42 = sbr.rel (0) target = $region29
    $region28: #{tpu_custom_call.1} parent=1 // pred_region
      _
    $region29: #{tpu_custom_call.1} parent=1 // pred_fallthru
      _
    // Predicated region
    $region30: #{tpu_custom_call.1} parent=1 // pred_check
      _
    $region31: #{tpu_custom_call.1} parent=1 // pred_check_branch
      %44 = sbr.rel (0) target = $region33
    $region32: #{tpu_custom_call.1} parent=1 // pred_region
      _
    $region33: #{tpu_custom_call.1} parent=1 // pred_fallthru
      _
    // Predicated region
    $region34: #{tpu_custom_call.1} parent=1 // pred_check
      _
    $region35: #{tpu_custom_call.1} parent=1 // pred_check_branch
      %46 = sbr.rel (0) target = $region37
    $region36: #{tpu_custom_call.1} parent=1 // pred_region
      %48 = dma.done [#allocation3], 4096
    $region37: #{tpu_custom_call.1} parent=1 // pred_fallthru
      _
    %v50 = vld [vmem:[%s0] sm:$0xff]
    %v51 = vld [vmem:[%s0 + $0x8] sm:$0xff]
    %v52 = vld [vmem:[%s0 + $0x10] sm:$0xff]
    %v53 = vld [vmem:[%s0 + $0x18] sm:$0xff]
    %v54 = vld [vmem:[%s1] sm:$0xff]
    %v55 = vld [vmem:[%s1 + $0x8] sm:$0xff]
    %v56 = vld [vmem:[%s1 + $0x10] sm:$0xff]
    %v57 = vld [vmem:[%s1 + $0x18] sm:$0xff]
    %v58 = vld [vmem:[%s1 + $0x20] sm:$0xff]
    %v59 = vld [vmem:[%s1 + $0x28] sm:$0xff]
    %v60 = vld [vmem:[%s1 + $0x30] sm:$0xff]
    %v61 = vld [vmem:[%s1 + $0x38] sm:$0xff]
    %v62 = vadd.f32 %v54, %v58
    %v63 = vadd.f32 %v55, %v59
    %v64 = vadd.f32 %v56, %v60
    %v65 = vadd.f32 %v57, %v61
    %v66 = vlaneseq
    %v67 = vand.u32 %v66, 127
    %vm68 = vcmp.ge.s32.totalorder %v67, 0
    %vm69 = vcmp.lt.s32.totalorder %v67, 8
    %vm70 = vmand %vm68, %vm69
    %v71 = vsel %vm70, 1, 0
    %v72 = vcvt.s32.f32 %v71
    %vm73 = vcmp.ge.s32.totalorder %v67, 8
    %vm74 = vcmp.lt.s32.totalorder %v67, 16
    %vm75 = vmand %vm73, %vm74
    %v76 = vsel %vm75, 1, 0
    %v77 = vcvt.s32.f32 %v76
    %vm78 = vcmp.ge.s32.totalorder %v67, 16
    %vm79 = vcmp.lt.s32.totalorder %v67, 24
    %vm80 = vmand %vm78, %vm79
    %v81 = vsel %vm80, 1, 0
    %v82 = vcvt.s32.f32 %v81
    %vm83 = vcmp.ge.s32.totalorder %v67, 24
    %vm84 = vcmp.lt.s32.totalorder %v67, 32
    %vm85 = vmand %vm83, %vm84
    %v86 = vsel %vm85, 1, 0
    %v87 = vcvt.s32.f32 %v86
    %v88 = vld [vmem:[#allocation2] sm:$0xf]
    %v89 = vld [vmem:[#allocation2 + $0x4] sm:$0xf]
    %v90 = vld [vmem:[#allocation2 + $0x8] sm:$0xf]
    %v91 = vld [vmem:[#allocation2 + $0xc] sm:$0xf]
    %v92 = vld [vmem:[#allocation2 + $0x10] sm:$0xf]
    %v93 = vld [vmem:[#allocation2 + $0x14] sm:$0xf]
    %v94 = vld [vmem:[#allocation2 + $0x18] sm:$0xf]
    %v95 = vld [vmem:[#allocation2 + $0x1c] sm:$0xf]
    %v96 = vld [vmem:[#allocation2 + $0x20] sm:$0xf]
    %v97 = vld [vmem:[#allocation2 + $0x24] sm:$0xf]
    %v98 = vld [vmem:[#allocation2 + $0x28] sm:$0xf]
    %v99 = vld [vmem:[#allocation2 + $0x2c] sm:$0xf]
    %v100 = vld [vmem:[#allocation2 + $0x30] sm:$0xf]
    %v101 = vld [vmem:[#allocation2 + $0x34] sm:$0xf]
    %v102 = vld [vmem:[#allocation2 + $0x38] sm:$0xf]
    %v103 = vld [vmem:[#allocation2 + $0x3c] sm:$0xf]
    %v104 = vld [vmem:[#allocation2 + $0x40] sm:$0xf]
    %v105 = vld [vmem:[#allocation2 + $0x44] sm:$0xf]
    %v106 = vld [vmem:[#allocation2 + $0x48] sm:$0xf]
    %v107 = vld [vmem:[#allocation2 + $0x4c] sm:$0xf]
    %v108 = vld [vmem:[#allocation2 + $0x50] sm:$0xf]
    %v109 = vld [vmem:[#allocation2 + $0x54] sm:$0xf]
    %v110 = vld [vmem:[#allocation2 + $0x58] sm:$0xf]
    %v111 = vld [vmem:[#allocation2 + $0x5c] sm:$0xf]
    %v112 = vld [vmem:[#allocation2 + $0x60] sm:$0xf]
    %v113 = vld [vmem:[#allocation2 + $0x64] sm:$0xf]
    %v114 = vld [vmem:[#allocation2 + $0x68] sm:$0xf]
    %v115 = vld [vmem:[#allocation2 + $0x6c] sm:$0xf]
    %v116 = vld [vmem:[#allocation2 + $0x70] sm:$0xf]
    %v117 = vld [vmem:[#allocation2 + $0x74] sm:$0xf]
    %v118 = vld [vmem:[#allocation2 + $0x78] sm:$0xf]
    %v119 = vld [vmem:[#allocation2 + $0x7c] sm:$0xf]
    %v120 = vld [vmem:[%s5] sm:$0xff]
    %v121 = vld [vmem:[%s5 + $0x8] sm:$0xff]
    %v122 = vadd.f32 %v50, %v52
    %v123 = vadd.f32 %v51, %v53
    %v124 = vpack.c.bf16 %v123, %v122
    %v125 = vperm.slane %v120, 0
    %v130 = vunpack.c.l.b16 %v88
    %v131 = vunpack.c.l.b16 %v89
    %v132 = vunpack.c.l.b16 %v90
    %v133 = vunpack.c.l.b16 %v91
    %v134 = vpack.c.b16 %v131, %v130
    %v135 = vpack.c.b16 %v133, %v132
    %vm138 = vcmask 261120
    %v140 = vsel %vm138, %v124, 0
    %142 = vmatpush.bf16.msra.mxu0 0
    %143 = vmatpush.bf16.msra.mxu0 0
    %144 = vmatpush.bf16.msra.mxu0 0
    %145 = vmatpush.bf16.msra.mxu0 0
    %146 = vmatpush.bf16.msra.mxu0 0
    %147 = vmatpush.bf16.msra.mxu0 0
    %148 = vmatpush.bf16.msra.mxu0 %v135
    %149 = vmatpush.bf16.msra.mxu0 %v134
    %150 = vmatmul.bf16.gmra.mxu0 %v140
    %v151 = vpop.f32.mrf.mxu0
    %v152 = vadd.f32 %v125, %v151
    %v153 = vpop.f32.mrf.mxu0
    %v154 = vadd.f32 %v125, %v153
    %155 = vdwg.mxu0
    %v156 = vperm.slane %v120, 1
    %v161 = vunpack.c.l.b16 %v92
    %v162 = vunpack.c.l.b16 %v93
    %v163 = vunpack.c.l.b16 %v94
    %v164 = vunpack.c.l.b16 %v95
    %v165 = vpack.c.b16 %v162, %v161
    %v166 = vpack.c.b16 %v164, %v163
    %169 = vmatpush.bf16.msra.mxu0 0
    %170 = vmatpush.bf16.msra.mxu0 0
    %171 = vmatpush.bf16.msra.mxu0 0
    %172 = vmatpush.bf16.msra.mxu0 0
    %173 = vmatpush.bf16.msra.mxu0 0
    %174 = vmatpush.bf16.msra.mxu0 0
    %175 = vmatpush.bf16.msra.mxu0 %v166
    %176 = vmatpush.bf16.msra.mxu0 %v165
    %177 = vmatmul.bf16.gmra.mxu0 %v140
    %v178 = vpop.f32.mrf.mxu0
    %v179 = vadd.f32 %v156, %v178
    %v180 = vpop.f32.mrf.mxu0
    %v181 = vadd.f32 %v156, %v180
    %182 = vdwg.mxu0
    %v183 = vpack.c.bf16 %v51, %v50
    %v184 = vperm.slane %v120, 2
    %v189 = vunpack.c.l.b16 %v96
    %v190 = vunpack.c.l.b16 %v97
    %v191 = vunpack.c.l.b16 %v98
    %v192 = vunpack.c.l.b16 %v99
    %v193 = vpack.c.b16 %v190, %v189
    %v194 = vpack.c.b16 %v192, %v191
    %v198 = vsel %vm138, %v183, 0
    %200 = vmatpush.bf16.msra.mxu0 0
    %201 = vmatpush.bf16.msra.mxu0 0
    %202 = vmatpush.bf16.msra.mxu0 0
    %203 = vmatpush.bf16.msra.mxu0 0
    %204 = vmatpush.bf16.msra.mxu0 0
    %205 = vmatpush.bf16.msra.mxu0 0
    %206 = vmatpush.bf16.msra.mxu0 %v194
    %207 = vmatpush.bf16.msra.mxu0 %v193
    %208 = vmatmul.bf16.gmra.mxu0 %v198
    %v209 = vpop.f32.mrf.mxu0
    %v210 = vadd.f32 %v184, %v209
    %v211 = vpop.f32.mrf.mxu0
    %v212 = vadd.f32 %v184, %v211
    %213 = vdwg.mxu0
    %v214 = vpack.c.bf16 %v152, %v152
    %v215 = vpack.c.bf16 %v154, %v154
    %v216 = vmul.f32 %v179, %v72
    %v217 = vmul.f32 %v181, %v72
    %v218 = vpack.c.bf16 %v216, %v216
    %v219 = vpack.c.bf16 %v217, %v217
    %v221 = vsel %vm138, %v214, 0
    %v224 = vsel %vm138, %v218, 0
    %226 = vmatpush.bf16.xpose.msra.mxu0 0
    %227 = vmatpush.bf16.xpose.msra.mxu0 0
    %228 = vmatpush.bf16.xpose.msra.mxu0 0
    %229 = vmatpush.bf16.xpose.msra.mxu0 0
    %230 = vmatpush.bf16.xpose.msra.mxu0 0
    %231 = vmatpush.bf16.xpose.msra.mxu0 0
    %232 = vmatpush.bf16.xpose.msra.mxu0 0
    %233 = vmatpush.bf16.xpose.msra.mxu0 %v224
    %234 = vmatmul.bf16.gmra.mxu0 %v221
    %v235 = vpop.f32.mrf.mxu0
    %v236 = vadd.f32 0.0, %v235
    %v237 = vpop.f32.mrf.mxu0
    %238 = vdwg.mxu0
    %v240 = vsel %vm138, %v215, 0
    %v243 = vsel %vm138, %v219, 0
    %245 = vmatpush.bf16.xpose.msra.mxu0 0
    %246 = vmatpush.bf16.xpose.msra.mxu0 0
    %247 = vmatpush.bf16.xpose.msra.mxu0 0
    %248 = vmatpush.bf16.xpose.msra.mxu0 0
    %249 = vmatpush.bf16.xpose.msra.mxu0 0
    %250 = vmatpush.bf16.xpose.msra.mxu0 0
    %251 = vmatpush.bf16.xpose.msra.mxu0 0
    %252 = vmatpush.bf16.xpose.msra.mxu0 %v243
    %253 = vmatmul.bf16.gmra.mxu0 %v240
    %v254 = vpop.f32.mrf.mxu0
    %v255 = vadd.f32 0.0, %v254
    %v256 = vpop.f32.mrf.mxu0
    %257 = vdwg.mxu0
    %vm258 = vcmask 64512
    %v259 = vsel %vm258, %v236, -inf
    %260 = vmax.xlane.f32.xlu0 %v259
    %v261 = vpop.xlane.xlu0 %260
    %v262 = vsel %vm258, %v255, -inf
    %263 = vmax.xlane.f32.xlu0 %v262
    %v264 = vpop.xlane.xlu0 %263
    %v265 = vsub.f32 %v236, %v261
    %v266 = vsub.f32 %v255, %v264
    %v267 = vmul.f32 %v265, 1.442695
    %v268 = vpow.pop %v267
    %v269 = vmul.f32 %v266, 1.442695
    %v270 = vpow.pop %v269
    %v271 = vsel %vm258, %v268, 0.0
    %272 = vadd.xlane.f32.xlu0 %v271
    %v273 = vpop.xlane.xlu0 %272
    %v274 = vsel %vm258, %v270, 0.0
    %275 = vadd.xlane.f32.xlu0 %v274
    %v276 = vpop.xlane.xlu0 %275
    %v277 = vrcp.pop %v273
    %v278 = vrcp.pop %v276
    %v279 = vmul.f32 %v268, %v277
    %v280 = vmul.f32 %v270, %v278
    %v281 = vpack.c.bf16 %v279, %v279
    %v282 = vpack.c.bf16 %v280, %v280
    %v283 = vmul.f32 %v210, %v72
    %v284 = vmul.f32 %v212, %v72
    %v285 = vpack.c.bf16 %v283, %v283
    %v286 = vpack.c.bf16 %v284, %v284
    %v287 = vmul.f32 %v179, %v77
    %v288 = vmul.f32 %v181, %v77
    %v289 = vpack.c.bf16 %v287, %v287
    %v290 = vpack.c.bf16 %v288, %v288
    %v292 = vsel %vm138, %v289, 0
    %294 = vmatpush.bf16.xpose.msra.mxu0 0
    %295 = vmatpush.bf16.xpose.msra.mxu0 0
    %296 = vmatpush.bf16.xpose.msra.mxu0 0
    %297 = vmatpush.bf16.xpose.msra.mxu0 0
    %298 = vmatpush.bf16.xpose.msra.mxu0 0
    %299 = vmatpush.bf16.xpose.msra.mxu0 0
    %300 = vmatpush.bf16.xpose.msra.mxu0 0
    %301 = vmatpush.bf16.xpose.msra.mxu0 %v292
    %302 = vmatmul.bf16.gmra.mxu0 %v221
    %v303 = vpop.f32.mrf.mxu0
    %v304 = vadd.f32 0.0, %v303
    %v305 = vpop.f32.mrf.mxu0
    %306 = vdwg.mxu0
    %v308 = vsel %vm138, %v290, 0
    %310 = vmatpush.bf16.xpose.msra.mxu0 0
    %311 = vmatpush.bf16.xpose.msra.mxu0 0
    %312 = vmatpush.bf16.xpose.msra.mxu0 0
    %313 = vmatpush.bf16.xpose.msra.mxu0 0
    %314 = vmatpush.bf16.xpose.msra.mxu0 0
    %315 = vmatpush.bf16.xpose.msra.mxu0 0
    %316 = vmatpush.bf16.xpose.msra.mxu0 0
    %317 = vmatpush.bf16.xpose.msra.mxu0 %v308
    %318 = vmatmul.bf16.gmra.mxu0 %v240
    %v319 = vpop.f32.mrf.mxu0
    %v320 = vadd.f32 0.0, %v319
    %v321 = vpop.f32.mrf.mxu0
    %322 = vdwg.mxu0
    %v323 = vsel %vm258, %v304, -inf
    %324 = vmax.xlane.f32.xlu0 %v323
    %v325 = vpop.xlane.xlu0 %324
    %v326 = vsel %vm258, %v320, -inf
    %327 = vmax.xlane.f32.xlu0 %v326
    %v328 = vpop.xlane.xlu0 %327
    %v329 = vsub.f32 %v304, %v325
    %v330 = vsub.f32 %v320, %v328
    %v331 = vmul.f32 %v329, 1.442695
    %v332 = vpow.pop %v331
    %v333 = vmul.f32 %v330, 1.442695
    %v334 = vpow.pop %v333
    %v335 = vsel %vm258, %v332, 0.0
    %336 = vadd.xlane.f32.xlu0 %v335
    %v337 = vpop.xlane.xlu0 %336
    %v338 = vsel %vm258, %v334, 0.0
    %339 = vadd.xlane.f32.xlu0 %v338
    %v340 = vpop.xlane.xlu0 %339
    %v341 = vrcp.pop %v337
    %v342 = vrcp.pop %v340
    %v343 = vmul.f32 %v332, %v341
    %v344 = vmul.f32 %v334, %v342
    %v345 = vpack.c.bf16 %v343, %v343
    %v346 = vpack.c.bf16 %v344, %v344
    %v347 = vmul.f32 %v210, %v77
    %v348 = vmul.f32 %v212, %v77
    %v349 = vpack.c.bf16 %v347, %v347
    %v350 = vpack.c.bf16 %v348, %v348
    %v352 = vsel %vm258, %v345, 0
    %vm354 = vcmask 1043456
    %v356 = vsel %vm354, %v349, 0
    %358 = vmatpush.bf16.msra.mxu0 0
    %359 = vmatpush.bf16.msra.mxu0 0
    %360 = vmatpush.bf16.msra.mxu0 0
    %361 = vmatpush.bf16.msra.mxu0 0
    %362 = vmatpush.bf16.msra.mxu0 0
    %363 = vmatpush.bf16.msra.mxu0 0
    %364 = vmatpush.bf16.msra.mxu0 0
    %365 = vmatpush.bf16.msra.mxu0 %v356
    %366 = vmatmul.bf16.gmra.mxu0 %v352
    %v367 = vpop.f32.mrf.mxu0
    %v368 = vadd.f32 0.0, %v367
    %v369 = vpop.f32.mrf.mxu0
    %370 = vdwg.mxu0
    %v372 = vsel %vm258, %v346, 0
    %v375 = vsel %vm354, %v350, 0
    %377 = vmatpush.bf16.msra.mxu0 0
    %378 = vmatpush.bf16.msra.mxu0 0
    %379 = vmatpush.bf16.msra.mxu0 0
    %380 = vmatpush.bf16.msra.mxu0 0
    %381 = vmatpush.bf16.msra.mxu0 0
    %382 = vmatpush.bf16.msra.mxu0 0
    %383 = vmatpush.bf16.msra.mxu0 0
    %384 = vmatpush.bf16.msra.mxu0 %v375
    %385 = vmatmul.bf16.gmra.mxu0 %v372
    %v386 = vpop.f32.mrf.mxu0
    %v387 = vadd.f32 0.0, %v386
    %v388 = vpop.f32.mrf.mxu0
    %389 = vdwg.mxu0
    %v391 = vsel %vm258, %v281, 0
    %v394 = vsel %vm354, %v285, 0
    %396 = vmatpush.bf16.msra.mxu0 0
    %397 = vmatpush.bf16.msra.mxu0 0
    %398 = vmatpush.bf16.msra.mxu0 0
    %399 = vmatpush.bf16.msra.mxu0 0
    %400 = vmatpush.bf16.msra.mxu0 0
    %401 = vmatpush.bf16.msra.mxu0 0
    %402 = vmatpush.bf16.msra.mxu0 0
    %403 = vmatpush.bf16.msra.mxu0 %v394
    %404 = vmatmul.bf16.gmra.mxu0 %v391
    %v405 = vpop.f32.mrf.mxu0
    %v406 = vadd.f32 %v368, %v405
    %v407 = vpop.f32.mrf.mxu0
    %408 = vdwg.mxu0
    %v410 = vsel %vm258, %v282, 0
    %v413 = vsel %vm354, %v286, 0
    %415 = vmatpush.bf16.msra.mxu0 0
    %416 = vmatpush.bf16.msra.mxu0 0
    %417 = vmatpush.bf16.msra.mxu0 0
    %418 = vmatpush.bf16.msra.mxu0 0
    %419 = vmatpush.bf16.msra.mxu0 0
    %420 = vmatpush.bf16.msra.mxu0 0
    %421 = vmatpush.bf16.msra.mxu0 0
    %422 = vmatpush.bf16.msra.mxu0 %v413
    %423 = vmatmul.bf16.gmra.mxu0 %v410
    %v424 = vpop.f32.mrf.mxu0
    %v425 = vadd.f32 %v387, %v424
    %v426 = vpop.f32.mrf.mxu0
    %427 = vdwg.mxu0
    %v428 = vmul.f32 %v179, %v82
    %v429 = vmul.f32 %v181, %v82
    %v430 = vpack.c.bf16 %v428, %v428
    %v431 = vpack.c.bf16 %v429, %v429
    %v433 = vsel %vm138, %v430, 0
    %435 = vmatpush.bf16.xpose.msra.mxu0 0
    %436 = vmatpush.bf16.xpose.msra.mxu0 0
    %437 = vmatpush.bf16.xpose.msra.mxu0 0
    %438 = vmatpush.bf16.xpose.msra.mxu0 0
    %439 = vmatpush.bf16.xpose.msra.mxu0 0
    %440 = vmatpush.bf16.xpose.msra.mxu0 0
    %441 = vmatpush.bf16.xpose.msra.mxu0 0
    %442 = vmatpush.bf16.xpose.msra.mxu0 %v433
    %443 = vmatmul.bf16.gmra.mxu0 %v221
    %v444 = vpop.f32.mrf.mxu0
    %v445 = vadd.f32 0.0, %v444
    %v446 = vpop.f32.mrf.mxu0
    %447 = vdwg.mxu0
    %v449 = vsel %vm138, %v431, 0
    %451 = vmatpush.bf16.xpose.msra.mxu0 0
    %452 = vmatpush.bf16.xpose.msra.mxu0 0
    %453 = vmatpush.bf16.xpose.msra.mxu0 0
    %454 = vmatpush.bf16.xpose.msra.mxu0 0
    %455 = vmatpush.bf16.xpose.msra.mxu0 0
    %456 = vmatpush.bf16.xpose.msra.mxu0 0
    %457 = vmatpush.bf16.xpose.msra.mxu0 0
    %458 = vmatpush.bf16.xpose.msra.mxu0 %v449
    %459 = vmatmul.bf16.gmra.mxu0 %v240
    %v460 = vpop.f32.mrf.mxu0
    %v461 = vadd.f32 0.0, %v460
    %v462 = vpop.f32.mrf.mxu0
    %463 = vdwg.mxu0
    %v464 = vsel %vm258, %v445, -inf
    %465 = vmax.xlane.f32.xlu0 %v464
    %v466 = vpop.xlane.xlu0 %465
    %v467 = vsel %vm258, %v461, -inf
    %468 = vmax.xlane.f32.xlu0 %v467
    %v469 = vpop.xlane.xlu0 %468
    %v470 = vsub.f32 %v445, %v466
    %v471 = vsub.f32 %v461, %v469
    %v472 = vmul.f32 %v470, 1.442695
    %v473 = vpow.pop %v472
    %v474 = vmul.f32 %v471, 1.442695
    %v475 = vpow.pop %v474
    %v476 = vsel %vm258, %v473, 0.0
    %477 = vadd.xlane.f32.xlu0 %v476
    %v478 = vpop.xlane.xlu0 %477
    %v479 = vsel %vm258, %v475, 0.0
    %480 = vadd.xlane.f32.xlu0 %v479
    %v481 = vpop.xlane.xlu0 %480
    %v482 = vrcp.pop %v478
    %v483 = vrcp.pop %v481
    %v484 = vmul.f32 %v473, %v482
    %v485 = vmul.f32 %v475, %v483
    %v486 = vpack.c.bf16 %v484, %v484
    %v487 = vpack.c.bf16 %v485, %v485
    %v488 = vmul.f32 %v210, %v82
    %v489 = vmul.f32 %v212, %v82
    %v490 = vpack.c.bf16 %v488, %v488
    %v491 = vpack.c.bf16 %v489, %v489
    %v493 = vsel %vm258, %v486, 0
    %v496 = vsel %vm354, %v490, 0
    %498 = vmatpush.bf16.msra.mxu0 0
    %499 = vmatpush.bf16.msra.mxu0 0
    %500 = vmatpush.bf16.msra.mxu0 0
    %501 = vmatpush.bf16.msra.mxu0 0
    %502 = vmatpush.bf16.msra.mxu0 0
    %503 = vmatpush.bf16.msra.mxu0 0
    %504 = vmatpush.bf16.msra.mxu0 0
    %505 = vmatpush.bf16.msra.mxu0 %v496
    %506 = vmatmul.bf16.gmra.mxu0 %v493
    %v507 = vpop.f32.mrf.mxu0
    %v508 = vadd.f32 0.0, %v507
    %v509 = vpop.f32.mrf.mxu0
    %510 = vdwg.mxu0
    %v512 = vsel %vm258, %v487, 0
    %v515 = vsel %vm354, %v491, 0
    %517 = vmatpush.bf16.msra.mxu0 0
    %518 = vmatpush.bf16.msra.mxu0 0
    %519 = vmatpush.bf16.msra.mxu0 0
    %520 = vmatpush.bf16.msra.mxu0 0
    %521 = vmatpush.bf16.msra.mxu0 0
    %522 = vmatpush.bf16.msra.mxu0 0
    %523 = vmatpush.bf16.msra.mxu0 0
    %524 = vmatpush.bf16.msra.mxu0 %v515
    %525 = vmatmul.bf16.gmra.mxu0 %v512
    %v526 = vpop.f32.mrf.mxu0
    %v527 = vadd.f32 0.0, %v526
    %v528 = vpop.f32.mrf.mxu0
    %529 = vdwg.mxu0
    %v530 = vadd.f32 %v406, %v508
    %v531 = vadd.f32 %v425, %v527
    %v532 = vmul.f32 %v179, %v87
    %v533 = vmul.f32 %v181, %v87
    %v534 = vpack.c.bf16 %v532, %v532
    %v535 = vpack.c.bf16 %v533, %v533
    %v537 = vsel %vm138, %v534, 0
    %539 = vmatpush.bf16.xpose.msra.mxu0 0
    %540 = vmatpush.bf16.xpose.msra.mxu0 0
    %541 = vmatpush.bf16.xpose.msra.mxu0 0
    %542 = vmatpush.bf16.xpose.msra.mxu0 0
    %543 = vmatpush.bf16.xpose.msra.mxu0 0
    %544 = vmatpush.bf16.xpose.msra.mxu0 0
    %545 = vmatpush.bf16.xpose.msra.mxu0 0
    %546 = vmatpush.bf16.xpose.msra.mxu0 %v537
    %547 = vmatmul.bf16.gmra.mxu0 %v221
    %v548 = vpop.f32.mrf.mxu0
    %v549 = vadd.f32 0.0, %v548
    %v550 = vpop.f32.mrf.mxu0
    %551 = vdwg.mxu0
    %v553 = vsel %vm138, %v535, 0
    %555 = vmatpush.bf16.xpose.msra.mxu0 0
    %556 = vmatpush.bf16.xpose.msra.mxu0 0
    %557 = vmatpush.bf16.xpose.msra.mxu0 0
    %558 = vmatpush.bf16.xpose.msra.mxu0 0
    %559 = vmatpush.bf16.xpose.msra.mxu0 0
    %560 = vmatpush.bf16.xpose.msra.mxu0 0
    %561 = vmatpush.bf16.xpose.msra.mxu0 0
    %562 = vmatpush.bf16.xpose.msra.mxu0 %v553
    %563 = vmatmul.bf16.gmra.mxu0 %v240
    %v564 = vpop.f32.mrf.mxu0
    %v565 = vadd.f32 0.0, %v564
    %v566 = vpop.f32.mrf.mxu0
    %567 = vdwg.mxu0
    %v568 = vsel %vm258, %v549, -inf
    %569 = vmax.xlane.f32.xlu0 %v568
    %v570 = vpop.xlane.xlu0 %569
    %v571 = vsel %vm258, %v565, -inf
    %572 = vmax.xlane.f32.xlu0 %v571
    %v573 = vpop.xlane.xlu0 %572
    %v574 = vsub.f32 %v549, %v570
    %v575 = vsub.f32 %v565, %v573
    %v576 = vmul.f32 %v574, 1.442695
    %v577 = vpow.pop %v576
    %v578 = vmul.f32 %v575, 1.442695
    %v579 = vpow.pop %v578
    %v580 = vsel %vm258, %v577, 0.0
    %581 = vadd.xlane.f32.xlu0 %v580
    %v582 = vpop.xlane.xlu0 %581
    %v583 = vsel %vm258, %v579, 0.0
    %584 = vadd.xlane.f32.xlu0 %v583
    %v585 = vpop.xlane.xlu0 %584
    %v586 = vrcp.pop %v582
    %v587 = vrcp.pop %v585
    %v588 = vmul.f32 %v577, %v586
    %v589 = vmul.f32 %v579, %v587
    %v590 = vpack.c.bf16 %v588, %v588
    %v591 = vpack.c.bf16 %v589, %v589
    %v592 = vmul.f32 %v210, %v87
    %v593 = vmul.f32 %v212, %v87
    %v594 = vpack.c.bf16 %v592, %v592
    %v595 = vpack.c.bf16 %v593, %v593
    %v597 = vsel %vm258, %v590, 0
    %v600 = vsel %vm354, %v594, 0
    %602 = vmatpush.bf16.msra.mxu0 0
    %603 = vmatpush.bf16.msra.mxu0 0
    %604 = vmatpush.bf16.msra.mxu0 0
    %605 = vmatpush.bf16.msra.mxu0 0
    %606 = vmatpush.bf16.msra.mxu0 0
    %607 = vmatpush.bf16.msra.mxu0 0
    %608 = vmatpush.bf16.msra.mxu0 0
    %609 = vmatpush.bf16.msra.mxu0 %v600
    %610 = vmatmul.bf16.gmra.mxu0 %v597
    %v611 = vpop.f32.mrf.mxu0
    %v612 = vadd.f32 0.0, %v611
    %v613 = vpop.f32.mrf.mxu0
    %614 = vdwg.mxu0
    %v616 = vsel %vm258, %v591, 0
    %v619 = vsel %vm354, %v595, 0
    %621 = vmatpush.bf16.msra.mxu0 0
    %622 = vmatpush.bf16.msra.mxu0 0
    %623 = vmatpush.bf16.msra.mxu0 0
    %624 = vmatpush.bf16.msra.mxu0 0
    %625 = vmatpush.bf16.msra.mxu0 0
    %626 = vmatpush.bf16.msra.mxu0 0
    %627 = vmatpush.bf16.msra.mxu0 0
    %628 = vmatpush.bf16.msra.mxu0 %v619
    %629 = vmatmul.bf16.gmra.mxu0 %v616
    %v630 = vpop.f32.mrf.mxu0
    %v631 = vadd.f32 0.0, %v630
    %v632 = vpop.f32.mrf.mxu0
    %633 = vdwg.mxu0
    %v634 = vadd.f32 %v530, %v612
    %v635 = vadd.f32 %v531, %v631
    %v636 = vpack.c.bf16 %v635, %v634
    %v637 = vperm.slane %v120, 3
    %v642 = vunpack.c.l.b16 %v100
    %v643 = vunpack.c.l.b16 %v101
    %v644 = vunpack.c.l.b16 %v102
    %v645 = vunpack.c.l.b16 %v103
    %v646 = vpack.c.b16 %v643, %v642
    %v647 = vpack.c.b16 %v645, %v644
    %v651 = vsel %vm138, %v636, 0
    %653 = vmatpush.bf16.msra.mxu0 0
    %654 = vmatpush.bf16.msra.mxu0 0
    %655 = vmatpush.bf16.msra.mxu0 0
    %656 = vmatpush.bf16.msra.mxu0 0
    %657 = vmatpush.bf16.msra.mxu0 0
    %658 = vmatpush.bf16.msra.mxu0 0
    %659 = vmatpush.bf16.msra.mxu0 %v647
    %660 = vmatpush.bf16.msra.mxu0 %v646
    %661 = vmatmul.bf16.gmra.mxu0 %v651
    %v662 = vpop.f32.mrf.mxu0
    %v663 = vadd.f32 %v637, %v662
    %v664 = vpop.f32.mrf.mxu0
    %v665 = vadd.f32 %v637, %v664
    %666 = vdwg.mxu0
    %v667 = vadd.f32 %v50, %v663
    %v668 = vadd.f32 %v51, %v665
    %v669 = vsel %vm138, %v667, 0.0
    %670 = vadd.xlane.f32.xlu0 %v669
    %v671 = vpop.xlane.xlu0 %670
    %v672 = vsel %vm138, %v668, 0.0
    %673 = vadd.xlane.f32.xlu0 %v672
    %v674 = vpop.xlane.xlu0 %673
    %v675 = vrcp.pop 32.0
    %v676 = vmul.f32 32.0, %v675
    %v677 = vsub.f32 1.0, %v676
    %v678 = vmul.f32 %v675, %v677
    %v679 = vadd.f32 %v675, %v678
    %vm680 = vweird.f32 %v675
    %v681 = vsel %vm680, %v675, %v679
    %v682 = vmul.f32 %v671, %v681
    %v683 = vmul.f32 %v674, %v681
    %v684 = vsub.f32 %v667, %v682
    %v685 = vsub.f32 %v668, %v683
    %v686 = vmul.f32 %v684, %v684
    %v687 = vmul.f32 %v685, %v685
    %v688 = vsel %vm138, %v686, 0.0
    %689 = vadd.xlane.f32.xlu0 %v688
    %v690 = vpop.xlane.xlu0 %689
    %v691 = vsel %vm138, %v687, 0.0
    %692 = vadd.xlane.f32.xlu0 %v691
    %v693 = vpop.xlane.xlu0 %692
    %v694 = vmul.f32 %v690, %v681
    %v695 = vmul.f32 %v693, %v681
    %v696 = vadd.f32 %v694, 1e-05
    %v697 = vadd.f32 %v695, 1e-05
    %v698 = vrsqrt.pop %v696
    %v699 = vmul.f32 %v698, %v696
    %v700 = vmul.f32 %v699, %v698
    %v701 = vmul.f32 0.5, %v700
    %v702 = vsub.f32 1.5, %v701
    %v703 = vmul.f32 %v698, %v702
    %vm704 = vweird.f32 %v696
    %vm705 = vweird.f32 %v698
    %vm706 = vmor %vm704, %vm705
    %v707 = vsel %vm706, %v698, %v703
    %v708 = vrsqrt.pop %v697
    %v709 = vmul.f32 %v708, %v697
    %v710 = vmul.f32 %v709, %v708
    %v711 = vmul.f32 0.5, %v710
    %v712 = vsub.f32 1.5, %v711
    %v713 = vmul.f32 %v708, %v712
    %vm714 = vweird.f32 %v697
    %vm715 = vweird.f32 %v708
    %vm716 = vmor %vm714, %vm715
    %v717 = vsel %vm716, %v708, %v713
    %v718 = vmul.f32 %v684, %v707
    %v719 = vmul.f32 %v685, %v717
    %v720 = vperm.slane %v121, 1
    %v721 = vmul.f32 %v718, %v720
    %v722 = vmul.f32 %v719, %v720
    %v723 = vperm.slane %v121, 2
    %v724 = vadd.f32 %v721, %v723
    %v725 = vadd.f32 %v722, %v723
    %v726 = vadd.f32 %v724, %v52
    %v727 = vadd.f32 %v725, %v53
    %v728 = vpack.c.bf16 %v727, %v726
    %v729 = vperm.slane %v120, 4
    %v734 = vunpack.c.l.b16 %v104
    %v735 = vunpack.c.l.b16 %v105
    %v736 = vunpack.c.l.b16 %v106
    %v737 = vunpack.c.l.b16 %v107
    %v738 = vpack.c.b16 %v735, %v734
    %v739 = vpack.c.b16 %v737, %v736
    %v743 = vsel %vm138, %v728, 0
    %745 = vmatpush.bf16.msra.mxu0 0
    %746 = vmatpush.bf16.msra.mxu0 0
    %747 = vmatpush.bf16.msra.mxu0 0
    %748 = vmatpush.bf16.msra.mxu0 0
    %749 = vmatpush.bf16.msra.mxu0 0
    %750 = vmatpush.bf16.msra.mxu0 0
    %751 = vmatpush.bf16.msra.mxu0 %v739
    %752 = vmatpush.bf16.msra.mxu0 %v738
    %753 = vmatmul.bf16.gmra.mxu0 %v743
    %v754 = vpop.f32.mrf.mxu0
    %v755 = vadd.f32 %v729, %v754
    %v756 = vpop.f32.mrf.mxu0
    %v757 = vadd.f32 %v729, %v756
    %758 = vdwg.mxu0
    %v759 = vpack.c.bf16 %v63, %v62
    %v760 = vpack.c.bf16 %v65, %v64
    %v761 = vperm.slane %v120, 5
    %v766 = vunpack.c.l.b16 %v108
    %v767 = vunpack.c.l.b16 %v109
    %v768 = vunpack.c.l.b16 %v110
    %v769 = vunpack.c.l.b16 %v111
    %v770 = vpack.c.b16 %v767, %v766
    %v771 = vpack.c.b16 %v769, %v768
    %v775 = vsel %vm138, %v759, 0
    %v778 = vsel %vm138, %v760, 0
    %780 = vmatpush.bf16.msra.mxu0 0
    %781 = vmatpush.bf16.msra.mxu0 0
    %782 = vmatpush.bf16.msra.mxu0 0
    %783 = vmatpush.bf16.msra.mxu0 0
    %784 = vmatpush.bf16.msra.mxu0 0
    %785 = vmatpush.bf16.msra.mxu0 0
    %786 = vmatpush.bf16.msra.mxu0 %v771
    %787 = vmatpush.bf16.msra.mxu0 %v770
    %788 = vmatmul.bf16.gmra.mxu0 %v775
    %v789 = vpop.f32.mrf.mxu0
    %v790 = vadd.f32 %v761, %v789
    %v791 = vpop.f32.mrf.mxu0
    %v792 = vadd.f32 %v761, %v791
    %793 = vmatmul.bf16.gmra.mxu0 %v778
    %v794 = vpop.f32.mrf.mxu0
    %v795 = vadd.f32 %v761, %v794
    %v796 = vpop.f32.mrf.mxu0
    %v797 = vadd.f32 %v761, %v796
    %798 = vdwg.mxu0
    %v799 = vpack.c.bf16 %v55, %v54
    %v800 = vpack.c.bf16 %v57, %v56
    %v801 = vperm.slane %v120, 6
    %v806 = vunpack.c.l.b16 %v112
    %v807 = vunpack.c.l.b16 %v113
    %v808 = vunpack.c.l.b16 %v114
    %v809 = vunpack.c.l.b16 %v115
    %v810 = vpack.c.b16 %v807, %v806
    %v811 = vpack.c.b16 %v809, %v808
    %v815 = vsel %vm138, %v799, 0
    %v818 = vsel %vm138, %v800, 0
    %820 = vmatpush.bf16.msra.mxu0 0
    %821 = vmatpush.bf16.msra.mxu0 0
    %822 = vmatpush.bf16.msra.mxu0 0
    %823 = vmatpush.bf16.msra.mxu0 0
    %824 = vmatpush.bf16.msra.mxu0 0
    %825 = vmatpush.bf16.msra.mxu0 0
    %826 = vmatpush.bf16.msra.mxu0 %v811
    %827 = vmatpush.bf16.msra.mxu0 %v810
    %828 = vmatmul.bf16.gmra.mxu0 %v815
    %v829 = vpop.f32.mrf.mxu0
    %v830 = vadd.f32 %v801, %v829
    %v831 = vpop.f32.mrf.mxu0
    %v832 = vadd.f32 %v801, %v831
    %833 = vmatmul.bf16.gmra.mxu0 %v818
    %v834 = vpop.f32.mrf.mxu0
    %v835 = vadd.f32 %v801, %v834
    %v836 = vpop.f32.mrf.mxu0
    %v837 = vadd.f32 %v801, %v836
    %838 = vdwg.mxu0
    %v839 = vpack.c.bf16 %v755, %v755
    %v840 = vpack.c.bf16 %v757, %v757
    %v841 = vmul.f32 %v790, %v72
    %v842 = vmul.f32 %v792, %v72
    %v843 = vmul.f32 %v795, %v72
    %v844 = vmul.f32 %v797, %v72
    %v845 = vpack.c.bf16 %v841, %v841
    %v846 = vpack.c.bf16 %v842, %v842
    %v847 = vpack.c.bf16 %v843, %v843
    %v848 = vpack.c.bf16 %v844, %v844
    %v851 = vunpack.c.l.b16 %v845
    %v852 = vunpack.c.l.b16 %v846
    %v853 = vpack.c.b16 %v852, %v851
    %v855 = vsel %vm138, %v839, 0
    %v858 = vsel %vm138, %v853, 0
    %860 = vmatpush.bf16.xpose.msra.mxu0 0
    %861 = vmatpush.bf16.xpose.msra.mxu0 0
    %862 = vmatpush.bf16.xpose.msra.mxu0 0
    %863 = vmatpush.bf16.xpose.msra.mxu0 0
    %864 = vmatpush.bf16.xpose.msra.mxu0 0
    %865 = vmatpush.bf16.xpose.msra.mxu0 0
    %866 = vmatpush.bf16.xpose.msra.mxu0 0
    %867 = vmatpush.bf16.xpose.msra.mxu0 %v858
    %868 = vmatmul.bf16.gmra.mxu0 %v855
    %v869 = vpop.f32.mrf.mxu0
    %v870 = vadd.f32 0.0, %v869
    %v871 = vpop.f32.mrf.mxu0
    %872 = vdwg.mxu0
    %v875 = vunpack.c.l.b16 %v847
    %v876 = vunpack.c.l.b16 %v848
    %v877 = vpack.c.b16 %v876, %v875
    %v879 = vsel %vm138, %v840, 0
    %v882 = vsel %vm138, %v877, 0
    %884 = vmatpush.bf16.xpose.msra.mxu0 0
    %885 = vmatpush.bf16.xpose.msra.mxu0 0
    %886 = vmatpush.bf16.xpose.msra.mxu0 0
    %887 = vmatpush.bf16.xpose.msra.mxu0 0
    %888 = vmatpush.bf16.xpose.msra.mxu0 0
    %889 = vmatpush.bf16.xpose.msra.mxu0 0
    %890 = vmatpush.bf16.xpose.msra.mxu0 0
    %891 = vmatpush.bf16.xpose.msra.mxu0 %v882
    %892 = vmatmul.bf16.gmra.mxu0 %v879
    %v893 = vpop.f32.mrf.mxu0
    %v894 = vadd.f32 0.0, %v893
    %v895 = vpop.f32.mrf.mxu0
    %896 = vdwg.mxu0
    %vm897 = vcmask 130048
    %v898 = vsel %vm897, %v870, -inf
    %899 = vmax.xlane.f32.xlu0 %v898
    %v900 = vpop.xlane.xlu0 %899
    %v901 = vsel %vm897, %v894, -inf
    %902 = vmax.xlane.f32.xlu0 %v901
    %v903 = vpop.xlane.xlu0 %902
    %v904 = vsub.f32 %v870, %v900
    %v905 = vsub.f32 %v894, %v903
    %v906 = vmul.f32 %v904, 1.442695
    %v907 = vpow.pop %v906
    %v908 = vmul.f32 %v905, 1.442695
    %v909 = vpow.pop %v908
    %v910 = vsel %vm897, %v907, 0.0
    %911 = vadd.xlane.f32.xlu0 %v910
    %v912 = vpop.xlane.xlu0 %911
    %v913 = vsel %vm897, %v909, 0.0
    %914 = vadd.xlane.f32.xlu0 %v913
    %v915 = vpop.xlane.xlu0 %914
    %v916 = vrcp.pop %v912
    %v917 = vrcp.pop %v915
    %v918 = vmul.f32 %v907, %v916
    %v919 = vmul.f32 %v909, %v917
    %v920 = vpack.c.bf16 %v918, %v918
    %v921 = vpack.c.bf16 %v919, %v919
    %v922 = vmul.f32 %v830, %v72
    %v923 = vmul.f32 %v832, %v72
    %v924 = vmul.f32 %v835, %v72
    %v925 = vmul.f32 %v837, %v72
    %v926 = vpack.c.bf16 %v922, %v922
    %v927 = vpack.c.bf16 %v923, %v923
    %v928 = vpack.c.bf16 %v924, %v924
    %v929 = vpack.c.bf16 %v925, %v925
    %v930 = vmul.f32 %v790, %v77
    %v931 = vmul.f32 %v792, %v77
    %v932 = vmul.f32 %v795, %v77
    %v933 = vmul.f32 %v797, %v77
    %v934 = vpack.c.bf16 %v930, %v930
    %v935 = vpack.c.bf16 %v931, %v931
    %v936 = vpack.c.bf16 %v932, %v932
    %v937 = vpack.c.bf16 %v933, %v933
    %v940 = vunpack.c.l.b16 %v934
    %v941 = vunpack.c.l.b16 %v935
    %v942 = vpack.c.b16 %v941, %v940
    %v944 = vsel %vm138, %v942, 0
    %946 = vmatpush.bf16.xpose.msra.mxu0 0
    %947 = vmatpush.bf16.xpose.msra.mxu0 0
    %948 = vmatpush.bf16.xpose.msra.mxu0 0
    %949 = vmatpush.bf16.xpose.msra.mxu0 0
    %950 = vmatpush.bf16.xpose.msra.mxu0 0
    %951 = vmatpush.bf16.xpose.msra.mxu0 0
    %952 = vmatpush.bf16.xpose.msra.mxu0 0
    %953 = vmatpush.bf16.xpose.msra.mxu0 %v944
    %954 = vmatmul.bf16.gmra.mxu0 %v855
    %v955 = vpop.f32.mrf.mxu0
    %v956 = vadd.f32 0.0, %v955
    %v957 = vpop.f32.mrf.mxu0
    %958 = vdwg.mxu0
    %v961 = vunpack.c.l.b16 %v936
    %v962 = vunpack.c.l.b16 %v937
    %v963 = vpack.c.b16 %v962, %v961
    %v965 = vsel %vm138, %v963, 0
    %967 = vmatpush.bf16.xpose.msra.mxu0 0
    %968 = vmatpush.bf16.xpose.msra.mxu0 0
    %969 = vmatpush.bf16.xpose.msra.mxu0 0
    %970 = vmatpush.bf16.xpose.msra.mxu0 0
    %971 = vmatpush.bf16.xpose.msra.mxu0 0
    %972 = vmatpush.bf16.xpose.msra.mxu0 0
    %973 = vmatpush.bf16.xpose.msra.mxu0 0
    %974 = vmatpush.bf16.xpose.msra.mxu0 %v965
    %975 = vmatmul.bf16.gmra.mxu0 %v879
    %v976 = vpop.f32.mrf.mxu0
    %v977 = vadd.f32 0.0, %v976
    %v978 = vpop.f32.mrf.mxu0
    %979 = vdwg.mxu0
    %v980 = vsel %vm897, %v956, -inf
    %981 = vmax.xlane.f32.xlu0 %v980
    %v982 = vpop.xlane.xlu0 %981
    %v983 = vsel %vm897, %v977, -inf
    %984 = vmax.xlane.f32.xlu0 %v983
    %v985 = vpop.xlane.xlu0 %984
    %v986 = vsub.f32 %v956, %v982
    %v987 = vsub.f32 %v977, %v985
    %v988 = vmul.f32 %v986, 1.442695
    %v989 = vpow.pop %v988
    %v990 = vmul.f32 %v987, 1.442695
    %v991 = vpow.pop %v990
    %v992 = vsel %vm897, %v989, 0.0
    %993 = vadd.xlane.f32.xlu0 %v992
    %v994 = vpop.xlane.xlu0 %993
    %v995 = vsel %vm897, %v991, 0.0
    %996 = vadd.xlane.f32.xlu0 %v995
    %v997 = vpop.xlane.xlu0 %996
    %v998 = vrcp.pop %v994
    %v999 = vrcp.pop %v997
    %v1000 = vmul.f32 %v989, %v998
    %v1001 = vmul.f32 %v991, %v999
    %v1002 = vpack.c.bf16 %v1000, %v1000
    %v1003 = vpack.c.bf16 %v1001, %v1001
    %v1004 = vmul.f32 %v830, %v77
    %v1005 = vmul.f32 %v832, %v77
    %v1006 = vmul.f32 %v835, %v77
    %v1007 = vmul.f32 %v837, %v77
    %v1008 = vpack.c.bf16 %v1004, %v1004
    %v1009 = vpack.c.bf16 %v1005, %v1005
    %v1010 = vpack.c.bf16 %v1006, %v1006
    %v1011 = vpack.c.bf16 %v1007, %v1007
    %v1014 = vunpack.c.l.b16 %v1008
    %v1015 = vunpack.c.l.b16 %v1009
    %v1016 = vpack.c.b16 %v1015, %v1014
    %v1019 = vsel %vm897, %v1002, 0
    %1021 = vmatpush.bf16.msra.mxu0 0
    %1022 = vmatpush.bf16.msra.mxu0 0
    %1023 = vmatpush.bf16.msra.mxu0 0
    %1024 = vmatpush.bf16.msra.mxu0 0
    %1025 = vmatpush.bf16.msra.mxu0 0
    %1026 = vmatpush.bf16.msra.mxu0 0
    %1027 = vmatpush.bf16.msra.mxu0 0
    %1028 = vmatpush.bf16.msra.mxu0 %v1016
    %1029 = vmatmul.bf16.gmra.mxu0 %v1019
    %v1030 = vpop.f32.mrf.mxu0
    %v1031 = vadd.f32 0.0, %v1030
    %v1032 = vpop.f32.mrf.mxu0
    %1033 = vdwg.mxu0
    %v1036 = vunpack.c.l.b16 %v1010
    %v1037 = vunpack.c.l.b16 %v1011
    %v1038 = vpack.c.b16 %v1037, %v1036
    %v1041 = vsel %vm897, %v1003, 0
    %1043 = vmatpush.bf16.msra.mxu0 0
    %1044 = vmatpush.bf16.msra.mxu0 0
    %1045 = vmatpush.bf16.msra.mxu0 0
    %1046 = vmatpush.bf16.msra.mxu0 0
    %1047 = vmatpush.bf16.msra.mxu0 0
    %1048 = vmatpush.bf16.msra.mxu0 0
    %1049 = vmatpush.bf16.msra.mxu0 0
    %1050 = vmatpush.bf16.msra.mxu0 %v1038
    %1051 = vmatmul.bf16.gmra.mxu0 %v1041
    %v1052 = vpop.f32.mrf.mxu0
    %v1053 = vadd.f32 0.0, %v1052
    %v1054 = vpop.f32.mrf.mxu0
    %1055 = vdwg.mxu0
    %v1058 = vunpack.c.l.b16 %v926
    %v1059 = vunpack.c.l.b16 %v927
    %v1060 = vpack.c.b16 %v1059, %v1058
    %v1063 = vsel %vm897, %v920, 0
    %1065 = vmatpush.bf16.msra.mxu0 0
    %1066 = vmatpush.bf16.msra.mxu0 0
    %1067 = vmatpush.bf16.msra.mxu0 0
    %1068 = vmatpush.bf16.msra.mxu0 0
    %1069 = vmatpush.bf16.msra.mxu0 0
    %1070 = vmatpush.bf16.msra.mxu0 0
    %1071 = vmatpush.bf16.msra.mxu0 0
    %1072 = vmatpush.bf16.msra.mxu0 %v1060
    %1073 = vmatmul.bf16.gmra.mxu0 %v1063
    %v1074 = vpop.f32.mrf.mxu0
    %v1075 = vadd.f32 %v1031, %v1074
    %v1076 = vpop.f32.mrf.mxu0
    %1077 = vdwg.mxu0
    %v1080 = vunpack.c.l.b16 %v928
    %v1081 = vunpack.c.l.b16 %v929
    %v1082 = vpack.c.b16 %v1081, %v1080
    %v1085 = vsel %vm897, %v921, 0
    %1087 = vmatpush.bf16.msra.mxu0 0
    %1088 = vmatpush.bf16.msra.mxu0 0
    %1089 = vmatpush.bf16.msra.mxu0 0
    %1090 = vmatpush.bf16.msra.mxu0 0
    %1091 = vmatpush.bf16.msra.mxu0 0
    %1092 = vmatpush.bf16.msra.mxu0 0
    %1093 = vmatpush.bf16.msra.mxu0 0
    %1094 = vmatpush.bf16.msra.mxu0 %v1082
    %1095 = vmatmul.bf16.gmra.mxu0 %v1085
    %v1096 = vpop.f32.mrf.mxu0
    %v1097 = vadd.f32 %v1053, %v1096
    %v1098 = vpop.f32.mrf.mxu0
    %1099 = vdwg.mxu0
    %v1100 = vmul.f32 %v790, %v82
    %v1101 = vmul.f32 %v792, %v82
    %v1102 = vmul.f32 %v795, %v82
    %v1103 = vmul.f32 %v797, %v82
    %v1104 = vpack.c.bf16 %v1100, %v1100
    %v1105 = vpack.c.bf16 %v1101, %v1101
    %v1106 = vpack.c.bf16 %v1102, %v1102
    %v1107 = vpack.c.bf16 %v1103, %v1103
    %v1110 = vunpack.c.l.b16 %v1104
    %v1111 = vunpack.c.l.b16 %v1105
    %v1112 = vpack.c.b16 %v1111, %v1110
    %v1114 = vsel %vm138, %v1112, 0
    %1116 = vmatpush.bf16.xpose.msra.mxu0 0
    %1117 = vmatpush.bf16.xpose.msra.mxu0 0
    %1118 = vmatpush.bf16.xpose.msra.mxu0 0
    %1119 = vmatpush.bf16.xpose.msra.mxu0 0
    %1120 = vmatpush.bf16.xpose.msra.mxu0 0
    %1121 = vmatpush.bf16.xpose.msra.mxu0 0
    %1122 = vmatpush.bf16.xpose.msra.mxu0 0
    %1123 = vmatpush.bf16.xpose.msra.mxu0 %v1114
    %1124 = vmatmul.bf16.gmra.mxu0 %v855
    %v1125 = vpop.f32.mrf.mxu0
    %v1126 = vadd.f32 0.0, %v1125
    %v1127 = vpop.f32.mrf.mxu0
    %1128 = vdwg.mxu0
    %v1131 = vunpack.c.l.b16 %v1106
    %v1132 = vunpack.c.l.b16 %v1107
    %v1133 = vpack.c.b16 %v1132, %v1131
    %v1135 = vsel %vm138, %v1133, 0
    %1137 = vmatpush.bf16.xpose.msra.mxu0 0
    %1138 = vmatpush.bf16.xpose.msra.mxu0 0
    %1139 = vmatpush.bf16.xpose.msra.mxu0 0
    %1140 = vmatpush.bf16.xpose.msra.mxu0 0
    %1141 = vmatpush.bf16.xpose.msra.mxu0 0
    %1142 = vmatpush.bf16.xpose.msra.mxu0 0
    %1143 = vmatpush.bf16.xpose.msra.mxu0 0
    %1144 = vmatpush.bf16.xpose.msra.mxu0 %v1135
    %1145 = vmatmul.bf16.gmra.mxu0 %v879
    %v1146 = vpop.f32.mrf.mxu0
    %v1147 = vadd.f32 0.0, %v1146
    %v1148 = vpop.f32.mrf.mxu0
    %1149 = vdwg.mxu0
    %v1150 = vsel %vm897, %v1126, -inf
    %1151 = vmax.xlane.f32.xlu0 %v1150
    %v1152 = vpop.xlane.xlu0 %1151
    %v1153 = vsel %vm897, %v1147, -inf
    %1154 = vmax.xlane.f32.xlu0 %v1153
    %v1155 = vpop.xlane.xlu0 %1154
    %v1156 = vsub.f32 %v1126, %v1152
    %v1157 = vsub.f32 %v1147, %v1155
    %v1158 = vmul.f32 %v1156, 1.442695
    %v1159 = vpow.pop %v1158
    %v1160 = vmul.f32 %v1157, 1.442695
    %v1161 = vpow.pop %v1160
    %v1162 = vsel %vm897, %v1159, 0.0
    %1163 = vadd.xlane.f32.xlu0 %v1162
    %v1164 = vpop.xlane.xlu0 %1163
    %v1165 = vsel %vm897, %v1161, 0.0
    %1166 = vadd.xlane.f32.xlu0 %v1165
    %v1167 = vpop.xlane.xlu0 %1166
    %v1168 = vrcp.pop %v1164
    %v1169 = vrcp.pop %v1167
    %v1170 = vmul.f32 %v1159, %v1168
    %v1171 = vmul.f32 %v1161, %v1169
    %v1172 = vpack.c.bf16 %v1170, %v1170
    %v1173 = vpack.c.bf16 %v1171, %v1171
    %v1174 = vmul.f32 %v830, %v82
    %v1175 = vmul.f32 %v832, %v82
    %v1176 = vmul.f32 %v835, %v82
    %v1177 = vmul.f32 %v837, %v82
    %v1178 = vpack.c.bf16 %v1174, %v1174
    %v1179 = vpack.c.bf16 %v1175, %v1175
    %v1180 = vpack.c.bf16 %v1176, %v1176
    %v1181 = vpack.c.bf16 %v1177, %v1177
    %v1184 = vunpack.c.l.b16 %v1178
    %v1185 = vunpack.c.l.b16 %v1179
    %v1186 = vpack.c.b16 %v1185, %v1184
    %v1189 = vsel %vm897, %v1172, 0
    %1191 = vmatpush.bf16.msra.mxu0 0
    %1192 = vmatpush.bf16.msra.mxu0 0
    %1193 = vmatpush.bf16.msra.mxu0 0
    %1194 = vmatpush.bf16.msra.mxu0 0
    %1195 = vmatpush.bf16.msra.mxu0 0
    %1196 = vmatpush.bf16.msra.mxu0 0
    %1197 = vmatpush.bf16.msra.mxu0 0
    %1198 = vmatpush.bf16.msra.mxu0 %v1186
    %1199 = vmatmul.bf16.gmra.mxu0 %v1189
    %v1200 = vpop.f32.mrf.mxu0
    %v1201 = vadd.f32 0.0, %v1200
    %v1202 = vpop.f32.mrf.mxu0
    %1203 = vdwg.mxu0
    %v1206 = vunpack.c.l.b16 %v1180
    %v1207 = vunpack.c.l.b16 %v1181
    %v1208 = vpack.c.b16 %v1207, %v1206
    %v1211 = vsel %vm897, %v1173, 0
    %1213 = vmatpush.bf16.msra.mxu0 0
    %1214 = vmatpush.bf16.msra.mxu0 0
    %1215 = vmatpush.bf16.msra.mxu0 0
    %1216 = vmatpush.bf16.msra.mxu0 0
    %1217 = vmatpush.bf16.msra.mxu0 0
    %1218 = vmatpush.bf16.msra.mxu0 0
    %1219 = vmatpush.bf16.msra.mxu0 0
    %1220 = vmatpush.bf16.msra.mxu0 %v1208
    %1221 = vmatmul.bf16.gmra.mxu0 %v1211
    %v1222 = vpop.f32.mrf.mxu0
    %v1223 = vadd.f32 0.0, %v1222
    %v1224 = vpop.f32.mrf.mxu0
    %1225 = vdwg.mxu0
    %v1226 = vadd.f32 %v1075, %v1201
    %v1227 = vadd.f32 %v1097, %v1223
    %v1228 = vmul.f32 %v790, %v87
    %v1229 = vmul.f32 %v792, %v87
    %v1230 = vmul.f32 %v795, %v87
    %v1231 = vmul.f32 %v797, %v87
    %v1232 = vpack.c.bf16 %v1228, %v1228
    %v1233 = vpack.c.bf16 %v1229, %v1229
    %v1234 = vpack.c.bf16 %v1230, %v1230
    %v1235 = vpack.c.bf16 %v1231, %v1231
    %v1238 = vunpack.c.l.b16 %v1232
    %v1239 = vunpack.c.l.b16 %v1233
    %v1240 = vpack.c.b16 %v1239, %v1238
    %v1242 = vsel %vm138, %v1240, 0
    %1244 = vmatpush.bf16.xpose.msra.mxu0 0
    %1245 = vmatpush.bf16.xpose.msra.mxu0 0
    %1246 = vmatpush.bf16.xpose.msra.mxu0 0
    %1247 = vmatpush.bf16.xpose.msra.mxu0 0
    %1248 = vmatpush.bf16.xpose.msra.mxu0 0
    %1249 = vmatpush.bf16.xpose.msra.mxu0 0
    %1250 = vmatpush.bf16.xpose.msra.mxu0 0
    %1251 = vmatpush.bf16.xpose.msra.mxu0 %v1242
    %1252 = vmatmul.bf16.gmra.mxu0 %v855
    %v1253 = vpop.f32.mrf.mxu0
    %v1254 = vadd.f32 0.0, %v1253
    %v1255 = vpop.f32.mrf.mxu0
    %1256 = vdwg.mxu0
    %v1259 = vunpack.c.l.b16 %v1234
    %v1260 = vunpack.c.l.b16 %v1235
    %v1261 = vpack.c.b16 %v1260, %v1259
    %v1263 = vsel %vm138, %v1261, 0
    %1265 = vmatpush.bf16.xpose.msra.mxu0 0
    %1266 = vmatpush.bf16.xpose.msra.mxu0 0
    %1267 = vmatpush.bf16.xpose.msra.mxu0 0
    %1268 = vmatpush.bf16.xpose.msra.mxu0 0
    %1269 = vmatpush.bf16.xpose.msra.mxu0 0
    %1270 = vmatpush.bf16.xpose.msra.mxu0 0
    %1271 = vmatpush.bf16.xpose.msra.mxu0 0
    %1272 = vmatpush.bf16.xpose.msra.mxu0 %v1263
    %1273 = vmatmul.bf16.gmra.mxu0 %v879
    %v1274 = vpop.f32.mrf.mxu0
    %v1275 = vadd.f32 0.0, %v1274
    %v1276 = vpop.f32.mrf.mxu0
    %1277 = vdwg.mxu0
    %v1278 = vsel %vm897, %v1254, -inf
    %1279 = vmax.xlane.f32.xlu0 %v1278
    %v1280 = vpop.xlane.xlu0 %1279
    %v1281 = vsel %vm897, %v1275, -inf
    %1282 = vmax.xlane.f32.xlu0 %v1281
    %v1283 = vpop.xlane.xlu0 %1282
    %v1284 = vsub.f32 %v1254, %v1280
    %v1285 = vsub.f32 %v1275, %v1283
    %v1286 = vmul.f32 %v1284, 1.442695
    %v1287 = vpow.pop %v1286
    %v1288 = vmul.f32 %v1285, 1.442695
    %v1289 = vpow.pop %v1288
    %v1290 = vsel %vm897, %v1287, 0.0
    %1291 = vadd.xlane.f32.xlu0 %v1290
    %v1292 = vpop.xlane.xlu0 %1291
    %v1293 = vsel %vm897, %v1289, 0.0
    %1294 = vadd.xlane.f32.xlu0 %v1293
    %v1295 = vpop.xlane.xlu0 %1294
    %v1296 = vrcp.pop %v1292
    %v1297 = vrcp.pop %v1295
    %v1298 = vmul.f32 %v1287, %v1296
    %v1299 = vmul.f32 %v1289, %v1297
    %v1300 = vpack.c.bf16 %v1298, %v1298
    %v1301 = vpack.c.bf16 %v1299, %v1299
    %v1302 = vmul.f32 %v830, %v87
    %v1303 = vmul.f32 %v832, %v87
    %v1304 = vmul.f32 %v835, %v87
    %v1305 = vmul.f32 %v837, %v87
    %v1306 = vpack.c.bf16 %v1302, %v1302
    %v1307 = vpack.c.bf16 %v1303, %v1303
    %v1308 = vpack.c.bf16 %v1304, %v1304
    %v1309 = vpack.c.bf16 %v1305, %v1305
    %v1312 = vunpack.c.l.b16 %v1306
    %v1313 = vunpack.c.l.b16 %v1307
    %v1314 = vpack.c.b16 %v1313, %v1312
    %v1317 = vsel %vm897, %v1300, 0
    %1319 = vmatpush.bf16.msra.mxu0 0
    %1320 = vmatpush.bf16.msra.mxu0 0
    %1321 = vmatpush.bf16.msra.mxu0 0
    %1322 = vmatpush.bf16.msra.mxu0 0
    %1323 = vmatpush.bf16.msra.mxu0 0
    %1324 = vmatpush.bf16.msra.mxu0 0
    %1325 = vmatpush.bf16.msra.mxu0 0
    %1326 = vmatpush.bf16.msra.mxu0 %v1314
    %1327 = vmatmul.bf16.gmra.mxu0 %v1317
    %v1328 = vpop.f32.mrf.mxu0
    %v1329 = vadd.f32 0.0, %v1328
    %v1330 = vpop.f32.mrf.mxu0
    %1331 = vdwg.mxu0
    %v1334 = vunpack.c.l.b16 %v1308
    %v1335 = vunpack.c.l.b16 %v1309
    %v1336 = vpack.c.b16 %v1335, %v1334
    %v1339 = vsel %vm897, %v1301, 0
    %1341 = vmatpush.bf16.msra.mxu0 0
    %1342 = vmatpush.bf16.msra.mxu0 0
    %1343 = vmatpush.bf16.msra.mxu0 0
    %1344 = vmatpush.bf16.msra.mxu0 0
    %1345 = vmatpush.bf16.msra.mxu0 0
    %1346 = vmatpush.bf16.msra.mxu0 0
    %1347 = vmatpush.bf16.msra.mxu0 0
    %1348 = vmatpush.bf16.msra.mxu0 %v1336
    %1349 = vmatmul.bf16.gmra.mxu0 %v1339
    %v1350 = vpop.f32.mrf.mxu0
    %v1351 = vadd.f32 0.0, %v1350
    %v1352 = vpop.f32.mrf.mxu0
    %1353 = vdwg.mxu0
    %v1354 = vadd.f32 %v1226, %v1329
    %v1355 = vadd.f32 %v1227, %v1351
    %v1356 = vpack.c.bf16 %v1355, %v1354
    %v1357 = vperm.slane %v120, 7
    %v1362 = vunpack.c.l.b16 %v116
    %v1363 = vunpack.c.l.b16 %v117
    %v1364 = vunpack.c.l.b16 %v118
    %v1365 = vunpack.c.l.b16 %v119
    %v1366 = vpack.c.b16 %v1363, %v1362
    %v1367 = vpack.c.b16 %v1365, %v1364
    %v1371 = vsel %vm138, %v1356, 0
    %1373 = vmatpush.bf16.msra.mxu0 0
    %1374 = vmatpush.bf16.msra.mxu0 0
    %1375 = vmatpush.bf16.msra.mxu0 0
    %1376 = vmatpush.bf16.msra.mxu0 0
    %1377 = vmatpush.bf16.msra.mxu0 0
    %1378 = vmatpush.bf16.msra.mxu0 0
    %1379 = vmatpush.bf16.msra.mxu0 %v1367
    %1380 = vmatpush.bf16.msra.mxu0 %v1366
    %1381 = vmatmul.bf16.gmra.mxu0 %v1371
    %v1382 = vpop.f32.mrf.mxu0
    %v1383 = vadd.f32 %v1357, %v1382
    %v1384 = vpop.f32.mrf.mxu0
    %v1385 = vadd.f32 %v1357, %v1384
    %1386 = vdwg.mxu0
    %v1387 = vadd.f32 %v724, %v1383
    %v1388 = vadd.f32 %v725, %v1385
    %v1389 = vsel %vm138, %v1387, 0.0
    %1390 = vadd.xlane.f32.xlu0 %v1389
    %v1391 = vpop.xlane.xlu0 %1390
    %v1392 = vsel %vm138, %v1388, 0.0
    %1393 = vadd.xlane.f32.xlu0 %v1392
    %v1394 = vpop.xlane.xlu0 %1393
    %v1395 = vmul.f32 %v1391, %v681
    %v1396 = vmul.f32 %v1394, %v681
    %v1397 = vsub.f32 %v1387, %v1395
    %v1398 = vsub.f32 %v1388, %v1396
    %v1399 = vmul.f32 %v1397, %v1397
    %v1400 = vmul.f32 %v1398, %v1398
    %v1401 = vsel %vm138, %v1399, 0.0
    %1402 = vadd.xlane.f32.xlu0 %v1401
    %v1403 = vpop.xlane.xlu0 %1402
    %v1404 = vsel %vm138, %v1400, 0.0
    %1405 = vadd.xlane.f32.xlu0 %v1404
    %v1406 = vpop.xlane.xlu0 %1405
    %v1407 = vmul.f32 %v1403, %v681
    %v1408 = vmul.f32 %v1406, %v681
    %v1409 = vadd.f32 %v1407, 1e-05
    %v1410 = vadd.f32 %v1408, 1e-05
    %v1411 = vrsqrt.pop %v1409
    %v1412 = vmul.f32 %v1411, %v1409
    %v1413 = vmul.f32 %v1412, %v1411
    %v1414 = vmul.f32 0.5, %v1413
    %v1415 = vsub.f32 1.5, %v1414
    %v1416 = vmul.f32 %v1411, %v1415
    %vm1417 = vweird.f32 %v1409
    %vm1418 = vweird.f32 %v1411
    %vm1419 = vmor %vm1417, %vm1418
    %v1420 = vsel %vm1419, %v1411, %v1416
    %v1421 = vrsqrt.pop %v1410
    %v1422 = vmul.f32 %v1421, %v1410
    %v1423 = vmul.f32 %v1422, %v1421
    %v1424 = vmul.f32 0.5, %v1423
    %v1425 = vsub.f32 1.5, %v1424
    %v1426 = vmul.f32 %v1421, %v1425
    %vm1427 = vweird.f32 %v1410
    %vm1428 = vweird.f32 %v1421
    %vm1429 = vmor %vm1427, %vm1428
    %v1430 = vsel %vm1429, %v1421, %v1426
    %v1431 = vmul.f32 %v1397, %v1420
    %v1432 = vmul.f32 %v1398, %v1430
    %v1433 = vperm.slane %v121, 3
    %v1434 = vmul.f32 %v1431, %v1433
    %v1435 = vmul.f32 %v1432, %v1433
    %v1436 = vperm.slane %v121, 4
    %v1437 = vadd.f32 %v1434, %v1436
    %v1438 = vadd.f32 %v1435, %v1436
    %v1439 = vld [vmem:[%s3] sm:$0xf]
    %v1440 = vld [vmem:[%s3 + $0x4] sm:$0xf]
    %v1441 = vld [vmem:[%s3 + $0x8] sm:$0xf]
    %v1442 = vld [vmem:[%s3 + $0xc] sm:$0xf]
    %v1443 = vpack.c.bf16 %v1438, %v1437
    %v1444 = vld [vmem:[%s6] sm:$0x1]
    %v1446 = vperm.slane %v1444, 0
    %v1452 = vunpack.c.l.b16 %v1439
    %v1453 = vunpack.c.l.b16 %v1440
    %v1454 = vunpack.c.l.b16 %v1441
    %v1455 = vunpack.c.l.b16 %v1442
    %v1456 = vpack.c.b16 %v1453, %v1452
    %v1457 = vpack.c.b16 %v1455, %v1454
    %v1461 = vsel %vm138, %v1443, 0
    %1463 = vmatpush.bf16.msra.mxu0 0
    %1464 = vmatpush.bf16.msra.mxu0 0
    %1465 = vmatpush.bf16.msra.mxu0 0
    %1466 = vmatpush.bf16.msra.mxu0 0
    %1467 = vmatpush.bf16.msra.mxu0 0
    %1468 = vmatpush.bf16.msra.mxu0 0
    %1469 = vmatpush.bf16.msra.mxu0 %v1457
    %1470 = vmatpush.bf16.msra.mxu0 %v1456
    %1471 = vmatmul.bf16.gmra.mxu0 %v1461
    %v1472 = vpop.f32.mrf.mxu0
    %v1473 = vadd.f32 %v1446, %v1472
    %v1474 = vpop.f32.mrf.mxu0
    %v1475 = vadd.f32 %v1446, %v1474
    %1476 = vdwg.mxu0
    %v1477 = vmax.f32 %v1473, 0.0
    %v1478 = vmax.f32 %v1475, 0.0
    %v1479 = vld [vmem:[%s4] sm:$0xf]
    %v1480 = vld [vmem:[%s4 + $0x4] sm:$0xf]
    %v1481 = vld [vmem:[%s4 + $0x8] sm:$0xf]
    %v1482 = vld [vmem:[%s4 + $0xc] sm:$0xf]
    %v1483 = vld [vmem:[%s4 + $0x10] sm:$0xf]
    %v1484 = vld [vmem:[%s4 + $0x14] sm:$0xf]
    %v1485 = vld [vmem:[%s4 + $0x18] sm:$0xf]
    %v1486 = vld [vmem:[%s4 + $0x1c] sm:$0xf]
    %v1487 = vpack.c.bf16 %v1478, %v1477
    %v1488 = vperm.slane %v121, 0
    %v1497 = vunpack.c.l.b16 %v1479
    %v1498 = vunpack.c.l.b16 %v1480
    %v1499 = vunpack.c.l.b16 %v1481
    %v1500 = vunpack.c.l.b16 %v1482
    %v1501 = vunpack.c.l.b16 %v1483
    %v1502 = vunpack.c.l.b16 %v1484
    %v1503 = vunpack.c.l.b16 %v1485
    %v1504 = vunpack.c.l.b16 %v1486
    %v1505 = vpack.c.b16 %v1498, %v1497
    %v1506 = vpack.c.b16 %v1500, %v1499
    %v1507 = vpack.c.b16 %v1502, %v1501
    %v1508 = vpack.c.b16 %v1504, %v1503
    %vm1513 = vcmask 523264
    %v1515 = vsel %vm1513, %v1487, 0
    %1517 = vmatpush.bf16.msra.mxu0 0
    %1518 = vmatpush.bf16.msra.mxu0 0
    %1519 = vmatpush.bf16.msra.mxu0 0
    %1520 = vmatpush.bf16.msra.mxu0 0
    %1521 = vmatpush.bf16.msra.mxu0 %v1508
    %1522 = vmatpush.bf16.msra.mxu0 %v1507
    %1523 = vmatpush.bf16.msra.mxu0 %v1506
    %1524 = vmatpush.bf16.msra.mxu0 %v1505
    %1525 = vmatmul.bf16.gmra.mxu0 %v1515
    %v1526 = vpop.f32.mrf.mxu0
    %v1527 = vadd.f32 %v1488, %v1526
    %v1528 = vpop.f32.mrf.mxu0
    %v1529 = vadd.f32 %v1488, %v1528
    %1530 = vdwg.mxu0
    %v1531 = vadd.f32 %v1437, %v1527
    %v1532 = vadd.f32 %v1438, %v1529
    %v1533 = vsel %vm138, %v1531, 0.0
    %1534 = vadd.xlane.f32.xlu0 %v1533
    %v1535 = vpop.xlane.xlu0 %1534
    %v1536 = vsel %vm138, %v1532, 0.0
    %1537 = vadd.xlane.f32.xlu0 %v1536
    %v1538 = vpop.xlane.xlu0 %1537
    %v1539 = vmul.f32 %v1535, %v681
    %v1540 = vmul.f32 %v1538, %v681
    %v1541 = vsub.f32 %v1531, %v1539
    %v1542 = vsub.f32 %v1532, %v1540
    %v1543 = vmul.f32 %v1541, %v1541
    %v1544 = vmul.f32 %v1542, %v1542
    %v1545 = vsel %vm138, %v1543, 0.0
    %1546 = vadd.xlane.f32.xlu0 %v1545
    %v1547 = vpop.xlane.xlu0 %1546
    %v1548 = vsel %vm138, %v1544, 0.0
    %1549 = vadd.xlane.f32.xlu0 %v1548
    %v1550 = vpop.xlane.xlu0 %1549
    %v1551 = vmul.f32 %v1547, %v681
    %v1552 = vmul.f32 %v1550, %v681
    %v1553 = vadd.f32 %v1551, 1e-05
    %v1554 = vadd.f32 %v1552, 1e-05
    %v1555 = vrsqrt.pop %v1553
    %v1556 = vmul.f32 %v1555, %v1553
    %v1557 = vmul.f32 %v1556, %v1555
    %v1558 = vmul.f32 0.5, %v1557
    %v1559 = vsub.f32 1.5, %v1558
    %v1560 = vmul.f32 %v1555, %v1559
    %vm1561 = vweird.f32 %v1553
    %vm1562 = vweird.f32 %v1555
    %vm1563 = vmor %vm1561, %vm1562
    %v1564 = vsel %vm1563, %v1555, %v1560
    %v1565 = vrsqrt.pop %v1554
    %v1566 = vmul.f32 %v1565, %v1554
    %v1567 = vmul.f32 %v1566, %v1565
    %v1568 = vmul.f32 0.5, %v1567
    %v1569 = vsub.f32 1.5, %v1568
    %v1570 = vmul.f32 %v1565, %v1569
    %vm1571 = vweird.f32 %v1554
    %vm1572 = vweird.f32 %v1565
    %vm1573 = vmor %vm1571, %vm1572
    %v1574 = vsel %vm1573, %v1565, %v1570
    %v1575 = vmul.f32 %v1541, %v1564
    %v1576 = vmul.f32 %v1542, %v1574
    %v1577 = vperm.slane %v121, 5
    %v1578 = vmul.f32 %v1575, %v1577
    %v1579 = vmul.f32 %v1576, %v1577
    %v1580 = vperm.slane %v121, 6
    %v1581 = vadd.f32 %v1578, %v1580
    %v1582 = vadd.f32 %v1579, %v1580
    %s1583 = scalar_lea.vmem [#allocation2], 128
    %v1584 = vld [vmem:[%s1583] sm:$0xf]
    %v1585 = vld [vmem:[%s1583 + $0x4] sm:$0xf]
    %v1586 = vld [vmem:[%s1583 + $0x8] sm:$0xf]
    %v1587 = vld [vmem:[%s1583 + $0xc] sm:$0xf]
    %v1588 = vld [vmem:[%s1583 + $0x10] sm:$0xf]
    %v1589 = vld [vmem:[%s1583 + $0x14] sm:$0xf]
    %v1590 = vld [vmem:[%s1583 + $0x18] sm:$0xf]
    %v1591 = vld [vmem:[%s1583 + $0x1c] sm:$0xf]
    %v1592 = vld [vmem:[%s1583 + $0x20] sm:$0xf]
    %v1593 = vld [vmem:[%s1583 + $0x24] sm:$0xf]
    %v1594 = vld [vmem:[%s1583 + $0x28] sm:$0xf]
    %v1595 = vld [vmem:[%s1583 + $0x2c] sm:$0xf]
    %v1596 = vld [vmem:[%s1583 + $0x30] sm:$0xf]
    %v1597 = vld [vmem:[%s1583 + $0x34] sm:$0xf]
    %v1598 = vld [vmem:[%s1583 + $0x38] sm:$0xf]
    %v1599 = vld [vmem:[%s1583 + $0x3c] sm:$0xf]
    %v1600 = vld [vmem:[%s1583 + $0x40] sm:$0xf]
    %v1601 = vld [vmem:[%s1583 + $0x44] sm:$0xf]
    %v1602 = vld [vmem:[%s1583 + $0x48] sm:$0xf]
    %v1603 = vld [vmem:[%s1583 + $0x4c] sm:$0xf]
    %v1604 = vld [vmem:[%s1583 + $0x50] sm:$0xf]
    %v1605 = vld [vmem:[%s1583 + $0x54] sm:$0xf]
    %v1606 = vld [vmem:[%s1583 + $0x58] sm:$0xf]
    %v1607 = vld [vmem:[%s1583 + $0x5c] sm:$0xf]
    %v1608 = vld [vmem:[%s1583 + $0x60] sm:$0xf]
    %v1609 = vld [vmem:[%s1583 + $0x64] sm:$0xf]
    %v1610 = vld [vmem:[%s1583 + $0x68] sm:$0xf]
    %v1611 = vld [vmem:[%s1583 + $0x6c] sm:$0xf]
    %v1612 = vld [vmem:[%s1583 + $0x70] sm:$0xf]
    %v1613 = vld [vmem:[%s1583 + $0x74] sm:$0xf]
    %v1614 = vld [vmem:[%s1583 + $0x78] sm:$0xf]
    %v1615 = vld [vmem:[%s1583 + $0x7c] sm:$0xf]
    %s1616 = scalar_lea.vmem %s5, 16
    %v1617 = vld [vmem:[%s1616] sm:$0xff]
    %v1618 = vld [vmem:[%s1616 + $0x8] sm:$0xff]
    %v1619 = vadd.f32 %v1581, %v52
    %v1620 = vadd.f32 %v1582, %v53
    %v1621 = vpack.c.bf16 %v1620, %v1619
    %v1622 = vperm.slane %v1617, 0
    %v1627 = vunpack.c.l.b16 %v1584
    %v1628 = vunpack.c.l.b16 %v1585
    %v1629 = vunpack.c.l.b16 %v1586
    %v1630 = vunpack.c.l.b16 %v1587
    %v1631 = vpack.c.b16 %v1628, %v1627
    %v1632 = vpack.c.b16 %v1630, %v1629
    %v1636 = vsel %vm138, %v1621, 0
    %1638 = vmatpush.bf16.msra.mxu0 0
    %1639 = vmatpush.bf16.msra.mxu0 0
    %1640 = vmatpush.bf16.msra.mxu0 0
    %1641 = vmatpush.bf16.msra.mxu0 0
    %1642 = vmatpush.bf16.msra.mxu0 0
    %1643 = vmatpush.bf16.msra.mxu0 0
    %1644 = vmatpush.bf16.msra.mxu0 %v1632
    %1645 = vmatpush.bf16.msra.mxu0 %v1631
    %1646 = vmatmul.bf16.gmra.mxu0 %v1636
    %v1647 = vpop.f32.mrf.mxu0
    %v1648 = vadd.f32 %v1622, %v1647
    %v1649 = vpop.f32.mrf.mxu0
    %v1650 = vadd.f32 %v1622, %v1649
    %1651 = vdwg.mxu0
    %v1652 = vperm.slane %v1617, 1
    %v1657 = vunpack.c.l.b16 %v1588
    %v1658 = vunpack.c.l.b16 %v1589
    %v1659 = vunpack.c.l.b16 %v1590
    %v1660 = vunpack.c.l.b16 %v1591
    %v1661 = vpack.c.b16 %v1658, %v1657
    %v1662 = vpack.c.b16 %v1660, %v1659
    %1665 = vmatpush.bf16.msra.mxu0 0
    %1666 = vmatpush.bf16.msra.mxu0 0
    %1667 = vmatpush.bf16.msra.mxu0 0
    %1668 = vmatpush.bf16.msra.mxu0 0
    %1669 = vmatpush.bf16.msra.mxu0 0
    %1670 = vmatpush.bf16.msra.mxu0 0
    %1671 = vmatpush.bf16.msra.mxu0 %v1662
    %1672 = vmatpush.bf16.msra.mxu0 %v1661
    %1673 = vmatmul.bf16.gmra.mxu0 %v1636
    %v1674 = vpop.f32.mrf.mxu0
    %v1675 = vadd.f32 %v1652, %v1674
    %v1676 = vpop.f32.mrf.mxu0
    %v1677 = vadd.f32 %v1652, %v1676
    %1678 = vdwg.mxu0
    %v1679 = vpack.c.bf16 %v1582, %v1581
    %v1680 = vperm.slane %v1617, 2
    %v1685 = vunpack.c.l.b16 %v1592
    %v1686 = vunpack.c.l.b16 %v1593
    %v1687 = vunpack.c.l.b16 %v1594
    %v1688 = vunpack.c.l.b16 %v1595
    %v1689 = vpack.c.b16 %v1686, %v1685
    %v1690 = vpack.c.b16 %v1688, %v1687
    %v1694 = vsel %vm138, %v1679, 0
    %1696 = vmatpush.bf16.msra.mxu0 0
    %1697 = vmatpush.bf16.msra.mxu0 0
    %1698 = vmatpush.bf16.msra.mxu0 0
    %1699 = vmatpush.bf16.msra.mxu0 0
    %1700 = vmatpush.bf16.msra.mxu0 0
    %1701 = vmatpush.bf16.msra.mxu0 0
    %1702 = vmatpush.bf16.msra.mxu0 %v1690
    %1703 = vmatpush.bf16.msra.mxu0 %v1689
    %1704 = vmatmul.bf16.gmra.mxu0 %v1694
    %v1705 = vpop.f32.mrf.mxu0
    %v1706 = vadd.f32 %v1680, %v1705
    %v1707 = vpop.f32.mrf.mxu0
    %v1708 = vadd.f32 %v1680, %v1707
    %1709 = vdwg.mxu0
    %v1710 = vpack.c.bf16 %v1648, %v1648
    %v1711 = vpack.c.bf16 %v1650, %v1650
    %v1712 = vmul.f32 %v1675, %v72
    %v1713 = vmul.f32 %v1677, %v72
    %v1714 = vpack.c.bf16 %v1712, %v1712
    %v1715 = vpack.c.bf16 %v1713, %v1713
    %v1717 = vsel %vm138, %v1710, 0
    %v1720 = vsel %vm138, %v1714, 0
    %1722 = vmatpush.bf16.xpose.msra.mxu0 0
    %1723 = vmatpush.bf16.xpose.msra.mxu0 0
    %1724 = vmatpush.bf16.xpose.msra.mxu0 0
    %1725 = vmatpush.bf16.xpose.msra.mxu0 0
    %1726 = vmatpush.bf16.xpose.msra.mxu0 0
    %1727 = vmatpush.bf16.xpose.msra.mxu0 0
    %1728 = vmatpush.bf16.xpose.msra.mxu0 0
    %1729 = vmatpush.bf16.xpose.msra.mxu0 %v1720
    %1730 = vmatmul.bf16.gmra.mxu0 %v1717
    %v1731 = vpop.f32.mrf.mxu0
    %v1732 = vadd.f32 0.0, %v1731
    %v1733 = vpop.f32.mrf.mxu0
    %1734 = vdwg.mxu0
    %v1736 = vsel %vm138, %v1711, 0
    %v1739 = vsel %vm138, %v1715, 0
    %1741 = vmatpush.bf16.xpose.msra.mxu0 0
    %1742 = vmatpush.bf16.xpose.msra.mxu0 0
    %1743 = vmatpush.bf16.xpose.msra.mxu0 0
    %1744 = vmatpush.bf16.xpose.msra.mxu0 0
    %1745 = vmatpush.bf16.xpose.msra.mxu0 0
    %1746 = vmatpush.bf16.xpose.msra.mxu0 0
    %1747 = vmatpush.bf16.xpose.msra.mxu0 0
    %1748 = vmatpush.bf16.xpose.msra.mxu0 %v1739
    %1749 = vmatmul.bf16.gmra.mxu0 %v1736
    %v1750 = vpop.f32.mrf.mxu0
    %v1751 = vadd.f32 0.0, %v1750
    %v1752 = vpop.f32.mrf.mxu0
    %1753 = vdwg.mxu0
    %v1754 = vsel %vm258, %v1732, -inf
    %1755 = vmax.xlane.f32.xlu0 %v1754
    %v1756 = vpop.xlane.xlu0 %1755
    %v1757 = vsel %vm258, %v1751, -inf
    %1758 = vmax.xlane.f32.xlu0 %v1757
    %v1759 = vpop.xlane.xlu0 %1758
    %v1760 = vsub.f32 %v1732, %v1756
    %v1761 = vsub.f32 %v1751, %v1759
    %v1762 = vmul.f32 %v1760, 1.442695
    %v1763 = vpow.pop %v1762
    %v1764 = vmul.f32 %v1761, 1.442695
    %v1765 = vpow.pop %v1764
    %v1766 = vsel %vm258, %v1763, 0.0
    %1767 = vadd.xlane.f32.xlu0 %v1766
    %v1768 = vpop.xlane.xlu0 %1767
    %v1769 = vsel %vm258, %v1765, 0.0
    %1770 = vadd.xlane.f32.xlu0 %v1769
    %v1771 = vpop.xlane.xlu0 %1770
    %v1772 = vrcp.pop %v1768
    %v1773 = vrcp.pop %v1771
    %v1774 = vmul.f32 %v1763, %v1772
    %v1775 = vmul.f32 %v1765, %v1773
    %v1776 = vpack.c.bf16 %v1774, %v1774
    %v1777 = vpack.c.bf16 %v1775, %v1775
    %v1778 = vmul.f32 %v1706, %v72
    %v1779 = vmul.f32 %v1708, %v72
    %v1780 = vpack.c.bf16 %v1778, %v1778
    %v1781 = vpack.c.bf16 %v1779, %v1779
    %v1782 = vmul.f32 %v1675, %v77
    %v1783 = vmul.f32 %v1677, %v77
    %v1784 = vpack.c.bf16 %v1782, %v1782
    %v1785 = vpack.c.bf16 %v1783, %v1783
    %v1787 = vsel %vm138, %v1784, 0
    %1789 = vmatpush.bf16.xpose.msra.mxu0 0
    %1790 = vmatpush.bf16.xpose.msra.mxu0 0
    %1791 = vmatpush.bf16.xpose.msra.mxu0 0
    %1792 = vmatpush.bf16.xpose.msra.mxu0 0
    %1793 = vmatpush.bf16.xpose.msra.mxu0 0
    %1794 = vmatpush.bf16.xpose.msra.mxu0 0
    %1795 = vmatpush.bf16.xpose.msra.mxu0 0
    %1796 = vmatpush.bf16.xpose.msra.mxu0 %v1787
    %1797 = vmatmul.bf16.gmra.mxu0 %v1717
    %v1798 = vpop.f32.mrf.mxu0
    %v1799 = vadd.f32 0.0, %v1798
    %v1800 = vpop.f32.mrf.mxu0
    %1801 = vdwg.mxu0
    %v1803 = vsel %vm138, %v1785, 0
    %1805 = vmatpush.bf16.xpose.msra.mxu0 0
    %1806 = vmatpush.bf16.xpose.msra.mxu0 0
    %1807 = vmatpush.bf16.xpose.msra.mxu0 0
    %1808 = vmatpush.bf16.xpose.msra.mxu0 0
    %1809 = vmatpush.bf16.xpose.msra.mxu0 0
    %1810 = vmatpush.bf16.xpose.msra.mxu0 0
    %1811 = vmatpush.bf16.xpose.msra.mxu0 0
    %1812 = vmatpush.bf16.xpose.msra.mxu0 %v1803
    %1813 = vmatmul.bf16.gmra.mxu0 %v1736
    %v1814 = vpop.f32.mrf.mxu0
    %v1815 = vadd.f32 0.0, %v1814
    %v1816 = vpop.f32.mrf.mxu0
    %1817 = vdwg.mxu0
    %v1818 = vsel %vm258, %v1799, -inf
    %1819 = vmax.xlane.f32.xlu0 %v1818
    %v1820 = vpop.xlane.xlu0 %1819
    %v1821 = vsel %vm258, %v1815, -inf
    %1822 = vmax.xlane.f32.xlu0 %v1821
    %v1823 = vpop.xlane.xlu0 %1822
    %v1824 = vsub.f32 %v1799, %v1820
    %v1825 = vsub.f32 %v1815, %v1823
    %v1826 = vmul.f32 %v1824, 1.442695
    %v1827 = vpow.pop %v1826
    %v1828 = vmul.f32 %v1825, 1.442695
    %v1829 = vpow.pop %v1828
    %v1830 = vsel %vm258, %v1827, 0.0
    %1831 = vadd.xlane.f32.xlu0 %v1830
    %v1832 = vpop.xlane.xlu0 %1831
    %v1833 = vsel %vm258, %v1829, 0.0
    %1834 = vadd.xlane.f32.xlu0 %v1833
    %v1835 = vpop.xlane.xlu0 %1834
    %v1836 = vrcp.pop %v1832
    %v1837 = vrcp.pop %v1835
    %v1838 = vmul.f32 %v1827, %v1836
    %v1839 = vmul.f32 %v1829, %v1837
    %v1840 = vpack.c.bf16 %v1838, %v1838
    %v1841 = vpack.c.bf16 %v1839, %v1839
    %v1842 = vmul.f32 %v1706, %v77
    %v1843 = vmul.f32 %v1708, %v77
    %v1844 = vpack.c.bf16 %v1842, %v1842
    %v1845 = vpack.c.bf16 %v1843, %v1843
    %v1847 = vsel %vm258, %v1840, 0
    %v1850 = vsel %vm354, %v1844, 0
    %1852 = vmatpush.bf16.msra.mxu0 0
    %1853 = vmatpush.bf16.msra.mxu0 0
    %1854 = vmatpush.bf16.msra.mxu0 0
    %1855 = vmatpush.bf16.msra.mxu0 0
    %1856 = vmatpush.bf16.msra.mxu0 0
    %1857 = vmatpush.bf16.msra.mxu0 0
    %1858 = vmatpush.bf16.msra.mxu0 0
    %1859 = vmatpush.bf16.msra.mxu0 %v1850
    %1860 = vmatmul.bf16.gmra.mxu0 %v1847
    %v1861 = vpop.f32.mrf.mxu0
    %v1862 = vadd.f32 0.0, %v1861
    %v1863 = vpop.f32.mrf.mxu0
    %1864 = vdwg.mxu0
    %v1866 = vsel %vm258, %v1841, 0
    %v1869 = vsel %vm354, %v1845, 0
    %1871 = vmatpush.bf16.msra.mxu0 0
    %1872 = vmatpush.bf16.msra.mxu0 0
    %1873 = vmatpush.bf16.msra.mxu0 0
    %1874 = vmatpush.bf16.msra.mxu0 0
    %1875 = vmatpush.bf16.msra.mxu0 0
    %1876 = vmatpush.bf16.msra.mxu0 0
    %1877 = vmatpush.bf16.msra.mxu0 0
    %1878 = vmatpush.bf16.msra.mxu0 %v1869
    %1879 = vmatmul.bf16.gmra.mxu0 %v1866
    %v1880 = vpop.f32.mrf.mxu0
    %v1881 = vadd.f32 0.0, %v1880
    %v1882 = vpop.f32.mrf.mxu0
    %1883 = vdwg.mxu0
    %v1885 = vsel %vm258, %v1776, 0
    %v1888 = vsel %vm354, %v1780, 0
    %1890 = vmatpush.bf16.msra.mxu0 0
    %1891 = vmatpush.bf16.msra.mxu0 0
    %1892 = vmatpush.bf16.msra.mxu0 0
    %1893 = vmatpush.bf16.msra.mxu0 0
    %1894 = vmatpush.bf16.msra.mxu0 0
    %1895 = vmatpush.bf16.msra.mxu0 0
    %1896 = vmatpush.bf16.msra.mxu0 0
    %1897 = vmatpush.bf16.msra.mxu0 %v1888
    %1898 = vmatmul.bf16.gmra.mxu0 %v1885
    %v1899 = vpop.f32.mrf.mxu0
    %v1900 = vadd.f32 %v1862, %v1899
    %v1901 = vpop.f32.mrf.mxu0
    %1902 = vdwg.mxu0
    %v1904 = vsel %vm258, %v1777, 0
    %v1907 = vsel %vm354, %v1781, 0
    %1909 = vmatpush.bf16.msra.mxu0 0
    %1910 = vmatpush.bf16.msra.mxu0 0
    %1911 = vmatpush.bf16.msra.mxu0 0
    %1912 = vmatpush.bf16.msra.mxu0 0
    %1913 = vmatpush.bf16.msra.mxu0 0
    %1914 = vmatpush.bf16.msra.mxu0 0
    %1915 = vmatpush.bf16.msra.mxu0 0
    %1916 = vmatpush.bf16.msra.mxu0 %v1907
    %1917 = vmatmul.bf16.gmra.mxu0 %v1904
    %v1918 = vpop.f32.mrf.mxu0
    %v1919 = vadd.f32 %v1881, %v1918
    %v1920 = vpop.f32.mrf.mxu0
    %1921 = vdwg.mxu0
    %v1922 = vmul.f32 %v1675, %v82
    %v1923 = vmul.f32 %v1677, %v82
    %v1924 = vpack.c.bf16 %v1922, %v1922
    %v1925 = vpack.c.bf16 %v1923, %v1923
    %v1927 = vsel %vm138, %v1924, 0
    %1929 = vmatpush.bf16.xpose.msra.mxu0 0
    %1930 = vmatpush.bf16.xpose.msra.mxu0 0
    %1931 = vmatpush.bf16.xpose.msra.mxu0 0
    %1932 = vmatpush.bf16.xpose.msra.mxu0 0
    %1933 = vmatpush.bf16.xpose.msra.mxu0 0
    %1934 = vmatpush.bf16.xpose.msra.mxu0 0
    %1935 = vmatpush.bf16.xpose.msra.mxu0 0
    %1936 = vmatpush.bf16.xpose.msra.mxu0 %v1927
    %1937 = vmatmul.bf16.gmra.mxu0 %v1717
    %v1938 = vpop.f32.mrf.mxu0
    %v1939 = vadd.f32 0.0, %v1938
    %v1940 = vpop.f32.mrf.mxu0
    %1941 = vdwg.mxu0
    %v1943 = vsel %vm138, %v1925, 0
    %1945 = vmatpush.bf16.xpose.msra.mxu0 0
    %1946 = vmatpush.bf16.xpose.msra.mxu0 0
    %1947 = vmatpush.bf16.xpose.msra.mxu0 0
    %1948 = vmatpush.bf16.xpose.msra.mxu0 0
    %1949 = vmatpush.bf16.xpose.msra.mxu0 0
    %1950 = vmatpush.bf16.xpose.msra.mxu0 0
    %1951 = vmatpush.bf16.xpose.msra.mxu0 0
    %1952 = vmatpush.bf16.xpose.msra.mxu0 %v1943
    %1953 = vmatmul.bf16.gmra.mxu0 %v1736
    %v1954 = vpop.f32.mrf.mxu0
    %v1955 = vadd.f32 0.0, %v1954
    %v1956 = vpop.f32.mrf.mxu0
    %1957 = vdwg.mxu0
    %v1958 = vsel %vm258, %v1939, -inf
    %1959 = vmax.xlane.f32.xlu0 %v1958
    %v1960 = vpop.xlane.xlu0 %1959
    %v1961 = vsel %vm258, %v1955, -inf
    %1962 = vmax.xlane.f32.xlu0 %v1961
    %v1963 = vpop.xlane.xlu0 %1962
    %v1964 = vsub.f32 %v1939, %v1960
    %v1965 = vsub.f32 %v1955, %v1963
    %v1966 = vmul.f32 %v1964, 1.442695
    %v1967 = vpow.pop %v1966
    %v1968 = vmul.f32 %v1965, 1.442695
    %v1969 = vpow.pop %v1968
    %v1970 = vsel %vm258, %v1967, 0.0
    %1971 = vadd.xlane.f32.xlu0 %v1970
    %v1972 = vpop.xlane.xlu0 %1971
    %v1973 = vsel %vm258, %v1969, 0.0
    %1974 = vadd.xlane.f32.xlu0 %v1973
    %v1975 = vpop.xlane.xlu0 %1974
    %v1976 = vrcp.pop %v1972
    %v1977 = vrcp.pop %v1975
    %v1978 = vmul.f32 %v1967, %v1976
    %v1979 = vmul.f32 %v1969, %v1977
    %v1980 = vpack.c.bf16 %v1978, %v1978
    %v1981 = vpack.c.bf16 %v1979, %v1979
    %v1982 = vmul.f32 %v1706, %v82
    %v1983 = vmul.f32 %v1708, %v82
    %v1984 = vpack.c.bf16 %v1982, %v1982
    %v1985 = vpack.c.bf16 %v1983, %v1983
    %v1987 = vsel %vm258, %v1980, 0
    %v1990 = vsel %vm354, %v1984, 0
    %1992 = vmatpush.bf16.msra.mxu0 0
    %1993 = vmatpush.bf16.msra.mxu0 0
    %1994 = vmatpush.bf16.msra.mxu0 0
    %1995 = vmatpush.bf16.msra.mxu0 0
    %1996 = vmatpush.bf16.msra.mxu0 0
    %1997 = vmatpush.bf16.msra.mxu0 0
    %1998 = vmatpush.bf16.msra.mxu0 0
    %1999 = vmatpush.bf16.msra.mxu0 %v1990
    %2000 = vmatmul.bf16.gmra.mxu0 %v1987
    %v2001 = vpop.f32.mrf.mxu0
    %v2002 = vadd.f32 0.0, %v2001
    %v2003 = vpop.f32.mrf.mxu0
    %2004 = vdwg.mxu0
    %v2006 = vsel %vm258, %v1981, 0
    %v2009 = vsel %vm354, %v1985, 0
    %2011 = vmatpush.bf16.msra.mxu0 0
    %2012 = vmatpush.bf16.msra.mxu0 0
    %2013 = vmatpush.bf16.msra.mxu0 0
    %2014 = vmatpush.bf16.msra.mxu0 0
    %2015 = vmatpush.bf16.msra.mxu0 0
    %2016 = vmatpush.bf16.msra.mxu0 0
    %2017 = vmatpush.bf16.msra.mxu0 0
    %2018 = vmatpush.bf16.msra.mxu0 %v2009
    %2019 = vmatmul.bf16.gmra.mxu0 %v2006
    %v2020 = vpop.f32.mrf.mxu0
    %v2021 = vadd.f32 0.0, %v2020
    %v2022 = vpop.f32.mrf.mxu0
    %2023 = vdwg.mxu0
    %v2024 = vadd.f32 %v1900, %v2002
    %v2025 = vadd.f32 %v1919, %v2021
    %v2026 = vmul.f32 %v1675, %v87
    %v2027 = vmul.f32 %v1677, %v87
    %v2028 = vpack.c.bf16 %v2026, %v2026
    %v2029 = vpack.c.bf16 %v2027, %v2027
    %v2031 = vsel %vm138, %v2028, 0
    %2033 = vmatpush.bf16.xpose.msra.mxu0 0
    %2034 = vmatpush.bf16.xpose.msra.mxu0 0
    %2035 = vmatpush.bf16.xpose.msra.mxu0 0
    %2036 = vmatpush.bf16.xpose.msra.mxu0 0
    %2037 = vmatpush.bf16.xpose.msra.mxu0 0
    %2038 = vmatpush.bf16.xpose.msra.mxu0 0
    %2039 = vmatpush.bf16.xpose.msra.mxu0 0
    %2040 = vmatpush.bf16.xpose.msra.mxu0 %v2031
    %2041 = vmatmul.bf16.gmra.mxu0 %v1717
    %v2042 = vpop.f32.mrf.mxu0
    %v2043 = vadd.f32 0.0, %v2042
    %v2044 = vpop.f32.mrf.mxu0
    %2045 = vdwg.mxu0
    %v2047 = vsel %vm138, %v2029, 0
    %2049 = vmatpush.bf16.xpose.msra.mxu0 0
    %2050 = vmatpush.bf16.xpose.msra.mxu0 0
    %2051 = vmatpush.bf16.xpose.msra.mxu0 0
    %2052 = vmatpush.bf16.xpose.msra.mxu0 0
    %2053 = vmatpush.bf16.xpose.msra.mxu0 0
    %2054 = vmatpush.bf16.xpose.msra.mxu0 0
    %2055 = vmatpush.bf16.xpose.msra.mxu0 0
    %2056 = vmatpush.bf16.xpose.msra.mxu0 %v2047
    %2057 = vmatmul.bf16.gmra.mxu0 %v1736
    %v2058 = vpop.f32.mrf.mxu0
    %v2059 = vadd.f32 0.0, %v2058
    %v2060 = vpop.f32.mrf.mxu0
    %2061 = vdwg.mxu0
    %v2062 = vsel %vm258, %v2043, -inf
    %2063 = vmax.xlane.f32.xlu0 %v2062
    %v2064 = vpop.xlane.xlu0 %2063
    %v2065 = vsel %vm258, %v2059, -inf
    %2066 = vmax.xlane.f32.xlu0 %v2065
    %v2067 = vpop.xlane.xlu0 %2066
    %v2068 = vsub.f32 %v2043, %v2064
    %v2069 = vsub.f32 %v2059, %v2067
    %v2070 = vmul.f32 %v2068, 1.442695
    %v2071 = vpow.pop %v2070
    %v2072 = vmul.f32 %v2069, 1.442695
    %v2073 = vpow.pop %v2072
    %v2074 = vsel %vm258, %v2071, 0.0
    %2075 = vadd.xlane.f32.xlu0 %v2074
    %v2076 = vpop.xlane.xlu0 %2075
    %v2077 = vsel %vm258, %v2073, 0.0
    %2078 = vadd.xlane.f32.xlu0 %v2077
    %v2079 = vpop.xlane.xlu0 %2078
    %v2080 = vrcp.pop %v2076
    %v2081 = vrcp.pop %v2079
    %v2082 = vmul.f32 %v2071, %v2080
    %v2083 = vmul.f32 %v2073, %v2081
    %v2084 = vpack.c.bf16 %v2082, %v2082
    %v2085 = vpack.c.bf16 %v2083, %v2083
    %v2086 = vmul.f32 %v1706, %v87
    %v2087 = vmul.f32 %v1708, %v87
    %v2088 = vpack.c.bf16 %v2086, %v2086
    %v2089 = vpack.c.bf16 %v2087, %v2087
    %v2091 = vsel %vm258, %v2084, 0
    %v2094 = vsel %vm354, %v2088, 0
    %2096 = vmatpush.bf16.msra.mxu0 0
    %2097 = vmatpush.bf16.msra.mxu0 0
    %2098 = vmatpush.bf16.msra.mxu0 0
    %2099 = vmatpush.bf16.msra.mxu0 0
    %2100 = vmatpush.bf16.msra.mxu0 0
    %2101 = vmatpush.bf16.msra.mxu0 0
    %2102 = vmatpush.bf16.msra.mxu0 0
    %2103 = vmatpush.bf16.msra.mxu0 %v2094
    %2104 = vmatmul.bf16.gmra.mxu0 %v2091
    %v2105 = vpop.f32.mrf.mxu0
    %v2106 = vadd.f32 0.0, %v2105
    %v2107 = vpop.f32.mrf.mxu0
    %2108 = vdwg.mxu0
    %v2110 = vsel %vm258, %v2085, 0
    %v2113 = vsel %vm354, %v2089, 0
    %2115 = vmatpush.bf16.msra.mxu0 0
    %2116 = vmatpush.bf16.msra.mxu0 0
    %2117 = vmatpush.bf16.msra.mxu0 0
    %2118 = vmatpush.bf16.msra.mxu0 0
    %2119 = vmatpush.bf16.msra.mxu0 0
    %2120 = vmatpush.bf16.msra.mxu0 0
    %2121 = vmatpush.bf16.msra.mxu0 0
    %2122 = vmatpush.bf16.msra.mxu0 %v2113
    %2123 = vmatmul.bf16.gmra.mxu0 %v2110
    %v2124 = vpop.f32.mrf.mxu0
    %v2125 = vadd.f32 0.0, %v2124
    %v2126 = vpop.f32.mrf.mxu0
    %2127 = vdwg.mxu0
    %v2128 = vadd.f32 %v2024, %v2106
    %v2129 = vadd.f32 %v2025, %v2125
    %v2130 = vpack.c.bf16 %v2129, %v2128
    %v2131 = vperm.slane %v1617, 3
    %v2136 = vunpack.c.l.b16 %v1596
    %v2137 = vunpack.c.l.b16 %v1597
    %v2138 = vunpack.c.l.b16 %v1598
    %v2139 = vunpack.c.l.b16 %v1599
    %v2140 = vpack.c.b16 %v2137, %v2136
    %v2141 = vpack.c.b16 %v2139, %v2138
    %v2145 = vsel %vm138, %v2130, 0
    %2147 = vmatpush.bf16.msra.mxu0 0
    %2148 = vmatpush.bf16.msra.mxu0 0
    %2149 = vmatpush.bf16.msra.mxu0 0
    %2150 = vmatpush.bf16.msra.mxu0 0
    %2151 = vmatpush.bf16.msra.mxu0 0
    %2152 = vmatpush.bf16.msra.mxu0 0
    %2153 = vmatpush.bf16.msra.mxu0 %v2141
    %2154 = vmatpush.bf16.msra.mxu0 %v2140
    %2155 = vmatmul.bf16.gmra.mxu0 %v2145
    %v2156 = vpop.f32.mrf.mxu0
    %v2157 = vadd.f32 %v2131, %v2156
    %v2158 = vpop.f32.mrf.mxu0
    %v2159 = vadd.f32 %v2131, %v2158
    %2160 = vdwg.mxu0
    %v2161 = vadd.f32 %v1581, %v2157
    %v2162 = vadd.f32 %v1582, %v2159
    %v2163 = vsel %vm138, %v2161, 0.0
    %2164 = vadd.xlane.f32.xlu0 %v2163
    %v2165 = vpop.xlane.xlu0 %2164
    %v2166 = vsel %vm138, %v2162, 0.0
    %2167 = vadd.xlane.f32.xlu0 %v2166
    %v2168 = vpop.xlane.xlu0 %2167
    %v2169 = vmul.f32 %v2165, %v681
    %v2170 = vmul.f32 %v2168, %v681
    %v2171 = vsub.f32 %v2161, %v2169
    %v2172 = vsub.f32 %v2162, %v2170
    %v2173 = vmul.f32 %v2171, %v2171
    %v2174 = vmul.f32 %v2172, %v2172
    %v2175 = vsel %vm138, %v2173, 0.0
    %2176 = vadd.xlane.f32.xlu0 %v2175
    %v2177 = vpop.xlane.xlu0 %2176
    %v2178 = vsel %vm138, %v2174, 0.0
    %2179 = vadd.xlane.f32.xlu0 %v2178
    %v2180 = vpop.xlane.xlu0 %2179
    %v2181 = vmul.f32 %v2177, %v681
    %v2182 = vmul.f32 %v2180, %v681
    %v2183 = vadd.f32 %v2181, 1e-05
    %v2184 = vadd.f32 %v2182, 1e-05
    %v2185 = vrsqrt.pop %v2183
    %v2186 = vmul.f32 %v2185, %v2183
    %v2187 = vmul.f32 %v2186, %v2185
    %v2188 = vmul.f32 0.5, %v2187
    %v2189 = vsub.f32 1.5, %v2188
    %v2190 = vmul.f32 %v2185, %v2189
    %vm2191 = vweird.f32 %v2183
    %vm2192 = vweird.f32 %v2185
    %vm2193 = vmor %vm2191, %vm2192
    %v2194 = vsel %vm2193, %v2185, %v2190
    %v2195 = vrsqrt.pop %v2184
    %v2196 = vmul.f32 %v2195, %v2184
    %v2197 = vmul.f32 %v2196, %v2195
    %v2198 = vmul.f32 0.5, %v2197
    %v2199 = vsub.f32 1.5, %v2198
    %v2200 = vmul.f32 %v2195, %v2199
    %vm2201 = vweird.f32 %v2184
    %vm2202 = vweird.f32 %v2195
    %vm2203 = vmor %vm2201, %vm2202
    %v2204 = vsel %vm2203, %v2195, %v2200
    %v2205 = vmul.f32 %v2171, %v2194
    %v2206 = vmul.f32 %v2172, %v2204
    %v2207 = vperm.slane %v1618, 1
    %v2208 = vmul.f32 %v2205, %v2207
    %v2209 = vmul.f32 %v2206, %v2207
    %v2210 = vperm.slane %v1618, 2
    %v2211 = vadd.f32 %v2208, %v2210
    %v2212 = vadd.f32 %v2209, %v2210
    %v2213 = vadd.f32 %v2211, %v52
    %v2214 = vadd.f32 %v2212, %v53
    %v2215 = vpack.c.bf16 %v2214, %v2213
    %v2216 = vperm.slane %v1617, 4
    %v2221 = vunpack.c.l.b16 %v1600
    %v2222 = vunpack.c.l.b16 %v1601
    %v2223 = vunpack.c.l.b16 %v1602
    %v2224 = vunpack.c.l.b16 %v1603
    %v2225 = vpack.c.b16 %v2222, %v2221
    %v2226 = vpack.c.b16 %v2224, %v2223
    %v2230 = vsel %vm138, %v2215, 0
    %2232 = vmatpush.bf16.msra.mxu0 0
    %2233 = vmatpush.bf16.msra.mxu0 0
    %2234 = vmatpush.bf16.msra.mxu0 0
    %2235 = vmatpush.bf16.msra.mxu0 0
    %2236 = vmatpush.bf16.msra.mxu0 0
    %2237 = vmatpush.bf16.msra.mxu0 0
    %2238 = vmatpush.bf16.msra.mxu0 %v2226
    %2239 = vmatpush.bf16.msra.mxu0 %v2225
    %2240 = vmatmul.bf16.gmra.mxu0 %v2230
    %v2241 = vpop.f32.mrf.mxu0
    %v2242 = vadd.f32 %v2216, %v2241
    %v2243 = vpop.f32.mrf.mxu0
    %v2244 = vadd.f32 %v2216, %v2243
    %2245 = vdwg.mxu0
    %v2246 = vperm.slane %v1617, 5
    %v2251 = vunpack.c.l.b16 %v1604
    %v2252 = vunpack.c.l.b16 %v1605
    %v2253 = vunpack.c.l.b16 %v1606
    %v2254 = vunpack.c.l.b16 %v1607
    %v2255 = vpack.c.b16 %v2252, %v2251
    %v2256 = vpack.c.b16 %v2254, %v2253
    %2259 = vmatpush.bf16.msra.mxu0 0
    %2260 = vmatpush.bf16.msra.mxu0 0
    %2261 = vmatpush.bf16.msra.mxu0 0
    %2262 = vmatpush.bf16.msra.mxu0 0
    %2263 = vmatpush.bf16.msra.mxu0 0
    %2264 = vmatpush.bf16.msra.mxu0 0
    %2265 = vmatpush.bf16.msra.mxu0 %v2256
    %2266 = vmatpush.bf16.msra.mxu0 %v2255
    %2267 = vmatmul.bf16.gmra.mxu0 %v775
    %v2268 = vpop.f32.mrf.mxu0
    %v2269 = vadd.f32 %v2246, %v2268
    %v2270 = vpop.f32.mrf.mxu0
    %v2271 = vadd.f32 %v2246, %v2270
    %2272 = vmatmul.bf16.gmra.mxu0 %v778
    %v2273 = vpop.f32.mrf.mxu0
    %v2274 = vadd.f32 %v2246, %v2273
    %v2275 = vpop.f32.mrf.mxu0
    %v2276 = vadd.f32 %v2246, %v2275
    %2277 = vdwg.mxu0
    %v2278 = vperm.slane %v1617, 6
    %v2283 = vunpack.c.l.b16 %v1608
    %v2284 = vunpack.c.l.b16 %v1609
    %v2285 = vunpack.c.l.b16 %v1610
    %v2286 = vunpack.c.l.b16 %v1611
    %v2287 = vpack.c.b16 %v2284, %v2283
    %v2288 = vpack.c.b16 %v2286, %v2285
    %2291 = vmatpush.bf16.msra.mxu0 0
    %2292 = vmatpush.bf16.msra.mxu0 0
    %2293 = vmatpush.bf16.msra.mxu0 0
    %2294 = vmatpush.bf16.msra.mxu0 0
    %2295 = vmatpush.bf16.msra.mxu0 0
    %2296 = vmatpush.bf16.msra.mxu0 0
    %2297 = vmatpush.bf16.msra.mxu0 %v2288
    %2298 = vmatpush.bf16.msra.mxu0 %v2287
    %2299 = vmatmul.bf16.gmra.mxu0 %v815
    %v2300 = vpop.f32.mrf.mxu0
    %v2301 = vadd.f32 %v2278, %v2300
    %v2302 = vpop.f32.mrf.mxu0
    %v2303 = vadd.f32 %v2278, %v2302
    %2304 = vmatmul.bf16.gmra.mxu0 %v818
    %v2305 = vpop.f32.mrf.mxu0
    %v2306 = vadd.f32 %v2278, %v2305
    %v2307 = vpop.f32.mrf.mxu0
    %v2308 = vadd.f32 %v2278, %v2307
    %2309 = vdwg.mxu0
    %v2310 = vpack.c.bf16 %v2242, %v2242
    %v2311 = vpack.c.bf16 %v2244, %v2244
    %v2312 = vmul.f32 %v2269, %v72
    %v2313 = vmul.f32 %v2271, %v72
    %v2314 = vmul.f32 %v2274, %v72
    %v2315 = vmul.f32 %v2276, %v72
    %v2316 = vpack.c.bf16 %v2312, %v2312
    %v2317 = vpack.c.bf16 %v2313, %v2313
    %v2318 = vpack.c.bf16 %v2314, %v2314
    %v2319 = vpack.c.bf16 %v2315, %v2315
    %v2322 = vunpack.c.l.b16 %v2316
    %v2323 = vunpack.c.l.b16 %v2317
    %v2324 = vpack.c.b16 %v2323, %v2322
    %v2326 = vsel %vm138, %v2310, 0
    %v2329 = vsel %vm138, %v2324, 0
    %2331 = vmatpush.bf16.xpose.msra.mxu0 0
    %2332 = vmatpush.bf16.xpose.msra.mxu0 0
    %2333 = vmatpush.bf16.xpose.msra.mxu0 0
    %2334 = vmatpush.bf16.xpose.msra.mxu0 0
    %2335 = vmatpush.bf16.xpose.msra.mxu0 0
    %2336 = vmatpush.bf16.xpose.msra.mxu0 0
    %2337 = vmatpush.bf16.xpose.msra.mxu0 0
    %2338 = vmatpush.bf16.xpose.msra.mxu0 %v2329
    %2339 = vmatmul.bf16.gmra.mxu0 %v2326
    %v2340 = vpop.f32.mrf.mxu0
    %v2341 = vadd.f32 0.0, %v2340
    %v2342 = vpop.f32.mrf.mxu0
    %2343 = vdwg.mxu0
    %v2346 = vunpack.c.l.b16 %v2318
    %v2347 = vunpack.c.l.b16 %v2319
    %v2348 = vpack.c.b16 %v2347, %v2346
    %v2350 = vsel %vm138, %v2311, 0
    %v2353 = vsel %vm138, %v2348, 0
    %2355 = vmatpush.bf16.xpose.msra.mxu0 0
    %2356 = vmatpush.bf16.xpose.msra.mxu0 0
    %2357 = vmatpush.bf16.xpose.msra.mxu0 0
    %2358 = vmatpush.bf16.xpose.msra.mxu0 0
    %2359 = vmatpush.bf16.xpose.msra.mxu0 0
    %2360 = vmatpush.bf16.xpose.msra.mxu0 0
    %2361 = vmatpush.bf16.xpose.msra.mxu0 0
    %2362 = vmatpush.bf16.xpose.msra.mxu0 %v2353
    %2363 = vmatmul.bf16.gmra.mxu0 %v2350
    %v2364 = vpop.f32.mrf.mxu0
    %v2365 = vadd.f32 0.0, %v2364
    %v2366 = vpop.f32.mrf.mxu0
    %2367 = vdwg.mxu0
    %v2368 = vsel %vm897, %v2341, -inf
    %2369 = vmax.xlane.f32.xlu0 %v2368
    %v2370 = vpop.xlane.xlu0 %2369
    %v2371 = vsel %vm897, %v2365, -inf
    %2372 = vmax.xlane.f32.xlu0 %v2371
    %v2373 = vpop.xlane.xlu0 %2372
    %v2374 = vsub.f32 %v2341, %v2370
    %v2375 = vsub.f32 %v2365, %v2373
    %v2376 = vmul.f32 %v2374, 1.442695
    %v2377 = vpow.pop %v2376
    %v2378 = vmul.f32 %v2375, 1.442695
    %v2379 = vpow.pop %v2378
    %v2380 = vsel %vm897, %v2377, 0.0
    %2381 = vadd.xlane.f32.xlu0 %v2380
    %v2382 = vpop.xlane.xlu0 %2381
    %v2383 = vsel %vm897, %v2379, 0.0
    %2384 = vadd.xlane.f32.xlu0 %v2383
    %v2385 = vpop.xlane.xlu0 %2384
    %v2386 = vrcp.pop %v2382
    %v2387 = vmul.f32 %v2382, %v2386
    %v2388 = vsub.f32 1.0, %v2387
    %v2389 = vmul.f32 %v2386, %v2388
    %v2390 = vadd.f32 %v2386, %v2389
    %vm2391 = vweird.f32 %v2382
    %vm2392 = vweird.f32 %v2386
    %vm2393 = vmor %vm2391, %vm2392
    %v2394 = vsel %vm2393, %v2386, %v2390
    %v2395 = vand.u32 2147483647, %v2382
    %vm2396 = vcmp.eq.f32.partialorder %v2395, 8.507059e+37
    %v2397 = vand.u32 %v2382, 2147483648
    %v2398 = vor.u32 1.1754944e-38, %v2397
    %v2399 = vsel %vm2396, %v2398, %v2394
    %v2400 = vmul.f32 %v2377, %v2399
    %v2401 = vrcp.pop %v2385
    %v2402 = vmul.f32 %v2385, %v2401
    %v2403 = vsub.f32 1.0, %v2402
    %v2404 = vmul.f32 %v2401, %v2403
    %v2405 = vadd.f32 %v2401, %v2404
    %vm2406 = vweird.f32 %v2385
    %vm2407 = vweird.f32 %v2401
    %vm2408 = vmor %vm2406, %vm2407
    %v2409 = vsel %vm2408, %v2401, %v2405
    %v2410 = vand.u32 2147483647, %v2385
    %vm2411 = vcmp.eq.f32.partialorder %v2410, 8.507059e+37
    %v2412 = vand.u32 %v2385, 2147483648
    %v2413 = vor.u32 1.1754944e-38, %v2412
    %v2414 = vsel %vm2411, %v2413, %v2409
    %v2415 = vmul.f32 %v2379, %v2414
    %v2416 = vpack.c.bf16 %v2400, %v2400
    %v2417 = vpack.c.bf16 %v2415, %v2415
    %v2418 = vmul.f32 %v2301, %v72
    %v2419 = vmul.f32 %v2303, %v72
    %v2420 = vmul.f32 %v2306, %v72
    %v2421 = vmul.f32 %v2308, %v72
    %v2422 = vpack.c.bf16 %v2418, %v2418
    %v2423 = vpack.c.bf16 %v2419, %v2419
    %v2424 = vpack.c.bf16 %v2420, %v2420
    %v2425 = vpack.c.bf16 %v2421, %v2421
    %v2426 = vmul.f32 %v2269, %v77
    %v2427 = vmul.f32 %v2271, %v77
    %v2428 = vmul.f32 %v2274, %v77
    %v2429 = vmul.f32 %v2276, %v77
    %v2430 = vpack.c.bf16 %v2426, %v2426
    %v2431 = vpack.c.bf16 %v2427, %v2427
    %v2432 = vpack.c.bf16 %v2428, %v2428
    %v2433 = vpack.c.bf16 %v2429, %v2429
    %v2436 = vunpack.c.l.b16 %v2430
    %v2437 = vunpack.c.l.b16 %v2431
    %v2438 = vpack.c.b16 %v2437, %v2436
    %v2440 = vsel %vm138, %v2438, 0
    %2442 = vmatpush.bf16.xpose.msra.mxu0 0
    %2443 = vmatpush.bf16.xpose.msra.mxu0 0
    %2444 = vmatpush.bf16.xpose.msra.mxu0 0
    %2445 = vmatpush.bf16.xpose.msra.mxu0 0
    %2446 = vmatpush.bf16.xpose.msra.mxu0 0
    %2447 = vmatpush.bf16.xpose.msra.mxu0 0
    %2448 = vmatpush.bf16.xpose.msra.mxu0 0
    %2449 = vmatpush.bf16.xpose.msra.mxu0 %v2440
    %2450 = vmatmul.bf16.gmra.mxu0 %v2326
    %v2451 = vpop.f32.mrf.mxu0
    %v2452 = vadd.f32 0.0, %v2451
    %v2453 = vpop.f32.mrf.mxu0
    %2454 = vdwg.mxu0
    %v2457 = vunpack.c.l.b16 %v2432
    %v2458 = vunpack.c.l.b16 %v2433
    %v2459 = vpack.c.b16 %v2458, %v2457
    %v2461 = vsel %vm138, %v2459, 0
    %2463 = vmatpush.bf16.xpose.msra.mxu0 0
    %2464 = vmatpush.bf16.xpose.msra.mxu0 0
    %2465 = vmatpush.bf16.xpose.msra.mxu0 0
    %2466 = vmatpush.bf16.xpose.msra.mxu0 0
    %2467 = vmatpush.bf16.xpose.msra.mxu0 0
    %2468 = vmatpush.bf16.xpose.msra.mxu0 0
    %2469 = vmatpush.bf16.xpose.msra.mxu0 0
    %2470 = vmatpush.bf16.xpose.msra.mxu0 %v2461
    %2471 = vmatmul.bf16.gmra.mxu0 %v2350
    %v2472 = vpop.f32.mrf.mxu0
    %v2473 = vadd.f32 0.0, %v2472
    %v2474 = vpop.f32.mrf.mxu0
    %2475 = vdwg.mxu0
    %v2476 = vsel %vm897, %v2452, -inf
    %2477 = vmax.xlane.f32.xlu0 %v2476
    %v2478 = vpop.xlane.xlu0 %2477
    %v2479 = vsel %vm897, %v2473, -inf
    %2480 = vmax.xlane.f32.xlu0 %v2479
    %v2481 = vpop.xlane.xlu0 %2480
    %v2482 = vsub.f32 %v2452, %v2478
    %v2483 = vsub.f32 %v2473, %v2481
    %v2484 = vmul.f32 %v2482, 1.442695
    %v2485 = vpow.pop %v2484
    %v2486 = vmul.f32 %v2483, 1.442695
    %v2487 = vpow.pop %v2486
    %v2488 = vsel %vm897, %v2485, 0.0
    %2489 = vadd.xlane.f32.xlu0 %v2488
    %v2490 = vpop.xlane.xlu0 %2489
    %v2491 = vsel %vm897, %v2487, 0.0
    %2492 = vadd.xlane.f32.xlu0 %v2491
    %v2493 = vpop.xlane.xlu0 %2492
    %v2494 = vrcp.pop %v2490
    %v2495 = vmul.f32 %v2490, %v2494
    %v2496 = vsub.f32 1.0, %v2495
    %v2497 = vmul.f32 %v2494, %v2496
    %v2498 = vadd.f32 %v2494, %v2497
    %vm2499 = vweird.f32 %v2490
    %vm2500 = vweird.f32 %v2494
    %vm2501 = vmor %vm2499, %vm2500
    %v2502 = vsel %vm2501, %v2494, %v2498
    %v2503 = vand.u32 2147483647, %v2490
    %vm2504 = vcmp.eq.f32.partialorder %v2503, 8.507059e+37
    %v2505 = vand.u32 %v2490, 2147483648
    %v2506 = vor.u32 1.1754944e-38, %v2505
    %v2507 = vsel %vm2504, %v2506, %v2502
    %v2508 = vmul.f32 %v2485, %v2507
    %v2509 = vrcp.pop %v2493
    %v2510 = vmul.f32 %v2493, %v2509
    %v2511 = vsub.f32 1.0, %v2510
    %v2512 = vmul.f32 %v2509, %v2511
    %v2513 = vadd.f32 %v2509, %v2512
    %vm2514 = vweird.f32 %v2493
    %vm2515 = vweird.f32 %v2509
    %vm2516 = vmor %vm2514, %vm2515
    %v2517 = vsel %vm2516, %v2509, %v2513
    %v2518 = vand.u32 2147483647, %v2493
    %vm2519 = vcmp.eq.f32.partialorder %v2518, 8.507059e+37
    %v2520 = vand.u32 %v2493, 2147483648
    %v2521 = vor.u32 1.1754944e-38, %v2520
    %v2522 = vsel %vm2519, %v2521, %v2517
    %v2523 = vmul.f32 %v2487, %v2522
    %v2524 = vadd.f32 %v2400, %v2508
    %v2525 = vadd.f32 %v2415, %v2523
    %v2526 = vpack.c.bf16 %v2508, %v2508
    %v2527 = vpack.c.bf16 %v2523, %v2523
    %v2528 = vmul.f32 %v2301, %v77
    %v2529 = vmul.f32 %v2303, %v77
    %v2530 = vmul.f32 %v2306, %v77
    %v2531 = vmul.f32 %v2308, %v77
    %v2532 = vpack.c.bf16 %v2528, %v2528
    %v2533 = vpack.c.bf16 %v2529, %v2529
    %v2534 = vpack.c.bf16 %v2530, %v2530
    %v2535 = vpack.c.bf16 %v2531, %v2531
    %v2538 = vunpack.c.l.b16 %v2532
    %v2539 = vunpack.c.l.b16 %v2533
    %v2540 = vpack.c.b16 %v2539, %v2538
    %v2543 = vsel %vm897, %v2526, 0
    %2545 = vmatpush.bf16.msra.mxu0 0
    %2546 = vmatpush.bf16.msra.mxu0 0
    %2547 = vmatpush.bf16.msra.mxu0 0
    %2548 = vmatpush.bf16.msra.mxu0 0
    %2549 = vmatpush.bf16.msra.mxu0 0
    %2550 = vmatpush.bf16.msra.mxu0 0
    %2551 = vmatpush.bf16.msra.mxu0 0
    %2552 = vmatpush.bf16.msra.mxu0 %v2540
    %2553 = vmatmul.bf16.gmra.mxu0 %v2543
    %v2554 = vpop.f32.mrf.mxu0
    %v2555 = vadd.f32 0.0, %v2554
    %v2556 = vpop.f32.mrf.mxu0
    %2557 = vdwg.mxu0
    %v2560 = vunpack.c.l.b16 %v2534
    %v2561 = vunpack.c.l.b16 %v2535
    %v2562 = vpack.c.b16 %v2561, %v2560
    %v2565 = vsel %vm897, %v2527, 0
    %2567 = vmatpush.bf16.msra.mxu0 0
    %2568 = vmatpush.bf16.msra.mxu0 0
    %2569 = vmatpush.bf16.msra.mxu0 0
    %2570 = vmatpush.bf16.msra.mxu0 0
    %2571 = vmatpush.bf16.msra.mxu0 0
    %2572 = vmatpush.bf16.msra.mxu0 0
    %2573 = vmatpush.bf16.msra.mxu0 0
    %2574 = vmatpush.bf16.msra.mxu0 %v2562
    %2575 = vmatmul.bf16.gmra.mxu0 %v2565
    %v2576 = vpop.f32.mrf.mxu0
    %v2577 = vadd.f32 0.0, %v2576
    %v2578 = vpop.f32.mrf.mxu0
    %2579 = vdwg.mxu0
    %v2582 = vunpack.c.l.b16 %v2422
    %v2583 = vunpack.c.l.b16 %v2423
    %v2584 = vpack.c.b16 %v2583, %v2582
    %v2587 = vsel %vm897, %v2416, 0
    %2589 = vmatpush.bf16.msra.mxu0 0
    %2590 = vmatpush.bf16.msra.mxu0 0
    %2591 = vmatpush.bf16.msra.mxu0 0
    %2592 = vmatpush.bf16.msra.mxu0 0
    %2593 = vmatpush.bf16.msra.mxu0 0
    %2594 = vmatpush.bf16.msra.mxu0 0
    %2595 = vmatpush.bf16.msra.mxu0 0
    %2596 = vmatpush.bf16.msra.mxu0 %v2584
    %2597 = vmatmul.bf16.gmra.mxu0 %v2587
    %v2598 = vpop.f32.mrf.mxu0
    %v2599 = vadd.f32 %v2555, %v2598
    %v2600 = vpop.f32.mrf.mxu0
    %2601 = vdwg.mxu0
    %v2604 = vunpack.c.l.b16 %v2424
    %v2605 = vunpack.c.l.b16 %v2425
    %v2606 = vpack.c.b16 %v2605, %v2604
    %v2609 = vsel %vm897, %v2417, 0
    %2611 = vmatpush.bf16.msra.mxu0 0
    %2612 = vmatpush.bf16.msra.mxu0 0
    %2613 = vmatpush.bf16.msra.mxu0 0
    %2614 = vmatpush.bf16.msra.mxu0 0
    %2615 = vmatpush.bf16.msra.mxu0 0
    %2616 = vmatpush.bf16.msra.mxu0 0
    %2617 = vmatpush.bf16.msra.mxu0 0
    %2618 = vmatpush.bf16.msra.mxu0 %v2606
    %2619 = vmatmul.bf16.gmra.mxu0 %v2609
    %v2620 = vpop.f32.mrf.mxu0
    %v2621 = vadd.f32 %v2577, %v2620
    %v2622 = vpop.f32.mrf.mxu0
    %2623 = vdwg.mxu0
    %v2624 = vmul.f32 %v2269, %v82
    %v2625 = vmul.f32 %v2271, %v82
    %v2626 = vmul.f32 %v2274, %v82
    %v2627 = vmul.f32 %v2276, %v82
    %v2628 = vpack.c.bf16 %v2624, %v2624
    %v2629 = vpack.c.bf16 %v2625, %v2625
    %v2630 = vpack.c.bf16 %v2626, %v2626
    %v2631 = vpack.c.bf16 %v2627, %v2627
    %v2634 = vunpack.c.l.b16 %v2628
    %v2635 = vunpack.c.l.b16 %v2629
    %v2636 = vpack.c.b16 %v2635, %v2634
    %v2638 = vsel %vm138, %v2636, 0
    %2640 = vmatpush.bf16.xpose.msra.mxu0 0
    %2641 = vmatpush.bf16.xpose.msra.mxu0 0
    %2642 = vmatpush.bf16.xpose.msra.mxu0 0
    %2643 = vmatpush.bf16.xpose.msra.mxu0 0
    %2644 = vmatpush.bf16.xpose.msra.mxu0 0
    %2645 = vmatpush.bf16.xpose.msra.mxu0 0
    %2646 = vmatpush.bf16.xpose.msra.mxu0 0
    %2647 = vmatpush.bf16.xpose.msra.mxu0 %v2638
    %2648 = vmatmul.bf16.gmra.mxu0 %v2326
    %v2649 = vpop.f32.mrf.mxu0
    %v2650 = vadd.f32 0.0, %v2649
    %v2651 = vpop.f32.mrf.mxu0
    %2652 = vdwg.mxu0
    %v2655 = vunpack.c.l.b16 %v2630
    %v2656 = vunpack.c.l.b16 %v2631
    %v2657 = vpack.c.b16 %v2656, %v2655
    %v2659 = vsel %vm138, %v2657, 0
    %2661 = vmatpush.bf16.xpose.msra.mxu0 0
    %2662 = vmatpush.bf16.xpose.msra.mxu0 0
    %2663 = vmatpush.bf16.xpose.msra.mxu0 0
    %2664 = vmatpush.bf16.xpose.msra.mxu0 0
    %2665 = vmatpush.bf16.xpose.msra.mxu0 0
    %2666 = vmatpush.bf16.xpose.msra.mxu0 0
    %2667 = vmatpush.bf16.xpose.msra.mxu0 0
    %2668 = vmatpush.bf16.xpose.msra.mxu0 %v2659
    %2669 = vmatmul.bf16.gmra.mxu0 %v2350
    %v2670 = vpop.f32.mrf.mxu0
    %v2671 = vadd.f32 0.0, %v2670
    %v2672 = vpop.f32.mrf.mxu0
    %2673 = vdwg.mxu0
    %v2674 = vsel %vm897, %v2650, -inf
    %2675 = vmax.xlane.f32.xlu0 %v2674
    %v2676 = vpop.xlane.xlu0 %2675
    %v2677 = vsel %vm897, %v2671, -inf
    %2678 = vmax.xlane.f32.xlu0 %v2677
    %v2679 = vpop.xlane.xlu0 %2678
    %v2680 = vsub.f32 %v2650, %v2676
    %v2681 = vsub.f32 %v2671, %v2679
    %v2682 = vmul.f32 %v2680, 1.442695
    %v2683 = vpow.pop %v2682
    %v2684 = vmul.f32 %v2681, 1.442695
    %v2685 = vpow.pop %v2684
    %v2686 = vsel %vm897, %v2683, 0.0
    %2687 = vadd.xlane.f32.xlu0 %v2686
    %v2688 = vpop.xlane.xlu0 %2687
    %v2689 = vsel %vm897, %v2685, 0.0
    %2690 = vadd.xlane.f32.xlu0 %v2689
    %v2691 = vpop.xlane.xlu0 %2690
    %v2692 = vrcp.pop %v2688
    %v2693 = vmul.f32 %v2688, %v2692
    %v2694 = vsub.f32 1.0, %v2693
    %v2695 = vmul.f32 %v2692, %v2694
    %v2696 = vadd.f32 %v2692, %v2695
    %vm2697 = vweird.f32 %v2688
    %vm2698 = vweird.f32 %v2692
    %vm2699 = vmor %vm2697, %vm2698
    %v2700 = vsel %vm2699, %v2692, %v2696
    %v2701 = vand.u32 2147483647, %v2688
    %vm2702 = vcmp.eq.f32.partialorder %v2701, 8.507059e+37
    %v2703 = vand.u32 %v2688, 2147483648
    %v2704 = vor.u32 1.1754944e-38, %v2703
    %v2705 = vsel %vm2702, %v2704, %v2700
    %v2706 = vmul.f32 %v2683, %v2705
    %v2707 = vrcp.pop %v2691
    %v2708 = vmul.f32 %v2691, %v2707
    %v2709 = vsub.f32 1.0, %v2708
    %v2710 = vmul.f32 %v2707, %v2709
    %v2711 = vadd.f32 %v2707, %v2710
    %vm2712 = vweird.f32 %v2691
    %vm2713 = vweird.f32 %v2707
    %vm2714 = vmor %vm2712, %vm2713
    %v2715 = vsel %vm2714, %v2707, %v2711
    %v2716 = vand.u32 2147483647, %v2691
    %vm2717 = vcmp.eq.f32.partialorder %v2716, 8.507059e+37
    %v2718 = vand.u32 %v2691, 2147483648
    %v2719 = vor.u32 1.1754944e-38, %v2718
    %v2720 = vsel %vm2717, %v2719, %v2715
    %v2721 = vmul.f32 %v2685, %v2720
    %v2722 = vadd.f32 %v2524, %v2706
    %v2723 = vadd.f32 %v2525, %v2721
    %v2724 = vpack.c.bf16 %v2706, %v2706
    %v2725 = vpack.c.bf16 %v2721, %v2721
    %v2726 = vmul.f32 %v2301, %v82
    %v2727 = vmul.f32 %v2303, %v82
    %v2728 = vmul.f32 %v2306, %v82
    %v2729 = vmul.f32 %v2308, %v82
    %v2730 = vpack.c.bf16 %v2726, %v2726
    %v2731 = vpack.c.bf16 %v2727, %v2727
    %v2732 = vpack.c.bf16 %v2728, %v2728
    %v2733 = vpack.c.bf16 %v2729, %v2729
    %v2736 = vunpack.c.l.b16 %v2730
    %v2737 = vunpack.c.l.b16 %v2731
    %v2738 = vpack.c.b16 %v2737, %v2736
    %v2741 = vsel %vm897, %v2724, 0
    %2743 = vmatpush.bf16.msra.mxu0 0
    %2744 = vmatpush.bf16.msra.mxu0 0
    %2745 = vmatpush.bf16.msra.mxu0 0
    %2746 = vmatpush.bf16.msra.mxu0 0
    %2747 = vmatpush.bf16.msra.mxu0 0
    %2748 = vmatpush.bf16.msra.mxu0 0
    %2749 = vmatpush.bf16.msra.mxu0 0
    %2750 = vmatpush.bf16.msra.mxu0 %v2738
    %2751 = vmatmul.bf16.gmra.mxu0 %v2741
    %v2752 = vpop.f32.mrf.mxu0
    %v2753 = vadd.f32 0.0, %v2752
    %v2754 = vpop.f32.mrf.mxu0
    %2755 = vdwg.mxu0
    %v2758 = vunpack.c.l.b16 %v2732
    %v2759 = vunpack.c.l.b16 %v2733
    %v2760 = vpack.c.b16 %v2759, %v2758
    %v2763 = vsel %vm897, %v2725, 0
    %2765 = vmatpush.bf16.msra.mxu0 0
    %2766 = vmatpush.bf16.msra.mxu0 0
    %2767 = vmatpush.bf16.msra.mxu0 0
    %2768 = vmatpush.bf16.msra.mxu0 0
    %2769 = vmatpush.bf16.msra.mxu0 0
    %2770 = vmatpush.bf16.msra.mxu0 0
    %2771 = vmatpush.bf16.msra.mxu0 0
    %2772 = vmatpush.bf16.msra.mxu0 %v2760
    %2773 = vmatmul.bf16.gmra.mxu0 %v2763
    %v2774 = vpop.f32.mrf.mxu0
    %v2775 = vadd.f32 0.0, %v2774
    %v2776 = vpop.f32.mrf.mxu0
    %2777 = vdwg.mxu0
    %v2778 = vadd.f32 %v2599, %v2753
    %v2779 = vadd.f32 %v2621, %v2775
    %v2780 = vmul.f32 %v2269, %v87
    %v2781 = vmul.f32 %v2271, %v87
    %v2782 = vmul.f32 %v2274, %v87
    %v2783 = vmul.f32 %v2276, %v87
    %v2784 = vpack.c.bf16 %v2780, %v2780
    %v2785 = vpack.c.bf16 %v2781, %v2781
    %v2786 = vpack.c.bf16 %v2782, %v2782
    %v2787 = vpack.c.bf16 %v2783, %v2783
    %v2790 = vunpack.c.l.b16 %v2784
    %v2791 = vunpack.c.l.b16 %v2785
    %v2792 = vpack.c.b16 %v2791, %v2790
    %v2794 = vsel %vm138, %v2792, 0
    %2796 = vmatpush.bf16.xpose.msra.mxu0 0
    %2797 = vmatpush.bf16.xpose.msra.mxu0 0
    %2798 = vmatpush.bf16.xpose.msra.mxu0 0
    %2799 = vmatpush.bf16.xpose.msra.mxu0 0
    %2800 = vmatpush.bf16.xpose.msra.mxu0 0
    %2801 = vmatpush.bf16.xpose.msra.mxu0 0
    %2802 = vmatpush.bf16.xpose.msra.mxu0 0
    %2803 = vmatpush.bf16.xpose.msra.mxu0 %v2794
    %2804 = vmatmul.bf16.gmra.mxu0 %v2326
    %v2805 = vpop.f32.mrf.mxu0
    %v2806 = vadd.f32 0.0, %v2805
    %v2807 = vpop.f32.mrf.mxu0
    %2808 = vdwg.mxu0
    %v2811 = vunpack.c.l.b16 %v2786
    %v2812 = vunpack.c.l.b16 %v2787
    %v2813 = vpack.c.b16 %v2812, %v2811
    %v2815 = vsel %vm138, %v2813, 0
    %2817 = vmatpush.bf16.xpose.msra.mxu0 0
    %2818 = vmatpush.bf16.xpose.msra.mxu0 0
    %2819 = vmatpush.bf16.xpose.msra.mxu0 0
    %2820 = vmatpush.bf16.xpose.msra.mxu0 0
    %2821 = vmatpush.bf16.xpose.msra.mxu0 0
    %2822 = vmatpush.bf16.xpose.msra.mxu0 0
    %2823 = vmatpush.bf16.xpose.msra.mxu0 0
    %2824 = vmatpush.bf16.xpose.msra.mxu0 %v2815
    %2825 = vmatmul.bf16.gmra.mxu0 %v2350
    %v2826 = vpop.f32.mrf.mxu0
    %v2827 = vadd.f32 0.0, %v2826
    %v2828 = vpop.f32.mrf.mxu0
    %2829 = vdwg.mxu0
    %v2830 = vsel %vm897, %v2806, -inf
    %2831 = vmax.xlane.f32.xlu0 %v2830
    %v2832 = vpop.xlane.xlu0 %2831
    %v2833 = vsel %vm897, %v2827, -inf
    %2834 = vmax.xlane.f32.xlu0 %v2833
    %v2835 = vpop.xlane.xlu0 %2834
    %v2836 = vsub.f32 %v2806, %v2832
    %v2837 = vsub.f32 %v2827, %v2835
    %v2838 = vmul.f32 %v2836, 1.442695
    %v2839 = vpow.pop %v2838
    %v2840 = vmul.f32 %v2837, 1.442695
    %v2841 = vpow.pop %v2840
    %v2842 = vsel %vm897, %v2839, 0.0
    %2843 = vadd.xlane.f32.xlu0 %v2842
    %v2844 = vpop.xlane.xlu0 %2843
    %v2845 = vsel %vm897, %v2841, 0.0
    %2846 = vadd.xlane.f32.xlu0 %v2845
    %v2847 = vpop.xlane.xlu0 %2846
    %v2848 = vrcp.pop %v2844
    %v2849 = vmul.f32 %v2844, %v2848
    %v2850 = vsub.f32 1.0, %v2849
    %v2851 = vmul.f32 %v2848, %v2850
    %v2852 = vadd.f32 %v2848, %v2851
    %vm2853 = vweird.f32 %v2844
    %vm2854 = vweird.f32 %v2848
    %vm2855 = vmor %vm2853, %vm2854
    %v2856 = vsel %vm2855, %v2848, %v2852
    %v2857 = vand.u32 2147483647, %v2844
    %vm2858 = vcmp.eq.f32.partialorder %v2857, 8.507059e+37
    %v2859 = vand.u32 %v2844, 2147483648
    %v2860 = vor.u32 1.1754944e-38, %v2859
    %v2861 = vsel %vm2858, %v2860, %v2856
    %v2862 = vmul.f32 %v2839, %v2861
    %v2863 = vrcp.pop %v2847
    %v2864 = vmul.f32 %v2847, %v2863
    %v2865 = vsub.f32 1.0, %v2864
    %v2866 = vmul.f32 %v2863, %v2865
    %v2867 = vadd.f32 %v2863, %v2866
    %vm2868 = vweird.f32 %v2847
    %vm2869 = vweird.f32 %v2863
    %vm2870 = vmor %vm2868, %vm2869
    %v2871 = vsel %vm2870, %v2863, %v2867
    %v2872 = vand.u32 2147483647, %v2847
    %vm2873 = vcmp.eq.f32.partialorder %v2872, 8.507059e+37
    %v2874 = vand.u32 %v2847, 2147483648
    %v2875 = vor.u32 1.1754944e-38, %v2874
    %v2876 = vsel %vm2873, %v2875, %v2871
    %v2877 = vmul.f32 %v2841, %v2876
    %v2878 = vadd.f32 %v2722, %v2862
    %v2879 = vadd.f32 %v2723, %v2877
    %v2880 = vpack.c.bf16 %v2862, %v2862
    %v2881 = vpack.c.bf16 %v2877, %v2877
    %v2882 = vmul.f32 %v2301, %v87
    %v2883 = vmul.f32 %v2303, %v87
    %v2884 = vmul.f32 %v2306, %v87
    %v2885 = vmul.f32 %v2308, %v87
    %v2886 = vpack.c.bf16 %v2882, %v2882
    %v2887 = vpack.c.bf16 %v2883, %v2883
    %v2888 = vpack.c.bf16 %v2884, %v2884
    %v2889 = vpack.c.bf16 %v2885, %v2885
    %v2892 = vunpack.c.l.b16 %v2886
    %v2893 = vunpack.c.l.b16 %v2887
    %v2894 = vpack.c.b16 %v2893, %v2892
    %v2897 = vsel %vm897, %v2880, 0
    %2899 = vmatpush.bf16.msra.mxu0 0
    %2900 = vmatpush.bf16.msra.mxu0 0
    %2901 = vmatpush.bf16.msra.mxu0 0
    %2902 = vmatpush.bf16.msra.mxu0 0
    %2903 = vmatpush.bf16.msra.mxu0 0
    %2904 = vmatpush.bf16.msra.mxu0 0
    %2905 = vmatpush.bf16.msra.mxu0 0
    %2906 = vmatpush.bf16.msra.mxu0 %v2894
    %2907 = vmatmul.bf16.gmra.mxu0 %v2897
    %v2908 = vpop.f32.mrf.mxu0
    %v2909 = vadd.f32 0.0, %v2908
    %v2910 = vpop.f32.mrf.mxu0
    %2911 = vdwg.mxu0
    %v2914 = vunpack.c.l.b16 %v2888
    %v2915 = vunpack.c.l.b16 %v2889
    %v2916 = vpack.c.b16 %v2915, %v2914
    %v2919 = vsel %vm897, %v2881, 0
    %2921 = vmatpush.bf16.msra.mxu0 0
    %2922 = vmatpush.bf16.msra.mxu0 0
    %2923 = vmatpush.bf16.msra.mxu0 0
    %2924 = vmatpush.bf16.msra.mxu0 0
    %2925 = vmatpush.bf16.msra.mxu0 0
    %2926 = vmatpush.bf16.msra.mxu0 0
    %2927 = vmatpush.bf16.msra.mxu0 0
    %2928 = vmatpush.bf16.msra.mxu0 %v2916
    %2929 = vmatmul.bf16.gmra.mxu0 %v2919
    %v2930 = vpop.f32.mrf.mxu0
    %v2931 = vadd.f32 0.0, %v2930
    %v2932 = vpop.f32.mrf.mxu0
    %2933 = vdwg.mxu0
    %v2934 = vadd.f32 %v2778, %v2909
    %v2935 = vadd.f32 %v2779, %v2931
    %v2936 = vpack.c.bf16 %v2935, %v2934
    %v2937 = vperm.slane %v1617, 7
    %v2942 = vunpack.c.l.b16 %v1612
    %v2943 = vunpack.c.l.b16 %v1613
    %v2944 = vunpack.c.l.b16 %v1614
    %v2945 = vunpack.c.l.b16 %v1615
    %v2946 = vpack.c.b16 %v2943, %v2942
    %v2947 = vpack.c.b16 %v2945, %v2944
    %v2951 = vsel %vm138, %v2936, 0
    %2953 = vmatpush.bf16.msra.mxu0 0
    %2954 = vmatpush.bf16.msra.mxu0 0
    %2955 = vmatpush.bf16.msra.mxu0 0
    %2956 = vmatpush.bf16.msra.mxu0 0
    %2957 = vmatpush.bf16.msra.mxu0 0
    %2958 = vmatpush.bf16.msra.mxu0 0
    %2959 = vmatpush.bf16.msra.mxu0 %v2947
    %2960 = vmatpush.bf16.msra.mxu0 %v2946
    %2961 = vmatmul.bf16.gmra.mxu0 %v2951
    %v2962 = vpop.f32.mrf.mxu0
    %v2963 = vadd.f32 %v2937, %v2962
    %v2964 = vpop.f32.mrf.mxu0
    %v2965 = vadd.f32 %v2937, %v2964
    %2966 = vdwg.mxu0
    %v2967 = vmul.f32 %v2878, 0.25
    %v2968 = vmul.f32 %v2879, 0.25
    %v2969 = vadd.f32 %v2211, %v2963
    %v2970 = vadd.f32 %v2212, %v2965
    %v2971 = vsel %vm138, %v2969, 0.0
    %2972 = vadd.xlane.f32.xlu0 %v2971
    %v2973 = vpop.xlane.xlu0 %2972
    %v2974 = vsel %vm138, %v2970, 0.0
    %2975 = vadd.xlane.f32.xlu0 %v2974
    %v2976 = vpop.xlane.xlu0 %2975
    %v2977 = vmul.f32 %v2973, %v681
    %v2978 = vmul.f32 %v2976, %v681
    %v2979 = vsub.f32 %v2969, %v2977
    %v2980 = vsub.f32 %v2970, %v2978
    %v2981 = vmul.f32 %v2979, %v2979
    %v2982 = vmul.f32 %v2980, %v2980
    %v2983 = vsel %vm138, %v2981, 0.0
    %2984 = vadd.xlane.f32.xlu0 %v2983
    %v2985 = vpop.xlane.xlu0 %2984
    %v2986 = vsel %vm138, %v2982, 0.0
    %2987 = vadd.xlane.f32.xlu0 %v2986
    %v2988 = vpop.xlane.xlu0 %2987
    %v2989 = vmul.f32 %v2985, %v681
    %v2990 = vmul.f32 %v2988, %v681
    %v2991 = vadd.f32 %v2989, 1e-05
    %v2992 = vadd.f32 %v2990, 1e-05
    %v2993 = vrsqrt.pop %v2991
    %v2994 = vmul.f32 %v2993, %v2991
    %v2995 = vmul.f32 %v2994, %v2993
    %v2996 = vmul.f32 0.5, %v2995
    %v2997 = vsub.f32 1.5, %v2996
    %v2998 = vmul.f32 %v2993, %v2997
    %vm2999 = vweird.f32 %v2991
    %vm3000 = vweird.f32 %v2993
    %vm3001 = vmor %vm2999, %vm3000
    %v3002 = vsel %vm3001, %v2993, %v2998
    %v3003 = vrsqrt.pop %v2992
    %v3004 = vmul.f32 %v3003, %v2992
    %v3005 = vmul.f32 %v3004, %v3003
    %v3006 = vmul.f32 0.5, %v3005
    %v3007 = vsub.f32 1.5, %v3006
    %v3008 = vmul.f32 %v3003, %v3007
    %vm3009 = vweird.f32 %v2992
    %vm3010 = vweird.f32 %v3003
    %vm3011 = vmor %vm3009, %vm3010
    %v3012 = vsel %vm3011, %v3003, %v3008
    %v3013 = vmul.f32 %v2979, %v3002
    %v3014 = vmul.f32 %v2980, %v3012
    %v3015 = vperm.slane %v1618, 3
    %v3016 = vmul.f32 %v3013, %v3015
    %v3017 = vmul.f32 %v3014, %v3015
    %v3018 = vperm.slane %v1618, 4
    %v3019 = vadd.f32 %v3016, %v3018
    %v3020 = vadd.f32 %v3017, %v3018
    %s3021 = scalar_lea.vmem %s3, 16
    %v3022 = vld [vmem:[%s3021] sm:$0xf]
    %v3023 = vld [vmem:[%s3021 + $0x4] sm:$0xf]
    %v3024 = vld [vmem:[%s3021 + $0x8] sm:$0xf]
    %v3025 = vld [vmem:[%s3021 + $0xc] sm:$0xf]
    %v3026 = vpack.c.bf16 %v3020, %v3019
    %s3027 = scalar_lea.vmem %s6, 1
    %v3028 = vld [vmem:[%s3027] sm:$0x1]
    %v3030 = vperm.slane %v3028, 0
    %v3036 = vunpack.c.l.b16 %v3022
    %v3037 = vunpack.c.l.b16 %v3023
    %v3038 = vunpack.c.l.b16 %v3024
    %v3039 = vunpack.c.l.b16 %v3025
    %v3040 = vpack.c.b16 %v3037, %v3036
    %v3041 = vpack.c.b16 %v3039, %v3038
    %v3045 = vsel %vm138, %v3026, 0
    %3047 = vmatpush.bf16.msra.mxu0 0
    %3048 = vmatpush.bf16.msra.mxu0 0
    %3049 = vmatpush.bf16.msra.mxu0 0
    %3050 = vmatpush.bf16.msra.mxu0 0
    %3051 = vmatpush.bf16.msra.mxu0 0
    %3052 = vmatpush.bf16.msra.mxu0 0
    %3053 = vmatpush.bf16.msra.mxu0 %v3041
    %3054 = vmatpush.bf16.msra.mxu0 %v3040
    %3055 = vmatmul.bf16.gmra.mxu0 %v3045
    %v3056 = vpop.f32.mrf.mxu0
    %v3057 = vadd.f32 %v3030, %v3056
    %v3058 = vpop.f32.mrf.mxu0
    %v3059 = vadd.f32 %v3030, %v3058
    %3060 = vdwg.mxu0
    %v3061 = vmax.f32 %v3057, 0.0
    %v3062 = vmax.f32 %v3059, 0.0
    %s3063 = scalar_lea.vmem %s4, 32
    %v3064 = vld [vmem:[%s3063] sm:$0xf]
    %v3065 = vld [vmem:[%s3063 + $0x4] sm:$0xf]
    %v3066 = vld [vmem:[%s3063 + $0x8] sm:$0xf]
    %v3067 = vld [vmem:[%s3063 + $0xc] sm:$0xf]
    %v3068 = vld [vmem:[%s3063 + $0x10] sm:$0xf]
    %v3069 = vld [vmem:[%s3063 + $0x14] sm:$0xf]
    %v3070 = vld [vmem:[%s3063 + $0x18] sm:$0xf]
    %v3071 = vld [vmem:[%s3063 + $0x1c] sm:$0xf]
    %v3072 = vpack.c.bf16 %v3062, %v3061
    %v3073 = vperm.slane %v1618, 0
    %v3082 = vunpack.c.l.b16 %v3064
    %v3083 = vunpack.c.l.b16 %v3065
    %v3084 = vunpack.c.l.b16 %v3066
    %v3085 = vunpack.c.l.b16 %v3067
    %v3086 = vunpack.c.l.b16 %v3068
    %v3087 = vunpack.c.l.b16 %v3069
    %v3088 = vunpack.c.l.b16 %v3070
    %v3089 = vunpack.c.l.b16 %v3071
    %v3090 = vpack.c.b16 %v3083, %v3082
    %v3091 = vpack.c.b16 %v3085, %v3084
    %v3092 = vpack.c.b16 %v3087, %v3086
    %v3093 = vpack.c.b16 %v3089, %v3088
    %v3099 = vsel %vm1513, %v3072, 0
    %3101 = vmatpush.bf16.msra.mxu0 0
    %3102 = vmatpush.bf16.msra.mxu0 0
    %3103 = vmatpush.bf16.msra.mxu0 0
    %3104 = vmatpush.bf16.msra.mxu0 0
    %3105 = vmatpush.bf16.msra.mxu0 %v3093
    %3106 = vmatpush.bf16.msra.mxu0 %v3092
    %3107 = vmatpush.bf16.msra.mxu0 %v3091
    %3108 = vmatpush.bf16.msra.mxu0 %v3090
    %3109 = vmatmul.bf16.gmra.mxu0 %v3099
    %v3110 = vpop.f32.mrf.mxu0
    %v3111 = vadd.f32 %v3073, %v3110
    %v3112 = vpop.f32.mrf.mxu0
    %v3113 = vadd.f32 %v3073, %v3112
    %3114 = vdwg.mxu0
    %v3115 = vadd.f32 %v3019, %v3111
    %v3116 = vadd.f32 %v3020, %v3113
    %v3117 = vsel %vm138, %v3115, 0.0
    %3118 = vadd.xlane.f32.xlu0 %v3117
    %v3119 = vpop.xlane.xlu0 %3118
    %v3120 = vsel %vm138, %v3116, 0.0
    %3121 = vadd.xlane.f32.xlu0 %v3120
    %v3122 = vpop.xlane.xlu0 %3121
    %v3123 = vmul.f32 %v3119, %v681
    %v3124 = vmul.f32 %v3122, %v681
    %v3125 = vsub.f32 %v3115, %v3123
    %v3126 = vsub.f32 %v3116, %v3124
    %v3127 = vmul.f32 %v3125, %v3125
    %v3128 = vmul.f32 %v3126, %v3126
    %v3129 = vsel %vm138, %v3127, 0.0
    %3130 = vadd.xlane.f32.xlu0 %v3129
    %v3131 = vpop.xlane.xlu0 %3130
    %v3132 = vsel %vm138, %v3128, 0.0
    %3133 = vadd.xlane.f32.xlu0 %v3132
    %v3134 = vpop.xlane.xlu0 %3133
    %v3135 = vmul.f32 %v3131, %v681
    %v3136 = vmul.f32 %v3134, %v681
    %v3137 = vadd.f32 %v3135, 1e-05
    %v3138 = vadd.f32 %v3136, 1e-05
    %v3139 = vrsqrt.pop %v3137
    %v3140 = vmul.f32 %v3139, %v3137
    %v3141 = vmul.f32 %v3140, %v3139
    %v3142 = vmul.f32 0.5, %v3141
    %v3143 = vsub.f32 1.5, %v3142
    %v3144 = vmul.f32 %v3139, %v3143
    %vm3145 = vweird.f32 %v3137
    %vm3146 = vweird.f32 %v3139
    %vm3147 = vmor %vm3145, %vm3146
    %v3148 = vsel %vm3147, %v3139, %v3144
    %v3149 = vrsqrt.pop %v3138
    %v3150 = vmul.f32 %v3149, %v3138
    %v3151 = vmul.f32 %v3150, %v3149
    %v3152 = vmul.f32 0.5, %v3151
    %v3153 = vsub.f32 1.5, %v3152
    %v3154 = vmul.f32 %v3149, %v3153
    %vm3155 = vweird.f32 %v3138
    %vm3156 = vweird.f32 %v3149
    %vm3157 = vmor %vm3155, %vm3156
    %v3158 = vsel %vm3157, %v3149, %v3154
    %v3159 = vmul.f32 %v3125, %v3148
    %v3160 = vmul.f32 %v3126, %v3158
    %v3161 = vperm.slane %v1618, 5
    %v3162 = vmul.f32 %v3159, %v3161
    %v3163 = vmul.f32 %v3160, %v3161
    %v3164 = vperm.slane %v1618, 6
    %v3165 = vadd.f32 %v3162, %v3164
    %v3166 = vadd.f32 %v3163, %v3164
    %v3167 = vld [vmem:[%s7] sm:$0x1]
    %v3168 = vld [vmem:[%s7 + $0x1] sm:$0x1]
    %v3169 = vsel %vm138, %v3165, 0.0
    %3170 = vadd.xlane.f32.xlu0 %v3169
    %v3171 = vpop.xlane.xlu0 %3170
    %v3172 = vsel %vm138, %v3166, 0.0
    %3173 = vadd.xlane.f32.xlu0 %v3172
    %v3174 = vpop.xlane.xlu0 %3173
    %v3175 = vmul.f32 %v3171, %v681
    %v3176 = vmul.f32 %v3174, %v681
    %v3177 = vsub.f32 %v3165, %v3175
    %v3178 = vsub.f32 %v3166, %v3176
    %v3179 = vmul.f32 %v3177, %v3177
    %v3180 = vmul.f32 %v3178, %v3178
    %v3181 = vsel %vm138, %v3179, 0.0
    %3182 = vadd.xlane.f32.xlu0 %v3181
    %v3183 = vpop.xlane.xlu0 %3182
    %v3184 = vsel %vm138, %v3180, 0.0
    %3185 = vadd.xlane.f32.xlu0 %v3184
    %v3186 = vpop.xlane.xlu0 %3185
    %v3187 = vmul.f32 %v3183, %v681
    %v3188 = vmul.f32 %v3186, %v681
    %v3189 = vadd.f32 %v3187, 1e-05
    %v3190 = vadd.f32 %v3188, 1e-05
    %v3191 = vrsqrt.pop %v3189
    %v3192 = vmul.f32 %v3191, %v3189
    %v3193 = vmul.f32 %v3192, %v3191
    %v3194 = vmul.f32 0.5, %v3193
    %v3195 = vsub.f32 1.5, %v3194
    %v3196 = vmul.f32 %v3191, %v3195
    %vm3197 = vweird.f32 %v3189
    %vm3198 = vweird.f32 %v3191
    %vm3199 = vmor %vm3197, %vm3198
    %v3200 = vsel %vm3199, %v3191, %v3196
    %v3201 = vrsqrt.pop %v3190
    %v3202 = vmul.f32 %v3201, %v3190
    %v3203 = vmul.f32 %v3202, %v3201
    %v3204 = vmul.f32 0.5, %v3203
    %v3205 = vsub.f32 1.5, %v3204
    %v3206 = vmul.f32 %v3201, %v3205
    %vm3207 = vweird.f32 %v3190
    %vm3208 = vweird.f32 %v3201
    %vm3209 = vmor %vm3207, %vm3208
    %v3210 = vsel %vm3209, %v3201, %v3206
    %v3211 = vmul.f32 %v3177, %v3200
    %v3212 = vmul.f32 %v3178, %v3210
    %v3213 = vperm.slane %v3167, 0
    %v3214 = vmul.f32 %v3211, %v3213
    %v3215 = vmul.f32 %v3212, %v3213
    %v3216 = vperm.slane %v3168, 0
    %v3217 = vadd.f32 %v3214, %v3216
    %v3218 = vadd.f32 %v3215, %v3216
    %3219 = vst.msk [vmem:[#allocation5] sm:$0xff] %vm138, %v3217
    %3220 = vst.msk [vmem:[#allocation5 + $0x8] sm:$0xff] %vm138, %v3218
    %3221 = vst.msk [vmem:[#allocation6] sm:$0xff] %vm897, %v2967
    %3222 = vst.msk [vmem:[#allocation6 + $0x8] sm:$0xff] %vm897, %v2968
    // Predicated region
    $region38: #{tpu_custom_call.1} parent=1 // pred_check
      _
    $region39: #{tpu_custom_call.1} parent=1 // pred_check_branch
      %3224 = sbr.rel (0) target = $region41
    $region40: #{tpu_custom_call.1} parent=1 // pred_region
      %3226 = vsyncadd [#allocation4], 0
      %s3227 = sshll.u32 [#allocation5], 4
      %s3228 = int_to_ptr.vmem [resolvable:$true] %s3227
      %s3229 = sshll.u32 %s8, 4
      %s3230 = int_to_ptr.hbm [resolvable:$true] %s3229
      %3235 = dma.vmem_to_hbm [thread:$0]  %s3228, 256, %s3230, [#allocation4], 128, 128, 8
    $region41: #{tpu_custom_call.1} parent=1 // pred_fallthru
      _
    // Predicated region
    $region42: #{tpu_custom_call.1} parent=1 // pred_check
      _
    $region43: #{tpu_custom_call.1} parent=1 // pred_check_branch
      %3237 = sbr.rel (0) target = $region45
    $region44: #{tpu_custom_call.1} parent=1 // pred_region
      %3239 = vsyncadd [#allocation7], 0
      %s3240 = sshll.u32 [#allocation6], 4
      %s3241 = int_to_ptr.vmem [resolvable:$true] %s3240
      %s3242 = sshll.u32 %s9, 4
      %s3243 = int_to_ptr.hbm [resolvable:$true] %s3242
      %3248 = dma.vmem_to_hbm [thread:$0]  %s3241, 256, %s3243, [#allocation7], 128, 128, 8
    $region45: #{tpu_custom_call.1} parent=1 // pred_fallthru
      _
    // Predicated region
    $region46: #{tpu_custom_call.1} parent=1 // pred_check
      _
    $region47: #{tpu_custom_call.1} parent=1 // pred_check_branch
      %3250 = sbr.rel (0) target = $region49
    $region48: #{tpu_custom_call.1} parent=1 // pred_region
      %3252 = dma.done [#allocation4], 256
    $region49: #{tpu_custom_call.1} parent=1 // pred_fallthru
      _
    // Predicated region
    $region50: #{tpu_custom_call.1} parent=1 // pred_check
      _
    $region51: #{tpu_custom_call.1} parent=1 // pred_check_branch
      %3254 = sbr.rel (0) target = $region53
    $region52: #{tpu_custom_call.1} parent=1 // pred_region
      %3256 = dma.done [#allocation7], 256
    $region53: #{tpu_custom_call.1} parent=1 // pred_fallthru
      _
    %3257 = vsyncpa [#allocation3], 1
    %3258 = vsyncpa [#allocation4], 1
    %3259 = vsyncpa [#allocation7], 1

</llo_original>
